<compile_context>
chip_gen: v6e
topology: v6e:2x2x1
jax: 0.10.0
libtpu: 0.0.40
codegen_flags: <defaults>
</compile_context>

<pallas_src>
import functools

import jax
import jax.numpy as jnp
from jax import lax
from jax.experimental import pallas as pl
from jax.experimental.pallas import tpu as pltpu


LANE = 128                         # channel dims are padded to this (lane-dense)


# ----------------------------------------------------------------------------
# Per-generation VMEM budgeting.
# ----------------------------------------------------------------------------
def _tpu_vmem_capacity():
    try:
        cap = int(getattr(pltpu.get_tpu_info(), "vmem_capacity_bytes"))
        if cap > 0:
            return cap
    except Exception:
        pass
    return 64 * 1024 * 1024        # safe default (v7x physical per-TC VMEM)


_VMEM_CAP = _tpu_vmem_capacity()
# Large working set on v5e/v6e (128 MiB VMEM), conservative on v7x (64 MiB).
_VMEM_BUDGET = (80 << 20) if _VMEM_CAP >= (100 << 20) else (24 << 20)


def _vmem_limit(footprint):
    want = max(32 << 20, int(2 * footprint))
    return int(min(max(int(0.9 * _VMEM_CAP), footprint + (2 << 20)), want))


def _pad_to_lane(n):
    return ((n + LANE - 1) // LANE) * LANE


# ----------------------------------------------------------------------------
# Synthetic Darknet cfg (what parse_cfg(cfgfile) would return), small shapes.
# ----------------------------------------------------------------------------
BLOCKS = [
    {'type': 'net', 'width': '16', 'height': '16', 'channels': '4'},
    # 0
    {'type': 'convolutional', 'batch_normalize': '1', 'filters': '8',
     'size': '3', 'stride': '1', 'pad': '1', 'activation': 'leaky'},
    # 1
    {'type': 'convolutional', 'batch_normalize': '1', 'filters': '16',
     'size': '3', 'stride': '2', 'pad': '1', 'activation': 'leaky'},
    # 2
    {'type': 'convolutional', 'batch_normalize': '1', 'filters': '16',
     'size': '1', 'stride': '1', 'pad': '1', 'activation': 'leaky'},
    # 3
    {'type': 'shortcut', 'from': '-2', 'activation': 'linear'},
    # 4  (yolo head #1: 3 anchors * (5 + 4 classes) = 27 filters)
    {'type': 'convolutional', 'filters': '27', 'size': '1', 'stride': '1',
     'pad': '1', 'activation': 'linear'},
    # 5
    {'type': 'yolo', 'mask': '0,1,2',
     'anchors': '10,13,16,30,33,23,30,61,62,45',
     'classes': '4', 'ignore_thresh': '0.5', 'truth_thresh': '1'},
    # 6
    {'type': 'route', 'layers': '-3'},
    # 7
    {'type': 'convolutional', 'batch_normalize': '1', 'filters': '8',
     'size': '1', 'stride': '1', 'pad': '1', 'activation': 'leaky'},
    # 8
    {'type': 'upsample', 'stride': '2'},
    # 9
    {'type': 'route', 'layers': '-1,-9'},
    # 10 (yolo head #2)
    {'type': 'convolutional', 'filters': '27', 'size': '1', 'stride': '1',
     'pad': '1', 'activation': 'linear'},
    # 11
    {'type': 'yolo', 'mask': '3,4',
     'anchors': '10,13,16,30,33,23,30,61,62,45',
     'classes': '4', 'ignore_thresh': '0.5', 'truth_thresh': '1'},
]


# ----------------------------------------------------------------------------
# Conv (fused im2col + folded-BN shift + LeakyReLU + optional residual).
# ----------------------------------------------------------------------------
def _conv_footprint(tn, kk, cpad, m_b, x_block_bytes, has_res):
    fp = 2 * x_block_bytes                     # activation block, double-buffered
    fp += 2 * kk * cpad * tn * 2               # weights (bf16)
    fp += 2 * tn * 4                           # shift (f32)
    fp += 2 * m_b * tn * 2                     # output (bf16)
    if has_res:
        fp += 2 * m_b * tn * 2                 # residual (bf16)
    fp += m_b * tn * 4 + m_b * cpad * 2        # in-kernel f32 acc + tap temp
    return fp


def _choose_tn(npad, kk, cpad, m_b, x_block_bytes, has_res):
    """Largest Cout tile (multiple of 128, divides npad) fitting the budget."""
    cands = [c for c in range(npad, 0, -LANE) if npad % c == 0]
    for tn in cands:
        if _conv_footprint(tn, kk, cpad, m_b, x_block_bytes, has_res) <= _VMEM_BUDGET:
            return tn
    return cands[-1]


def _conv_tap_kernel(*refs, ksize, stride, ho, wo, leaky, has_res):
    """Fused conv: sum over (kh,kw) taps of A_tap @ W_tap, then shift, leaky,
    optional residual add. Accumulation in f32 local value (no scratch)."""
    if has_res:
        x_ref, w_ref, sh_ref, r_ref, o_ref = refs
    else:
        x_ref, w_ref, sh_ref, o_ref = refs
        r_ref = None

    m = ho * wo
    cin = x_ref.shape[-1]
    tn = w_ref.shape[-1]
    acc = jnp.zeros((m, tn), jnp.float32)
    t = 0
    for kh in range(ksize):
        for kw in range(ksize):
            phase = (kh % stride) * stride + (kw % stride)
            r0, c0 = kh // stride, kw // stride
            a = x_ref[phase, pl.ds(r0, ho), pl.ds(c0, wo), :]
            a = a.reshape(m, cin)
            acc = acc + jnp.dot(a, w_ref[t], preferred_element_type=jnp.float32)
            t += 1

    y = acc + sh_ref[...]                      # (1, tn) broadcasts over rows
    if leaky:
        y = jnp.maximum(y, 0.1 * y)            # LeakyReLU(0.1)
    if has_res:
        y = y + r_ref[0].astype(jnp.float32)   # fused shortcut (linear)
    o_ref[0] = y.astype(o_ref.dtype)


def conv_forward(x, p, residual=None):
    """x: (B, H, W, Cin_pad) bf16 NHWC, lane-padded channels.
    residual: optional (B, Ho, Wo, Npad) bf16 to add after the activation."""
    B, H, W, cpad = x.shape
    k, s, pad = p['ksize'], p['stride'], p['padding']
    kk = k * k
    ho = (H + 2 * pad - k) // s + 1
    wo = (W + 2 * pad - k) // s + 1
    m_b = ho * wo
    w3d = p['w3d']                              # (kk, cin_pad, npad) bf16
    assert w3d.shape[0] == kk and w3d.shape[1] == cpad
    npad = w3d.shape[2]

    # Spatial zero-pad (one cheap copy), then phase-split for stride > 1 so the
    # in-kernel tap slices are contiguous (unit stride).
    if pad:
        x = jnp.pad(x, ((0, 0), (pad, pad), (pad, pad), (0, 0)))
    hp, wp = H + 2 * pad, W + 2 * pad
    if s == 1:
        phases, hs, ws = 1, hp, wp
        xs = x.reshape(B, 1, hs, ws, cpad)
    else:
        hq = -(-hp // s) * s
        wq = -(-wp // s) * s
        if (hq, wq) != (hp, wp):
            x = jnp.pad(x, ((0, 0), (0, hq - hp), (0, wq - wp), (0, 0)))
        hs, ws, phases = hq // s, wq // s, s * s
        xs = x.reshape(B, hs, s, ws, s, cpad).transpose(0, 2, 4, 1, 3, 5)
        xs = xs.reshape(B, phases, hs, ws, cpad)
    assert (k - 1) // s + ho <= hs and (k - 1) // s + wo <= ws
    xflat = xs.reshape(B * phases, hs, ws, cpad)

    has_res = residual is not None
    x_block_bytes = phases * hs * ws * cpad * 2
    tn = _choose_tn(npad, kk, cpad, m_b, x_block_bytes, has_res)
    n_n = npad // tn
    footprint = _conv_footprint(tn, kk, cpad, m_b, x_block_bytes, has_res)
    if footprint > int(0.9 * _VMEM_CAP):
        # TODO(synk): row-tile M with a halo (manual DMA) for production sizes.
        raise ValueError("conv working set exceeds VMEM; needs M row tiling")

    # Actual DMA traffic under this grid: W is re-fetched only if Cout is tiled.
    w_bytes = kk * cpad * tn * 2 * (B * n_n if n_n > 1 else 1)
    res_bytes = B * m_b * npad * 2 if has_res else 0
    cost = pl.CostEstimate(
        flops=2 * B * m_b * kk * cpad * npad,
        transcendentals=0,
        bytes_accessed=(B * x_block_bytes + w_bytes + npad * 4
                        + B * m_b * npad * 2 + res_bytes))

    kernel = functools.partial(_conv_tap_kernel, ksize=k, stride=s, ho=ho,
                               wo=wo, leaky=p['leaky'], has_res=has_res)
    in_specs = [
        pl.BlockSpec((phases, hs, ws, cpad), lambda b, n: (b, 0, 0, 0)),
        pl.BlockSpec((kk, cpad, tn), lambda b, n: (0, 0, n)),
        pl.BlockSpec((1, tn), lambda b, n: (0, n)),
    ]
    args = [xflat, w3d, p['shift_pad'].reshape(1, npad)]
    if has_res:
        in_specs.append(pl.BlockSpec((1, m_b, tn), lambda b, n: (b, 0, n)))
        args.append(residual.reshape(B, m_b, npad))

    out = pl.pallas_call(
        kernel,
        out_shape=jax.ShapeDtypeStruct((B, m_b, npad), jnp.bfloat16),
        grid=(B, n_n),
        in_specs=in_specs,
        out_specs=pl.BlockSpec((1, m_b, tn), lambda b, n: (b, 0, n)),
        compiler_params=pltpu.CompilerParams(
            dimension_semantics=("parallel", "parallel"),
            vmem_limit_bytes=_vmem_limit(footprint)),
        cost_estimate=cost,
    )(*args)
    return out.reshape(B, ho, wo, npad)


# ----------------------------------------------------------------------------
# Shortcut fallback add (only used if epilogue fusion is not applicable).
# ----------------------------------------------------------------------------
def _add_kernel(a_ref, b_ref, o_ref):
    o_ref[...] = a_ref[...] + b_ref[...]


def pallas_add(a, b):
    shape = a.shape
    C = shape[-1]
    a2 = a.reshape(-1, C)
    b2 = b.reshape(-1, C)
    M = a2.shape[0]
    row_bytes = C * a2.dtype.itemsize
    tm = max(8, min(M, (_VMEM_BUDGET // (8 * row_bytes)) // 8 * 8))
    if M % 8 != 0 or tm >= M:
        tm = M
    footprint = 6 * tm * row_bytes
    out = pl.pallas_call(
        _add_kernel,
        out_shape=jax.ShapeDtypeStruct(a2.shape, a2.dtype),
        grid=(pl.cdiv(M, tm),),
        in_specs=[pl.BlockSpec((tm, C), lambda i: (i, 0)),
                  pl.BlockSpec((tm, C), lambda i: (i, 0))],
        out_specs=pl.BlockSpec((tm, C), lambda i: (i, 0)),
        compiler_params=pltpu.CompilerParams(
            dimension_semantics=("parallel",),
            vmem_limit_bytes=_vmem_limit(footprint)),
        cost_estimate=pl.CostEstimate(
            flops=M * C, transcendentals=0,
            bytes_accessed=3 * M * C * a2.dtype.itemsize),
    )(a2, b2)
    return out.reshape(shape)


# ----------------------------------------------------------------------------
# Pure data-movement glue.
# ----------------------------------------------------------------------------
def upsample_nearest_nhwc(x, factor):
    B, H, W, C = x.shape
    y = jnp.broadcast_to(x[:, :, None, :, None, :], (B, H, factor, W, factor, C))
    return y.reshape(B, H * factor, W * factor, C)


def _extract_real(x_pad, layout):
    """Slice real channels out of a lane-padded NHWC tensor."""
    parts, c0 = [], 0
    for real, padded in layout:
        parts.append(x_pad[..., c0:c0 + real])
        c0 += padded
    return parts[0] if len(parts) == 1 else jnp.concatenate(parts, axis=-1)


# ----------------------------------------------------------------------------
# Parameter construction (deterministic synthetic weights).
# Eval-mode BN fold: scale = gamma/sqrt(var+eps) folded into the weights,
# shift = beta - mean*scale kept as the kernel bias.
# ----------------------------------------------------------------------------
def build_darknet(blocks, key):
    net_info = blocks[0]
    in_channels = int(net_info['channels'])
    prev_filters = in_channels
    prev_layout = [(in_channels, _pad_to_lane(in_channels))]
    out_filters, out_layouts, params = [], [], []
    for index, block in enumerate(blocks[1:]):
        btype = block['type']
        if btype == 'convolutional':
            ksize = int(block['size'])
            pad = int(block['pad'])
            filters = int(block['filters'])
            stride = int(block['stride'])
            bn = int(block.get('batch_normalize', 0))
            padding = (ksize - 1) // 2 if pad else 0
            key, k1, k2, k3, k4, k5, k6 = jax.random.split(key, 7)
            w = jax.random.normal(
                k1, (filters, prev_filters, ksize, ksize), jnp.float32) * 0.05
            if bn:
                gamma = 1.0 + 0.1 * jax.random.normal(k2, (filters,), jnp.float32)
                beta = 0.05 * jax.random.normal(k3, (filters,), jnp.float32)
                mean = 0.01 * jax.random.normal(k4, (filters,), jnp.float32)
                var = 1.0 + 0.1 * jnp.abs(
                    jax.random.normal(k5, (filters,), jnp.float32))
                scale = gamma / jnp.sqrt(var + 1e-5)
                shift = beta - mean * scale
            else:
                bias = 0.05 * jax.random.normal(k6, (filters,), jnp.float32)
                scale = jnp.ones((filters,), jnp.float32)
                shift = bias

            n_pad = _pad_to_lane(filters)
            # (Cout,Cin,KH,KW) -> (KH,KW,Cin,Cout); fold BN scale into weights.
            w_khwc = jnp.transpose(w, (2, 3, 1, 0)) * scale[None, None, None, :]
            # Embed real input channels at their positions in the padded layout
            # of the incoming activation (zero rows at pad positions).
            segs, c0 = [], 0
            for real, padded in prev_layout:
                seg = w_khwc[:, :, c0:c0 + real, :]
                segs.append(jnp.pad(
                    seg, ((0, 0), (0, 0), (0, padded - real), (0, 0))))
                c0 += real
            w_emb = segs[0] if len(segs) == 1 else jnp.concatenate(segs, axis=2)
            cin_pad = sum(pp for _, pp in prev_layout)
            w_emb = jnp.pad(w_emb, ((0, 0), (0, 0), (0, 0), (0, n_pad - filters)))
            w3d = w_emb.reshape(ksize * ksize, cin_pad, n_pad).astype(jnp.bfloat16)
            shift_pad = jnp.pad(shift, (0, n_pad - filters)).astype(jnp.float32)

            params.append({'type': 'convolutional',
                           'w3d': w3d, 'shift_pad': shift_pad,
                           'leaky': block['activation'] == 'leaky',
                           'ksize': ksize, 'stride': stride, 'padding': padding,
                           # f32, unpadded params for the pure-JAX reference:
                           'w_oihw': w, 'scale': scale, 'shift': shift})
            prev_filters = filters
            prev_layout = [(filters, n_pad)]
        elif btype == 'upsample':
            params.append({'type': 'upsample', 'stride': int(block['stride'])})
        elif btype == 'route':
            layers = [int(i) if int(i) > 0 else int(i) + index
                      for i in block['layers'].split(',')]
            if len(layers) == 1:
                prev_filters = out_filters[layers[0]]
                prev_layout = list(out_layouts[layers[0]])
            else:
                prev_filters = out_filters[layers[0]] + out_filters[layers[1]]
                prev_layout = (list(out_layouts[layers[0]])
                               + list(out_layouts[layers[1]]))
            params.append({'type': 'route', 'layers': layers})
        elif btype == 'shortcut':
            params.append({'type': 'shortcut', 'from': int(block['from'])})
        elif btype == 'yolo':
            mask = [int(m) for m in block['mask'].split(',')]
            anchors = [float(a) for a in block['anchors'].split(',')]
            anchors = [(anchors[i], anchors[i + 1])
                       for i in range(0, len(anchors), 2)]
            anchors = [anchors[i] for i in mask]
            params.append({'type': 'yolo', 'anchors': anchors,
                           'num_classes': int(block['classes']),
                           'in_layout': list(prev_layout)})
        else:
            raise ValueError(f"Unknown type {btype}")
        out_filters.append(prev_filters)
        out_layouts.append(list(prev_layout))
    return params


# ----------------------------------------------------------------------------
# Darknet.forward (Pallas path: NHWC, bf16, lane-padded channels).
# ----------------------------------------------------------------------------
def darknet_forward(params, blocks, x_nchw):
    body = blocks[1:]
    # Explicit later references (route layers / shortcut 'from'); a conv whose
    # stored output is only consumed by the immediately-following linear
    # shortcut can have the residual fused into its epilogue.
    referenced = set()
    for idx, blk in enumerate(body):
        if blk['type'] == 'route':
            for l in blk['layers'].split(','):
                li = int(l)
                referenced.add(li if li > 0 else li + idx)
        elif blk['type'] == 'shortcut':
            f = int(blk['from'])
            referenced.add(f if f > 0 else f + idx)

    x = jnp.transpose(x_nchw, (0, 2, 3, 1)).astype(jnp.bfloat16)   # one transpose
    cin = x.shape[-1]
    cin_pad = _pad_to_lane(cin)
    if cin_pad != cin:
        x = jnp.pad(x, ((0, 0), (0, 0), (0, 0), (0, cin_pad - cin)))

    output, boxes, box_no = {}, {}, 0
    fused_shortcuts = set()
    for index, block in enumerate(body):
        p = params[index]
        btype = block['type']
        if btype == 'convolutional':
            residual = None
            if index + 1 < len(body):
                nxt = body[index + 1]
                if (nxt['type'] == 'shortcut'
                        and nxt.get('activation', 'linear') == 'linear'
                        and index not in referenced):
                    f = int(nxt['from'])
                    f = f if f > 0 else f + (index + 1)
                    cand = output.get(f)
                    if cand is not None:
                        B, H, W, _ = x.shape
                        k, s, pd = p['ksize'], p['stride'], p['padding']
                        ho = (H + 2 * pd - k) // s + 1
                        wo = (W + 2 * pd - k) // s + 1
                        npad = p['w3d'].shape[-1]
                        if cand.shape == (B, ho, wo, npad):
                            residual = cand
                            fused_shortcuts.add(index + 1)
            x = conv_forward(x, p, residual)
            output[index] = x
        elif btype == 'upsample':
            x = upsample_nearest_nhwc(x, p['stride'])
            output[index] = x
        elif btype == 'route':
            layers = p['layers']
            if len(layers) == 1:
                x = output[layers[0]]
            else:
                x = jnp.concatenate([output[layers[0]], output[layers[1]]],
                                    axis=-1)
            output[index] = x
        elif btype == 'shortcut':
            if index in fused_shortcuts:
                x = output[index - 1]          # residual already added in conv
            else:
                f = p['from']
                f = f if f > 0 else f + index
                x = pallas_add(output[f], output[index - 1])
            output[index] = x
        elif btype == 'yolo':
            y = _extract_real(x, p['in_layout'])                    # drop pad C
            y = jnp.transpose(y, (0, 3, 1, 2)).astype(jnp.float32)  # NCHW f32
            boxes[box_no] = {'output': y, 'anchors': p['anchors']}
            box_no += 1
            output[index] = None
    return x if len(boxes) == 0 else boxes


# ----------------------------------------------------------------------------
# Pure-JAX reference forward (NCHW, f32) for the correctness check.
# ----------------------------------------------------------------------------
def conv_forward_ref(x, p):
    s, pd = p['stride'], p['padding']
    y = lax.conv_general_dilated(
        x, p['w_oihw'], window_strides=(s, s), padding=[(pd, pd), (pd, pd)],
        dimension_numbers=('NCHW', 'OIHW', 'NCHW'))
    y = y * p['scale'][None, :, None, None] + p['shift'][None, :, None, None]
    if p['leaky']:
        y = jnp.where(y > 0, y, 0.1 * y)
    return y


def darknet_forward_ref(params, blocks, x):
    output, boxes, box_no = {}, {}, 0
    for index, block in enumerate(blocks[1:]):
        p = params[index]
        btype = block['type']
        if btype == 'convolutional':
            x = conv_forward_ref(x, p)
            output[index] = x
        elif btype == 'upsample':
            s = p['stride']
            x = jnp.repeat(jnp.repeat(x, s, axis=2), s, axis=3)
            output[index] = x
        elif btype == 'route':
            layers = p['layers']
            if len(layers) == 1:
                x = output[layers[0]]
            else:
                x = jnp.concatenate([output[layers[0]], output[layers[1]]],
                                    axis=1)
            output[index] = x
        elif btype == 'shortcut':
            f = p['from']
            f = f if f > 0 else f + index
            x = output[f] + output[index - 1]
            output[index] = x
        elif btype == 'yolo':
            boxes[box_no] = {'output': x, 'anchors': p['anchors']}
            box_no += 1
            output[index] = None
    return x if len(boxes) == 0 else boxes


if __name__ == "__main__":
    key = jax.random.PRNGKey(0)
    kx, kp = jax.random.split(key)
    x = jax.random.normal(kx, (2, 4, 16, 16), jnp.float32)   # NCHW

    params = build_darknet(BLOCKS, kp)

    boxes = darknet_forward(params, BLOCKS, x)
    for b in boxes.values():
        jax.block_until_ready(b['output'])

    # Expected YOLO head shapes: 3 anchors * (5 + 4 classes) = 27 channels.
    assert boxes[0]['output'].shape == (2, 27, 8, 8)
    assert boxes[1]['output'].shape == (2, 27, 16, 16)
    assert len(boxes[0]['anchors']) == 3 and len(boxes[1]['anchors']) == 2

    # Correctness against a pure-JAX f32 reference (activations/GEMM inputs
    # are bf16 through the net, accumulation is f32 -> loose-ish tolerance).
    boxes_ref = darknet_forward_ref(params, BLOCKS, x)
    for i in boxes:
        ok = jnp.allclose(boxes[i]['output'], boxes_ref[i]['output'],
                          rtol=2e-2, atol=2e-2)
        assert bool(ok), f"mismatch at yolo head {i}"

    print("KERNEL_OK")
</pallas_src>

<mosaic_0001>
module attributes {stable_mosaic.version = 11 : i64} {
  func.func @_conv_tap_kernel(%arg0: i32, %arg1: i32, %arg2: memref<1x18x18x128xbf16, #tpu.memory_space<vmem>>, %arg3: memref<9x128x128xbf16, #tpu.memory_space<vmem>>, %arg4: memref<1x128xf32, #tpu.memory_space<vmem>>, %arg5: memref<1x256x128xbf16, #tpu.memory_space<vmem>>) attributes {dimension_semantics = [#tpu.dimension_semantics<parallel>, #tpu.dimension_semantics<parallel>], iteration_bounds = array<i64: 2, 1>, scalar_prefetch = 0 : i64, scratch_operands = 0 : i64, tpu.core_type = #tpu.core_type<tc>, window_params = [{transform_indices = @transform_0, window_bounds = array<i64: 1, 18, 18, 128>}, {transform_indices = @transform_1, window_bounds = array<i64: 9, 128, 128>}, {transform_indices = @transform_2, window_bounds = array<i64: 1, 128>}, {transform_indices = @transform_3, window_bounds = array<i64: 1, 256, 128>}]} {
    %cst = arith.constant 0.000000e+00 : f32
    %0 = vector.broadcast %cst : f32 to vector<256x128xf32>
    %c0 = arith.constant 0 : index
    %c0_0 = arith.constant 0 : index
    %c0_1 = arith.constant 0 : index
    %c0_2 = arith.constant 0 : index
    %1 = vector.load %arg2[%c0, %c0_0, %c0_1, %c0_2] : memref<1x18x18x128xbf16, #tpu.memory_space<vmem>>, vector<1x16x16x128xbf16>
    %2 = vector.shape_cast %1 : vector<1x16x16x128xbf16> to vector<16x16x128xbf16>
    %3 = vector.shape_cast %2 : vector<16x16x128xbf16> to vector<256x128xbf16>
    %c0_3 = arith.constant 0 : index
    %c0_4 = arith.constant 0 : index
    %c0_5 = arith.constant 0 : index
    %4 = vector.load %arg3[%c0_3, %c0_4, %c0_5] : memref<9x128x128xbf16, #tpu.memory_space<vmem>>, vector<1x128x128xbf16>
    %5 = vector.shape_cast %4 : vector<1x128x128xbf16> to vector<128x128xbf16>
    %cst_6 = arith.constant dense<0.000000e+00> : vector<256x128xf32>
    %6 = tpu.matmul %3, %5, %cst_6 {dimension_numbers = #tpu.dot_dimension_numbers<[1], [0], [0], [1], [0, 0, 1, 1], [], []>} : vector<256x128xbf16>, vector<128x128xbf16>, vector<256x128xf32> -> vector<256x128xf32>
    %7 = arith.addf %0, %6 : vector<256x128xf32>
    %c0_7 = arith.constant 0 : index
    %c0_8 = arith.constant 0 : index
    %c1 = arith.constant 1 : index
    %c0_9 = arith.constant 0 : index
    %8 = vector.load %arg2[%c0_7, %c0_8, %c1, %c0_9] : memref<1x18x18x128xbf16, #tpu.memory_space<vmem>>, vector<1x16x16x128xbf16>
    %9 = vector.shape_cast %8 : vector<1x16x16x128xbf16> to vector<16x16x128xbf16>
    %10 = vector.shape_cast %9 : vector<16x16x128xbf16> to vector<256x128xbf16>
    %c1_10 = arith.constant 1 : index
    %c0_11 = arith.constant 0 : index
    %c0_12 = arith.constant 0 : index
    %11 = vector.load %arg3[%c1_10, %c0_11, %c0_12] : memref<9x128x128xbf16, #tpu.memory_space<vmem>>, vector<1x128x128xbf16>
    %12 = vector.shape_cast %11 : vector<1x128x128xbf16> to vector<128x128xbf16>
    %cst_13 = arith.constant dense<0.000000e+00> : vector<256x128xf32>
    %13 = tpu.matmul %10, %12, %cst_13 {dimension_numbers = #tpu.dot_dimension_numbers<[1], [0], [0], [1], [0, 0, 1, 1], [], []>} : vector<256x128xbf16>, vector<128x128xbf16>, vector<256x128xf32> -> vector<256x128xf32>
    %14 = arith.addf %7, %13 : vector<256x128xf32>
    %c0_14 = arith.constant 0 : index
    %c0_15 = arith.constant 0 : index
    %c2 = arith.constant 2 : index
    %c0_16 = arith.constant 0 : index
    %15 = vector.load %arg2[%c0_14, %c0_15, %c2, %c0_16] : memref<1x18x18x128xbf16, #tpu.memory_space<vmem>>, vector<1x16x16x128xbf16>
    %16 = vector.shape_cast %15 : vector<1x16x16x128xbf16> to vector<16x16x128xbf16>
    %17 = vector.shape_cast %16 : vector<16x16x128xbf16> to vector<256x128xbf16>
    %c2_17 = arith.constant 2 : index
    %c0_18 = arith.constant 0 : index
    %c0_19 = arith.constant 0 : index
    %18 = vector.load %arg3[%c2_17, %c0_18, %c0_19] : memref<9x128x128xbf16, #tpu.memory_space<vmem>>, vector<1x128x128xbf16>
    %19 = vector.shape_cast %18 : vector<1x128x128xbf16> to vector<128x128xbf16>
    %cst_20 = arith.constant dense<0.000000e+00> : vector<256x128xf32>
    %20 = tpu.matmul %17, %19, %cst_20 {dimension_numbers = #tpu.dot_dimension_numbers<[1], [0], [0], [1], [0, 0, 1, 1], [], []>} : vector<256x128xbf16>, vector<128x128xbf16>, vector<256x128xf32> -> vector<256x128xf32>
    %21 = arith.addf %14, %20 : vector<256x128xf32>
    %c0_21 = arith.constant 0 : index
    %c1_22 = arith.constant 1 : index
    %c0_23 = arith.constant 0 : index
    %c0_24 = arith.constant 0 : index
    %22 = vector.load %arg2[%c0_21, %c1_22, %c0_23, %c0_24] : memref<1x18x18x128xbf16, #tpu.memory_space<vmem>>, vector<1x16x16x128xbf16>
    %23 = vector.shape_cast %22 : vector<1x16x16x128xbf16> to vector<16x16x128xbf16>
    %24 = vector.shape_cast %23 : vector<16x16x128xbf16> to vector<256x128xbf16>
    %c3 = arith.constant 3 : index
    %c0_25 = arith.constant 0 : index
    %c0_26 = arith.constant 0 : index
    %25 = vector.load %arg3[%c3, %c0_25, %c0_26] : memref<9x128x128xbf16, #tpu.memory_space<vmem>>, vector<1x128x128xbf16>
    %26 = vector.shape_cast %25 : vector<1x128x128xbf16> to vector<128x128xbf16>
    %cst_27 = arith.constant dense<0.000000e+00> : vector<256x128xf32>
    %27 = tpu.matmul %24, %26, %cst_27 {dimension_numbers = #tpu.dot_dimension_numbers<[1], [0], [0], [1], [0, 0, 1, 1], [], []>} : vector<256x128xbf16>, vector<128x128xbf16>, vector<256x128xf32> -> vector<256x128xf32>
    %28 = arith.addf %21, %27 : vector<256x128xf32>
    %c0_28 = arith.constant 0 : index
    %c1_29 = arith.constant 1 : index
    %c1_30 = arith.constant 1 : index
    %c0_31 = arith.constant 0 : index
    %29 = vector.load %arg2[%c0_28, %c1_29, %c1_30, %c0_31] : memref<1x18x18x128xbf16, #tpu.memory_space<vmem>>, vector<1x16x16x128xbf16>
    %30 = vector.shape_cast %29 : vector<1x16x16x128xbf16> to vector<16x16x128xbf16>
    %31 = vector.shape_cast %30 : vector<16x16x128xbf16> to vector<256x128xbf16>
    %c4 = arith.constant 4 : index
    %c0_32 = arith.constant 0 : index
    %c0_33 = arith.constant 0 : index
    %32 = vector.load %arg3[%c4, %c0_32, %c0_33] : memref<9x128x128xbf16, #tpu.memory_space<vmem>>, vector<1x128x128xbf16>
    %33 = vector.shape_cast %32 : vector<1x128x128xbf16> to vector<128x128xbf16>
    %cst_34 = arith.constant dense<0.000000e+00> : vector<256x128xf32>
    %34 = tpu.matmul %31, %33, %cst_34 {dimension_numbers = #tpu.dot_dimension_numbers<[1], [0], [0], [1], [0, 0, 1, 1], [], []>} : vector<256x128xbf16>, vector<128x128xbf16>, vector<256x128xf32> -> vector<256x128xf32>
    %35 = arith.addf %28, %34 : vector<256x128xf32>
    %c0_35 = arith.constant 0 : index
    %c1_36 = arith.constant 1 : index
    %c2_37 = arith.constant 2 : index
    %c0_38 = arith.constant 0 : index
    %36 = vector.load %arg2[%c0_35, %c1_36, %c2_37, %c0_38] : memref<1x18x18x128xbf16, #tpu.memory_space<vmem>>, vector<1x16x16x128xbf16>
    %37 = vector.shape_cast %36 : vector<1x16x16x128xbf16> to vector<16x16x128xbf16>
    %38 = vector.shape_cast %37 : vector<16x16x128xbf16> to vector<256x128xbf16>
    %c5 = arith.constant 5 : index
    %c0_39 = arith.constant 0 : index
    %c0_40 = arith.constant 0 : index
    %39 = vector.load %arg3[%c5, %c0_39, %c0_40] : memref<9x128x128xbf16, #tpu.memory_space<vmem>>, vector<1x128x128xbf16>
    %40 = vector.shape_cast %39 : vector<1x128x128xbf16> to vector<128x128xbf16>
    %cst_41 = arith.constant dense<0.000000e+00> : vector<256x128xf32>
    %41 = tpu.matmul %38, %40, %cst_41 {dimension_numbers = #tpu.dot_dimension_numbers<[1], [0], [0], [1], [0, 0, 1, 1], [], []>} : vector<256x128xbf16>, vector<128x128xbf16>, vector<256x128xf32> -> vector<256x128xf32>
    %42 = arith.addf %35, %41 : vector<256x128xf32>
    %c0_42 = arith.constant 0 : index
    %c2_43 = arith.constant 2 : index
    %c0_44 = arith.constant 0 : index
    %c0_45 = arith.constant 0 : index
    %43 = vector.load %arg2[%c0_42, %c2_43, %c0_44, %c0_45] : memref<1x18x18x128xbf16, #tpu.memory_space<vmem>>, vector<1x16x16x128xbf16>
    %44 = vector.shape_cast %43 : vector<1x16x16x128xbf16> to vector<16x16x128xbf16>
    %45 = vector.shape_cast %44 : vector<16x16x128xbf16> to vector<256x128xbf16>
    %c6 = arith.constant 6 : index
    %c0_46 = arith.constant 0 : index
    %c0_47 = arith.constant 0 : index
    %46 = vector.load %arg3[%c6, %c0_46, %c0_47] : memref<9x128x128xbf16, #tpu.memory_space<vmem>>, vector<1x128x128xbf16>
    %47 = vector.shape_cast %46 : vector<1x128x128xbf16> to vector<128x128xbf16>
    %cst_48 = arith.constant dense<0.000000e+00> : vector<256x128xf32>
    %48 = tpu.matmul %45, %47, %cst_48 {dimension_numbers = #tpu.dot_dimension_numbers<[1], [0], [0], [1], [0, 0, 1, 1], [], []>} : vector<256x128xbf16>, vector<128x128xbf16>, vector<256x128xf32> -> vector<256x128xf32>
    %49 = arith.addf %42, %48 : vector<256x128xf32>
    %c0_49 = arith.constant 0 : index
    %c2_50 = arith.constant 2 : index
    %c1_51 = arith.constant 1 : index
    %c0_52 = arith.constant 0 : index
    %50 = vector.load %arg2[%c0_49, %c2_50, %c1_51, %c0_52] : memref<1x18x18x128xbf16, #tpu.memory_space<vmem>>, vector<1x16x16x128xbf16>
    %51 = vector.shape_cast %50 : vector<1x16x16x128xbf16> to vector<16x16x128xbf16>
    %52 = vector.shape_cast %51 : vector<16x16x128xbf16> to vector<256x128xbf16>
    %c7 = arith.constant 7 : index
    %c0_53 = arith.constant 0 : index
    %c0_54 = arith.constant 0 : index
    %53 = vector.load %arg3[%c7, %c0_53, %c0_54] : memref<9x128x128xbf16, #tpu.memory_space<vmem>>, vector<1x128x128xbf16>
    %54 = vector.shape_cast %53 : vector<1x128x128xbf16> to vector<128x128xbf16>
    %cst_55 = arith.constant dense<0.000000e+00> : vector<256x128xf32>
    %55 = tpu.matmul %52, %54, %cst_55 {dimension_numbers = #tpu.dot_dimension_numbers<[1], [0], [0], [1], [0, 0, 1, 1], [], []>} : vector<256x128xbf16>, vector<128x128xbf16>, vector<256x128xf32> -> vector<256x128xf32>
    %56 = arith.addf %49, %55 : vector<256x128xf32>
    %c0_56 = arith.constant 0 : index
    %c2_57 = arith.constant 2 : index
    %c2_58 = arith.constant 2 : index
    %c0_59 = arith.constant 0 : index
    %57 = vector.load %arg2[%c0_56, %c2_57, %c2_58, %c0_59] : memref<1x18x18x128xbf16, #tpu.memory_space<vmem>>, vector<1x16x16x128xbf16>
    %58 = vector.shape_cast %57 : vector<1x16x16x128xbf16> to vector<16x16x128xbf16>
    %59 = vector.shape_cast %58 : vector<16x16x128xbf16> to vector<256x128xbf16>
    %c8 = arith.constant 8 : index
    %c0_60 = arith.constant 0 : index
    %c0_61 = arith.constant 0 : index
    %60 = vector.load %arg3[%c8, %c0_60, %c0_61] : memref<9x128x128xbf16, #tpu.memory_space<vmem>>, vector<1x128x128xbf16>
    %61 = vector.shape_cast %60 : vector<1x128x128xbf16> to vector<128x128xbf16>
    %cst_62 = arith.constant dense<0.000000e+00> : vector<256x128xf32>
    %62 = tpu.matmul %59, %61, %cst_62 {dimension_numbers = #tpu.dot_dimension_numbers<[1], [0], [0], [1], [0, 0, 1, 1], [], []>} : vector<256x128xbf16>, vector<128x128xbf16>, vector<256x128xf32> -> vector<256x128xf32>
    %63 = arith.addf %56, %62 : vector<256x128xf32>
    %c0_63 = arith.constant 0 : index
    %c0_64 = arith.constant 0 : index
    %64 = vector.load %arg4[%c0_63, %c0_64] : memref<1x128xf32, #tpu.memory_space<vmem>>, vector<1x128xf32>
    %65 = vector.broadcast %64 : vector<1x128xf32> to vector<256x128xf32>
    %66 = arith.addf %63, %65 : vector<256x128xf32>
    %cst_65 = arith.constant 1.000000e-01 : f32
    %67 = vector.broadcast %cst_65 : f32 to vector<256x128xf32>
    %68 = arith.mulf %67, %66 : vector<256x128xf32>
    %69 = arith.maximumf %66, %68 : vector<256x128xf32>
    %70 = arith.truncf %69 : vector<256x128xf32> to vector<256x128xbf16>
    %c0_66 = arith.constant 0 : index
    %c0_67 = arith.constant 0 : index
    %c0_68 = arith.constant 0 : index
    %71 = vector.load %arg5[%c0_66, %c0_67, %c0_68] : memref<1x256x128xbf16, #tpu.memory_space<vmem>>, vector<1x256x128xbf16>
    %72 = vector.shape_cast %71 : vector<1x256x128xbf16> to vector<256x128xbf16>
    %73 = vector.shape_cast %70 : vector<256x128xbf16> to vector<1x256x128xbf16>
    tpu.vector_store %arg5[%c0_66, %c0_67, %c0_68], %73 {strides = array<i32>} : memref<1x256x128xbf16, #tpu.memory_space<vmem>>, vector<1x256x128xbf16>,
    return
  }
  func.func @transform_0(%arg0: i32, %arg1: i32) -> (i32, i32, i32, i32) {
    %c0_i32 = arith.constant 0 : i32
    %c0_i32_0 = arith.constant 0 : i32
    %c0_i32_1 = arith.constant 0 : i32
    %c0_i32_2 = arith.constant 0 : i32
    return %arg0, %c0_i32, %c0_i32_0, %c0_i32_1 : i32, i32, i32, i32
  }
  func.func @transform_1(%arg0: i32, %arg1: i32) -> (i32, i32, i32) {
    %c0_i32 = arith.constant 0 : i32
    %c0_i32_0 = arith.constant 0 : i32
    %c0_i32_1 = arith.constant 0 : i32
    return %c0_i32, %c0_i32_0, %arg1 : i32, i32, i32
  }
  func.func @transform_2(%arg0: i32, %arg1: i32) -> (i32, i32) {
    %c0_i32 = arith.constant 0 : i32
    %c0_i32_0 = arith.constant 0 : i32
    return %c0_i32, %arg1 : i32, i32
  }
  func.func @transform_3(%arg0: i32, %arg1: i32) -> (i32, i32, i32) {
    %c0_i32 = arith.constant 0 : i32
    %c0_i32_0 = arith.constant 0 : i32
    return %arg0, %c0_i32, %arg1 : i32, i32, i32
  }
}

</mosaic_0001>

<llo_original>
// kernel: tpu_custom_call.1
$region0: #{tpu_custom_call.1}
  #allocation0 [shape = 'u32[]', space=smem, size = 0x4, offset = 0x4, fixed_abs, tag = 'smem constant byte address 0x4 - core index']
  #allocation1 [shape = 'u32[144,128]{1,0:T(1,128)}', space=vmem, size = 0x12000, scoped, tag = 'internal scratch']
  %s0 = inlined_call_operand.vmem [shape: bf16[2,18,18,128], index: 0, kind: input, shape index: {}]
  %s1 = inlined_call_operand.vmem [shape: bf16[9,128,128], index: 1, kind: input, shape index: {}]
  %s2 = inlined_call_operand.vmem [shape: f32[1,128], index: 2, kind: input, shape index: {}]
  %s3 = inlined_call_operand.hbm [shape: bf16[2,256,128], index: 3, kind: output, shape index: {}]
  %s4 = sld [smem:[#allocation0]]
  $region45: #{tpu_custom_call.1} parent=0
    _
  %s6 = ssub.s32 1, %s4
  %s7 = scalar_select 0, %s6, %s4
  $region1: #{tpu_custom_call.1} parent=0
    #allocation2 [shape = 'u8[131072]{0}', space=vmem, size = 0x20000, scoped, tag = 'output window, operand 0']
    #allocation3 [shape = 's32[2]{0}', space=sflag, size = 0x8, scoped, tag = 'scoped memory for tpu_custom_call.1']
    %8 = vsyncpa [#allocation3], 0
    %s9 = scalar_lea.sflag [#allocation3], 1
    %10 = vsyncpa %s9, 0
    loop: start=0, step=1, limit=4
    $region2: #{tpu_custom_call.1} parent=1 // loop_pre_header
      _
    $region3: #{tpu_custom_call.1} parent=1 // loop_header
      %s12 = sphi 0, %s16
      %p13 = scmp.ge.s32.totalorder %s12, 4
      %s19 = sphi 0, %s31
      %s20 = sphi 0, %s27
      %s21 = sphi 0, %s19
      %s22 = sphi 0, %s20
      %s23 = sphi 0, %s21
      %s24 = sphi 0, %s22
      %s34 = sphi 0, %s36
      %s37 = sphi 0, %s34
      %s38 = sphi 0, %s37
      %s54 = sphi 0, %s38
      %s60 = sphi 0, %s62
      %s63 = sphi 0, %s60
      %s64 = sphi 0, %s63
      %s80 = sphi 0, %s64
      %s86 = sphi 0, %s88
      %s89 = sphi 0, %s86
      %s90 = sphi 0, %s89
      %s106 = sphi 0, %s90
      %s114 = sphi 0, %s116
      %s117 = sphi 0, %s114
      %s118 = sphi 0, %s117
      %s134 = sphi 0, %s118
    $region4: #{tpu_custom_call.1} parent=1 // loop_header_branch
      %15 = sbr.rel (%p13) target = $region8
    $region5: #{tpu_custom_call.1} parent=1 // loop_body
      %s17 = ssub.s32 %s12, 1
      %s18 = ssub.s32 %s12, 2
      %s25 = sadd.s32 1, %s20
      %p26 = scmp.ge.s32.totalorder %s25, 1
      %s27 = scalar_select %p26, 0, %s25
      %s28 = sadd.s32 1, %s19
      %s29 = scalar_select %p26, %s28, %s19
      %p30 = scmp.ge.s32.totalorder %s29, 2
      %s31 = scalar_select %p30, 0, %s29
      %s32 = ssub.s32 %s19, %s31
      %p33 = scmp.eq.s32.totalorder %s32, 0
      %s35 = sadd.s32 %s34, 1
      %s36 = scalar_select %p33, %s34, %s35
      %p39 = pneg %p33
      %p40 = scmp.eq.s32.totalorder %s12, 1
      %p41 = por %p39, %p40
      %p42 = scmp.ne.s32.totalorder %s34, %s37
      %p43 = scmp.eq.s32.totalorder %s12, 0
      %p44 = por %p42, %p43
      %p45 = scmp.ne.s32.totalorder %s34, %s37
      %p46 = scmp.eq.s32.totalorder %s17, 1
      %p47 = por %p45, %p46
      %p48 = scmp.ne.s32.totalorder %s37, %s38
      %p49 = scmp.eq.s32.totalorder %s17, 0
      %p50 = por %p48, %p49
      %p51 = scmp.ne.s32.totalorder %s37, %s38
      %p52 = scmp.eq.s32.totalorder %s18, 1
      %p53 = por %p51, %p52
      %p55 = scmp.ne.s32.totalorder %s38, %s54
      %p56 = scmp.eq.s32.totalorder %s18, 0
      %p57 = por %p55, %p56
      %s58 = ssub.s32 %s20, %s27
      %p59 = scmp.eq.s32.totalorder %s58, 0
      %s61 = sadd.s32 %s60, 1
      %s62 = scalar_select %p59, %s60, %s61
      %p65 = pneg %p59
      %p66 = scmp.eq.s32.totalorder %s12, 1
      %p67 = por %p65, %p66
      %p68 = scmp.ne.s32.totalorder %s60, %s63
      %p69 = scmp.eq.s32.totalorder %s12, 0
      %p70 = por %p68, %p69
      %p71 = scmp.ne.s32.totalorder %s60, %s63
      %p72 = scmp.eq.s32.totalorder %s17, 1
      %p73 = por %p71, %p72
      %p74 = scmp.ne.s32.totalorder %s63, %s64
      %p75 = scmp.eq.s32.totalorder %s17, 0
      %p76 = por %p74, %p75
      %p77 = scmp.ne.s32.totalorder %s63, %s64
      %p78 = scmp.eq.s32.totalorder %s18, 1
      %p79 = por %p77, %p78
      %p81 = scmp.ne.s32.totalorder %s64, %s80
      %p82 = scmp.eq.s32.totalorder %s18, 0
      %p83 = por %p81, %p82
      %s84 = ssub.s32 %s20, %s27
      %p85 = scmp.eq.s32.totalorder %s84, 0
      %s87 = sadd.s32 %s86, 1
      %s88 = scalar_select %p85, %s86, %s87
      %p91 = pneg %p85
      %p92 = scmp.eq.s32.totalorder %s12, 1
      %p93 = por %p91, %p92
      %p94 = scmp.ne.s32.totalorder %s86, %s89
      %p95 = scmp.eq.s32.totalorder %s12, 0
      %p96 = por %p94, %p95
      %p97 = scmp.ne.s32.totalorder %s86, %s89
      %p98 = scmp.eq.s32.totalorder %s17, 1
      %p99 = por %p97, %p98
      %p100 = scmp.ne.s32.totalorder %s89, %s90
      %p101 = scmp.eq.s32.totalorder %s17, 0
      %p102 = por %p100, %p101
      %p103 = scmp.ne.s32.totalorder %s89, %s90
      %p104 = scmp.eq.s32.totalorder %s18, 1
      %p105 = por %p103, %p104
      %p107 = scmp.ne.s32.totalorder %s90, %s106
      %p108 = scmp.eq.s32.totalorder %s18, 0
      %p109 = por %p107, %p108
      %s110 = ssub.s32 %s19, %s31
      %s111 = ssub.s32 %s20, %s27
      %s112 = sor.u32 %s110, %s111
      %p113 = scmp.eq.s32.totalorder %s112, 0
      %s115 = sadd.s32 %s114, 1
      %s116 = scalar_select %p113, %s114, %s115
      %p119 = pneg %p113
      %p120 = scmp.eq.s32.totalorder %s12, 1
      %p121 = por %p119, %p120
      %p122 = scmp.ne.s32.totalorder %s114, %s117
      %p123 = scmp.eq.s32.totalorder %s12, 0
      %p124 = por %p122, %p123
      %p125 = scmp.ne.s32.totalorder %s114, %s117
      %p126 = scmp.eq.s32.totalorder %s17, 1
      %p127 = por %p125, %p126
      %p128 = scmp.ne.s32.totalorder %s117, %s118
      %p129 = scmp.eq.s32.totalorder %s17, 0
      %p130 = por %p128, %p129
      %p131 = scmp.ne.s32.totalorder %s117, %s118
      %p132 = scmp.eq.s32.totalorder %s18, 1
      %p133 = por %p131, %p132
      %p135 = scmp.ne.s32.totalorder %s118, %s134
      %p136 = scmp.eq.s32.totalorder %s18, 0
      %p137 = por %p135, %p136
      %p138 = scmp.le.s32.totalorder 1, %s12
      %p139 = scmp.lt.s32.totalorder %s12, 3
      %p140 = pnand %p138, %p139
      %p141 = pneg %p140
      // Predicated region
      $region9: #{tpu_custom_call.1} parent=5 // pred_check
        _
      $region10: #{tpu_custom_call.1} parent=5 // pred_check_branch
        %143 = sbr.rel (%p140) target = $region12
      $region11: #{tpu_custom_call.1} parent=5 // pred_region
        %s144 = ssub.s32 %s12, 1
        // Predicated region
        $region13: #{tpu_custom_call.1} parent=11 // pred_check
          %p145 = pneg %p76
        $region14: #{tpu_custom_call.1} parent=11 // pred_check_branch
          %147 = sbr.rel (%p145) target = $region16
        $region15: #{tpu_custom_call.1} parent=11 // pred_region
          %p148 = scmp.lt.s32.totalorder %s22, 0
          %s149 = scalar_select %p148, %s22, 0
          %s150 = smul.addr %s149, 4
          %s151 = scalar_lea.vmem %s1, %s150
        $region16: #{tpu_custom_call.1} parent=11 // pred_fallthru
          _
        // Predicated region
        $region17: #{tpu_custom_call.1} parent=11 // pred_check
          %p152 = pneg %p102
        $region18: #{tpu_custom_call.1} parent=11 // pred_check_branch
          %154 = sbr.rel (%p152) target = $region20
        $region19: #{tpu_custom_call.1} parent=11 // pred_region
          %p155 = scmp.lt.s32.totalorder %s22, 0
          %s156 = scalar_select %p155, %s22, 0
          %s157 = scalar_lea.vmem %s2, %s156
        $region20: #{tpu_custom_call.1} parent=11 // pred_fallthru
          _
      $region12: #{tpu_custom_call.1} parent=5 // pred_fallthru
        _
      %p158 = scmp.lt.s32.totalorder %s12, 2
      // Predicated region
      $region21: #{tpu_custom_call.1} parent=5 // pred_check
        %p159 = pneg %p158
      $region22: #{tpu_custom_call.1} parent=5 // pred_check_branch
        %161 = sbr.rel (%p159) target = $region24
      $region23: #{tpu_custom_call.1} parent=5 // pred_region
        // Predicated region
        $region25: #{tpu_custom_call.1} parent=23 // pred_check
          %p162 = pneg %p44
        $region26: #{tpu_custom_call.1} parent=23 // pred_check_branch
          %164 = sbr.rel (%p162) target = $region28
        $region27: #{tpu_custom_call.1} parent=23 // pred_region
          %p165 = scmp.lt.s32.totalorder %s19, 1
          %s166 = scalar_select %p165, %s19, 1
          %s167 = smul.addr %s166, 54
          %s168 = smul.addr %s167, 4
          %s169 = scalar_lea.vmem %s0, %s168
        $region28: #{tpu_custom_call.1} parent=23 // pred_fallthru
          _
      $region24: #{tpu_custom_call.1} parent=5 // pred_fallthru
        _
      %p170 = scmp.le.s32.totalorder 1, %s12
      %p171 = scmp.lt.s32.totalorder %s12, 3
      %p172 = pnand %p170, %p171
      %p173 = pneg %p172
      // Predicated region
      $region29: #{tpu_custom_call.1} parent=5 // pred_check
        _
      $region30: #{tpu_custom_call.1} parent=5 // pred_check_branch
        %175 = sbr.rel (%p172) target = $region32
      $region31: #{tpu_custom_call.1} parent=5 // pred_region
        %s176 = ssub.s32 %s12, 1
        %p177 = scmp.lt.s32.totalorder %s21, 1
        %s178 = scalar_select %p177, %s21, 1
        %s179 = smul.addr %s178, 54
        %s180 = smul.addr %s179, 4
        %s181 = scalar_lea.vmem %s0, %s180
        %p182 = pneg %p50
        %p183 = pneg %p47
        %p184 = scmp.lt.s32.totalorder %s22, 0
        %s185 = scalar_select %p184, %s22, 0
        %s186 = smul.addr %s185, 4
        %s187 = scalar_lea.vmem %s1, %s186
        %p188 = pneg %p76
        %p189 = pneg %p73
        %p190 = scmp.lt.s32.totalorder %s22, 0
        %s191 = scalar_select %p190, %s22, 0
        %s192 = scalar_lea.vmem %s2, %s191
        %p193 = pneg %p102
        %p194 = pneg %p99
        %p195 = pneg %p130
        %p196 = pneg %p127
        %s197 = sand.u32 %s117, 1
        %s198 = scalar_lea.sflag [#allocation3], %s197
        %s199 = sand.u32 %s117, 1
        %s200 = smul.addr %s199, 128
        %s201 = scalar_lea.vmem [#allocation2], %s200
        %p202 = scmp.lt.s32.totalorder %s21, 1
        %s203 = scalar_select %p202, %s21, 1
        %s204 = smul.addr %s203, 54
        %s205 = smul.addr %s204, 4
        %s206 = scalar_lea.vmem %s0, %s205
        %p207 = scmp.lt.s32.totalorder %s22, 0
        %s208 = scalar_select %p207, %s22, 0
        %s209 = smul.addr %s208, 4
        %s210 = scalar_lea.vmem %s1, %s209
        %p211 = scmp.lt.s32.totalorder %s22, 0
        %s212 = scalar_select %p211, %s22, 0
        %s213 = scalar_lea.vmem %s2, %s212
        %v215 = vld [vmem:[%s206] sm:$0xf]
        %v216 = vld [vmem:[%s206 + $0x4] sm:$0xf]
        %v217 = vld [vmem:[%s206 + $0xc] sm:$0xf]
        %v218 = vld [vmem:[%s206 + $0x10] sm:$0xf]
        %v219 = vld [vmem:[%s206 + $0x18] sm:$0xf]
        %v220 = vld [vmem:[%s206 + $0x1c] sm:$0xf]
        %v221 = vld [vmem:[%s206 + $0x24] sm:$0xf]
        %v222 = vld [vmem:[%s206 + $0x28] sm:$0xf]
        %v223 = vld [vmem:[%s206 + $0x30] sm:$0xf]
        %v224 = vld [vmem:[%s206 + $0x34] sm:$0xf]
        %v225 = vld [vmem:[%s206 + $0x3c] sm:$0xf]
        %v226 = vld [vmem:[%s206 + $0x40] sm:$0xf]
        %v227 = vld [vmem:[%s206 + $0x48] sm:$0xf]
        %v228 = vld [vmem:[%s206 + $0x4c] sm:$0xf]
        %v229 = vld [vmem:[%s206 + $0x54] sm:$0xf]
        %v230 = vld [vmem:[%s206 + $0x58] sm:$0xf]
        %v231 = vld [vmem:[%s206 + $0x60] sm:$0xf]
        %v232 = vld [vmem:[%s206 + $0x64] sm:$0xf]
        %v233 = vld [vmem:[%s206 + $0x6c] sm:$0xf]
        %v234 = vld [vmem:[%s206 + $0x70] sm:$0xf]
        %v235 = vld [vmem:[%s206 + $0x78] sm:$0xf]
        %v236 = vld [vmem:[%s206 + $0x7c] sm:$0xf]
        %v237 = vld [vmem:[%s206 + $0x84] sm:$0xf]
        %v238 = vld [vmem:[%s206 + $0x88] sm:$0xf]
        %v239 = vld [vmem:[%s206 + $0x90] sm:$0xf]
        %v240 = vld [vmem:[%s206 + $0x94] sm:$0xf]
        %v241 = vld [vmem:[%s206 + $0x9c] sm:$0xf]
        %v242 = vld [vmem:[%s206 + $0xa0] sm:$0xf]
        %v243 = vld [vmem:[%s206 + $0xa8] sm:$0xf]
        %v244 = vld [vmem:[%s206 + $0xac] sm:$0xf]
        %v245 = vld [vmem:[%s206 + $0xb4] sm:$0xf]
        %v246 = vld [vmem:[%s206 + $0xb8] sm:$0xf]
        %v247 = vld [vmem:[%s210] sm:$0xf]
        %v248 = vld [vmem:[%s210 + $0x4] sm:$0xf]
        %v249 = vld [vmem:[%s210 + $0x8] sm:$0xf]
        %v250 = vld [vmem:[%s210 + $0xc] sm:$0xf]
        %v251 = vld [vmem:[%s210 + $0x10] sm:$0xf]
        %v252 = vld [vmem:[%s210 + $0x14] sm:$0xf]
        %v253 = vld [vmem:[%s210 + $0x18] sm:$0xf]
        %v254 = vld [vmem:[%s210 + $0x1c] sm:$0xf]
        %v255 = vld [vmem:[%s210 + $0x20] sm:$0xf]
        %v256 = vld [vmem:[%s210 + $0x24] sm:$0xf]
        %v257 = vld [vmem:[%s210 + $0x28] sm:$0xf]
        %v258 = vld [vmem:[%s210 + $0x2c] sm:$0xf]
        %v259 = vld [vmem:[%s210 + $0x30] sm:$0xf]
        %v260 = vld [vmem:[%s210 + $0x34] sm:$0xf]
        %v261 = vld [vmem:[%s210 + $0x38] sm:$0xf]
        %v262 = vld [vmem:[%s210 + $0x3c] sm:$0xf]
        %v263 = vld [vmem:[%s206 + $0x8] sm:$0x1]
        %v264 = vld [vmem:[%s206 + $0x14] sm:$0x1]
        %v265 = vld [vmem:[%s206 + $0x20] sm:$0x1]
        %v266 = vld [vmem:[%s206 + $0x2c] sm:$0x1]
        %v267 = vld [vmem:[%s206 + $0x38] sm:$0x1]
        %v268 = vld [vmem:[%s206 + $0x44] sm:$0x1]
        %v269 = vld [vmem:[%s206 + $0x50] sm:$0x1]
        %v270 = vld [vmem:[%s206 + $0x5c] sm:$0x1]
        %v271 = vld [vmem:[%s206 + $0x68] sm:$0x1]
        %v272 = vld [vmem:[%s206 + $0x74] sm:$0x1]
        %v273 = vld [vmem:[%s206 + $0x80] sm:$0x1]
        %v274 = vld [vmem:[%s206 + $0x8c] sm:$0x1]
        %v275 = vld [vmem:[%s206 + $0x98] sm:$0x1]
        %v276 = vld [vmem:[%s206 + $0xa4] sm:$0x1]
        %v277 = vld [vmem:[%s206 + $0xb0] sm:$0x1]
        %v278 = vld [vmem:[%s206 + $0xbc] sm:$0x1]
        %vm279 = vsmask.f32 3328
        %vm280 = vsmask.f32 7440
        %vm281 = vmor %vm279, %vm280
        %v283 = vshrl.u32 %v215, 16
        %v285 = vrot.slane %v283, 4
        %v286 = vshll.u32 %v215, 16
        %v288 = vrot.slane %v286, 5
        %v289 = vor.u32 %v285, %v288
        %v290 = vrot.slane %v289, 4
        %v292 = vshll.u32 %v216, 16
        %v294 = vrot.slane %v292, 5
        %v295 = vsel %vm281, %v290, %v294
        %v296 = vshrl.u32 %v216, 16
        %v298 = vrot.slane %v296, 4
        %v299 = vor.u32 %v298, %v294
        %v300 = vrot.slane %v299, 4
        %v302 = vshll.u32 %v263, 16
        %v304 = vrot.slane %v302, 5
        %v305 = vsel %vm281, %v300, %v304
        %v307 = vshrl.u32 %v217, 16
        %v309 = vrot.slane %v307, 4
        %v310 = vshll.u32 %v217, 16
        %v312 = vrot.slane %v310, 5
        %v313 = vor.u32 %v309, %v312
        %v314 = vrot.slane %v313, 4
        %v316 = vshll.u32 %v218, 16
        %v318 = vrot.slane %v316, 5
        %v319 = vsel %vm281, %v314, %v318
        %v320 = vshrl.u32 %v218, 16
        %v322 = vrot.slane %v320, 4
        %v323 = vor.u32 %v322, %v318
        %v324 = vrot.slane %v323, 4
        %v326 = vshll.u32 %v264, 16
        %v328 = vrot.slane %v326, 5
        %v329 = vsel %vm281, %v324, %v328
        %v331 = vshrl.u32 %v219, 16
        %v333 = vrot.slane %v331, 4
        %v334 = vshll.u32 %v219, 16
        %v336 = vrot.slane %v334, 5
        %v337 = vor.u32 %v333, %v336
        %v338 = vrot.slane %v337, 4
        %v340 = vshll.u32 %v220, 16
        %v342 = vrot.slane %v340, 5
        %v343 = vsel %vm281, %v338, %v342
        %v344 = vshrl.u32 %v220, 16
        %v346 = vrot.slane %v344, 4
        %v347 = vor.u32 %v346, %v342
        %v348 = vrot.slane %v347, 4
        %v350 = vshll.u32 %v265, 16
        %v352 = vrot.slane %v350, 5
        %v353 = vsel %vm281, %v348, %v352
        %v355 = vshrl.u32 %v221, 16
        %v357 = vrot.slane %v355, 4
        %v358 = vshll.u32 %v221, 16
        %v360 = vrot.slane %v358, 5
        %v361 = vor.u32 %v357, %v360
        %v362 = vrot.slane %v361, 4
        %v364 = vshll.u32 %v222, 16
        %v366 = vrot.slane %v364, 5
        %v367 = vsel %vm281, %v362, %v366
        %v368 = vshrl.u32 %v222, 16
        %v370 = vrot.slane %v368, 4
        %v371 = vor.u32 %v370, %v366
        %v372 = vrot.slane %v371, 4
        %v374 = vshll.u32 %v266, 16
        %v376 = vrot.slane %v374, 5
        %v377 = vsel %vm281, %v372, %v376
        %v379 = vshrl.u32 %v223, 16
        %v381 = vrot.slane %v379, 4
        %v382 = vshll.u32 %v223, 16
        %v384 = vrot.slane %v382, 5
        %v385 = vor.u32 %v381, %v384
        %v386 = vrot.slane %v385, 4
        %v388 = vshll.u32 %v224, 16
        %v390 = vrot.slane %v388, 5
        %v391 = vsel %vm281, %v386, %v390
        %v392 = vshrl.u32 %v224, 16
        %v394 = vrot.slane %v392, 4
        %v395 = vor.u32 %v394, %v390
        %v396 = vrot.slane %v395, 4
        %v398 = vshll.u32 %v267, 16
        %v400 = vrot.slane %v398, 5
        %v401 = vsel %vm281, %v396, %v400
        %v403 = vshrl.u32 %v225, 16
        %v405 = vrot.slane %v403, 4
        %v406 = vshll.u32 %v225, 16
        %v408 = vrot.slane %v406, 5
        %v409 = vor.u32 %v405, %v408
        %v410 = vrot.slane %v409, 4
        %v412 = vshll.u32 %v226, 16
        %v414 = vrot.slane %v412, 5
        %v415 = vsel %vm281, %v410, %v414
        %v416 = vshrl.u32 %v226, 16
        %v418 = vrot.slane %v416, 4
        %v419 = vor.u32 %v418, %v414
        %v420 = vrot.slane %v419, 4
        %v422 = vshll.u32 %v268, 16
        %v424 = vrot.slane %v422, 5
        %v425 = vsel %vm281, %v420, %v424
        %v427 = vshrl.u32 %v227, 16
        %v429 = vrot.slane %v427, 4
        %v430 = vshll.u32 %v227, 16
        %v432 = vrot.slane %v430, 5
        %v433 = vor.u32 %v429, %v432
        %v434 = vrot.slane %v433, 4
        %v436 = vshll.u32 %v228, 16
        %v438 = vrot.slane %v436, 5
        %v439 = vsel %vm281, %v434, %v438
        %v440 = vshrl.u32 %v228, 16
        %v442 = vrot.slane %v440, 4
        %v443 = vor.u32 %v442, %v438
        %v444 = vrot.slane %v443, 4
        %v446 = vshll.u32 %v269, 16
        %v448 = vrot.slane %v446, 5
        %v449 = vsel %vm281, %v444, %v448
        %v451 = vshrl.u32 %v229, 16
        %v453 = vrot.slane %v451, 4
        %v454 = vshll.u32 %v229, 16
        %v456 = vrot.slane %v454, 5
        %v457 = vor.u32 %v453, %v456
        %v458 = vrot.slane %v457, 4
        %v460 = vshll.u32 %v230, 16
        %v462 = vrot.slane %v460, 5
        %v463 = vsel %vm281, %v458, %v462
        %v464 = vshrl.u32 %v230, 16
        %v466 = vrot.slane %v464, 4
        %v467 = vor.u32 %v466, %v462
        %v468 = vrot.slane %v467, 4
        %v470 = vshll.u32 %v270, 16
        %v472 = vrot.slane %v470, 5
        %v473 = vsel %vm281, %v468, %v472
        %v475 = vshrl.u32 %v231, 16
        %v477 = vrot.slane %v475, 4
        %v478 = vshll.u32 %v231, 16
        %v480 = vrot.slane %v478, 5
        %v481 = vor.u32 %v477, %v480
        %v482 = vrot.slane %v481, 4
        %v484 = vshll.u32 %v232, 16
        %v486 = vrot.slane %v484, 5
        %v487 = vsel %vm281, %v482, %v486
        %v488 = vshrl.u32 %v232, 16
        %v490 = vrot.slane %v488, 4
        %v491 = vor.u32 %v490, %v486
        %v492 = vrot.slane %v491, 4
        %v494 = vshll.u32 %v271, 16
        %v496 = vrot.slane %v494, 5
        %v497 = vsel %vm281, %v492, %v496
        %v499 = vshrl.u32 %v233, 16
        %v501 = vrot.slane %v499, 4
        %v502 = vshll.u32 %v233, 16
        %v504 = vrot.slane %v502, 5
        %v505 = vor.u32 %v501, %v504
        %v506 = vrot.slane %v505, 4
        %v508 = vshll.u32 %v234, 16
        %v510 = vrot.slane %v508, 5
        %v511 = vsel %vm281, %v506, %v510
        %v512 = vshrl.u32 %v234, 16
        %v514 = vrot.slane %v512, 4
        %v515 = vor.u32 %v514, %v510
        %v516 = vrot.slane %v515, 4
        %v518 = vshll.u32 %v272, 16
        %v520 = vrot.slane %v518, 5
        %v521 = vsel %vm281, %v516, %v520
        %v523 = vshrl.u32 %v235, 16
        %v525 = vrot.slane %v523, 4
        %v526 = vshll.u32 %v235, 16
        %v528 = vrot.slane %v526, 5
        %v529 = vor.u32 %v525, %v528
        %v530 = vrot.slane %v529, 4
        %v532 = vshll.u32 %v236, 16
        %v534 = vrot.slane %v532, 5
        %v535 = vsel %vm281, %v530, %v534
        %v536 = vshrl.u32 %v236, 16
        %v538 = vrot.slane %v536, 4
        %v539 = vor.u32 %v538, %v534
        %v540 = vrot.slane %v539, 4
        %v542 = vshll.u32 %v273, 16
        %v544 = vrot.slane %v542, 5
        %v545 = vsel %vm281, %v540, %v544
        %v547 = vshrl.u32 %v237, 16
        %v549 = vrot.slane %v547, 4
        %v550 = vshll.u32 %v237, 16
        %v552 = vrot.slane %v550, 5
        %v553 = vor.u32 %v549, %v552
        %v554 = vrot.slane %v553, 4
        %v556 = vshll.u32 %v238, 16
        %v558 = vrot.slane %v556, 5
        %v559 = vsel %vm281, %v554, %v558
        %v560 = vshrl.u32 %v238, 16
        %v562 = vrot.slane %v560, 4
        %v563 = vor.u32 %v562, %v558
        %v564 = vrot.slane %v563, 4
        %v566 = vshll.u32 %v274, 16
        %v568 = vrot.slane %v566, 5
        %v569 = vsel %vm281, %v564, %v568
        %v571 = vshrl.u32 %v239, 16
        %v573 = vrot.slane %v571, 4
        %v574 = vshll.u32 %v239, 16
        %v576 = vrot.slane %v574, 5
        %v577 = vor.u32 %v573, %v576
        %v578 = vrot.slane %v577, 4
        %v580 = vshll.u32 %v240, 16
        %v582 = vrot.slane %v580, 5
        %v583 = vsel %vm281, %v578, %v582
        %v584 = vshrl.u32 %v240, 16
        %v586 = vrot.slane %v584, 4
        %v587 = vor.u32 %v586, %v582
        %v588 = vrot.slane %v587, 4
        %v590 = vshll.u32 %v275, 16
        %v592 = vrot.slane %v590, 5
        %v593 = vsel %vm281, %v588, %v592
        %v595 = vshrl.u32 %v241, 16
        %v597 = vrot.slane %v595, 4
        %v598 = vshll.u32 %v241, 16
        %v600 = vrot.slane %v598, 5
        %v601 = vor.u32 %v597, %v600
        %v602 = vrot.slane %v601, 4
        %v604 = vshll.u32 %v242, 16
        %v606 = vrot.slane %v604, 5
        %v607 = vsel %vm281, %v602, %v606
        %v608 = vshrl.u32 %v242, 16
        %v610 = vrot.slane %v608, 4
        %v611 = vor.u32 %v610, %v606
        %v612 = vrot.slane %v611, 4
        %v614 = vshll.u32 %v276, 16
        %v616 = vrot.slane %v614, 5
        %v617 = vsel %vm281, %v612, %v616
        %v619 = vshrl.u32 %v243, 16
        %v621 = vrot.slane %v619, 4
        %v622 = vshll.u32 %v243, 16
        %v624 = vrot.slane %v622, 5
        %v625 = vor.u32 %v621, %v624
        %v626 = vrot.slane %v625, 4
        %v628 = vshll.u32 %v244, 16
        %v630 = vrot.slane %v628, 5
        %v631 = vsel %vm281, %v626, %v630
        %v632 = vshrl.u32 %v244, 16
        %v634 = vrot.slane %v632, 4
        %v635 = vor.u32 %v634, %v630
        %v636 = vrot.slane %v635, 4
        %v638 = vshll.u32 %v277, 16
        %v640 = vrot.slane %v638, 5
        %v641 = vsel %vm281, %v636, %v640
        %v643 = vshrl.u32 %v245, 16
        %v645 = vrot.slane %v643, 4
        %v646 = vshll.u32 %v245, 16
        %v648 = vrot.slane %v646, 5
        %v649 = vor.u32 %v645, %v648
        %v650 = vrot.slane %v649, 4
        %v652 = vshll.u32 %v246, 16
        %v654 = vrot.slane %v652, 5
        %v655 = vsel %vm281, %v650, %v654
        %v656 = vshrl.u32 %v246, 16
        %v658 = vrot.slane %v656, 4
        %v659 = vor.u32 %v658, %v654
        %v660 = vrot.slane %v659, 4
        %v662 = vshll.u32 %v278, 16
        %v664 = vrot.slane %v662, 5
        %v665 = vsel %vm281, %v660, %v664
        %s666 = scalar_lea.vmem %s210, 64
        %v667 = vld [vmem:[%s666] sm:$0xf]
        %v668 = vld [vmem:[%s666 + $0x4] sm:$0xf]
        %v669 = vld [vmem:[%s666 + $0x8] sm:$0xf]
        %v670 = vld [vmem:[%s666 + $0xc] sm:$0xf]
        %v671 = vld [vmem:[%s666 + $0x10] sm:$0xf]
        %v672 = vld [vmem:[%s666 + $0x14] sm:$0xf]
        %v673 = vld [vmem:[%s666 + $0x18] sm:$0xf]
        %v674 = vld [vmem:[%s666 + $0x1c] sm:$0xf]
        %v675 = vld [vmem:[%s666 + $0x20] sm:$0xf]
        %v676 = vld [vmem:[%s666 + $0x24] sm:$0xf]
        %v677 = vld [vmem:[%s666 + $0x28] sm:$0xf]
        %v678 = vld [vmem:[%s666 + $0x2c] sm:$0xf]
        %v679 = vld [vmem:[%s666 + $0x30] sm:$0xf]
        %v680 = vld [vmem:[%s666 + $0x34] sm:$0xf]
        %v681 = vld [vmem:[%s666 + $0x38] sm:$0xf]
        %v682 = vld [vmem:[%s666 + $0x3c] sm:$0xf]
        %v683 = vunpack.c.l.b16 %v295
        %v684 = vunpack.c.l.b16 %v305
        %v685 = vunpack.c.l.b16 %v319
        %v686 = vunpack.c.l.b16 %v329
        %v687 = vunpack.c.l.b16 %v343
        %v688 = vunpack.c.l.b16 %v353
        %v689 = vunpack.c.l.b16 %v367
        %v690 = vunpack.c.l.b16 %v377
        %v691 = vunpack.c.l.b16 %v391
        %v692 = vunpack.c.l.b16 %v401
        %v693 = vunpack.c.l.b16 %v415
        %v694 = vunpack.c.l.b16 %v425
        %v695 = vunpack.c.l.b16 %v439
        %v696 = vunpack.c.l.b16 %v449
        %v697 = vunpack.c.l.b16 %v463
        %v698 = vunpack.c.l.b16 %v473
        %v699 = vunpack.c.l.b16 %v487
        %v700 = vunpack.c.l.b16 %v497
        %v701 = vunpack.c.l.b16 %v511
        %v702 = vunpack.c.l.b16 %v521
        %v703 = vunpack.c.l.b16 %v535
        %v704 = vunpack.c.l.b16 %v545
        %v705 = vunpack.c.l.b16 %v559
        %v706 = vunpack.c.l.b16 %v569
        %v707 = vunpack.c.l.b16 %v583
        %v708 = vunpack.c.l.b16 %v593
        %v709 = vunpack.c.l.b16 %v607
        %v710 = vunpack.c.l.b16 %v617
        %v711 = vunpack.c.l.b16 %v631
        %v712 = vunpack.c.l.b16 %v641
        %v713 = vunpack.c.l.b16 %v655
        %v714 = vunpack.c.l.b16 %v665
        %v715 = vpack.c.b16 %v684, %v683
        %v716 = vpack.c.b16 %v686, %v685
        %v717 = vpack.c.b16 %v688, %v687
        %v718 = vpack.c.b16 %v690, %v689
        %v719 = vpack.c.b16 %v692, %v691
        %v720 = vpack.c.b16 %v694, %v693
        %v721 = vpack.c.b16 %v696, %v695
        %v722 = vpack.c.b16 %v698, %v697
        %v723 = vpack.c.b16 %v700, %v699
        %v724 = vpack.c.b16 %v702, %v701
        %v725 = vpack.c.b16 %v704, %v703
        %v726 = vpack.c.b16 %v706, %v705
        %v727 = vpack.c.b16 %v708, %v707
        %v728 = vpack.c.b16 %v710, %v709
        %v729 = vpack.c.b16 %v712, %v711
        %v730 = vpack.c.b16 %v714, %v713
        %v763 = vunpack.c.l.b16 %v667
        %v764 = vunpack.c.l.b16 %v668
        %v765 = vunpack.c.l.b16 %v669
        %v766 = vunpack.c.l.b16 %v670
        %v767 = vunpack.c.l.b16 %v671
        %v768 = vunpack.c.l.b16 %v672
        %v769 = vunpack.c.l.b16 %v673
        %v770 = vunpack.c.l.b16 %v674
        %v771 = vunpack.c.l.b16 %v675
        %v772 = vunpack.c.l.b16 %v676
        %v773 = vunpack.c.l.b16 %v677
        %v774 = vunpack.c.l.b16 %v678
        %v775 = vunpack.c.l.b16 %v679
        %v776 = vunpack.c.l.b16 %v680
        %v777 = vunpack.c.l.b16 %v681
        %v778 = vunpack.c.l.b16 %v682
        %v779 = vpack.c.b16 %v764, %v763
        %v780 = vpack.c.b16 %v766, %v765
        %v781 = vpack.c.b16 %v768, %v767
        %v782 = vpack.c.b16 %v770, %v769
        %v783 = vpack.c.b16 %v772, %v771
        %v784 = vpack.c.b16 %v774, %v773
        %v785 = vpack.c.b16 %v776, %v775
        %v786 = vpack.c.b16 %v778, %v777
        %795 = vmatprep.subr.bf16.mxu0 0
        %796 = vmatpush1.bf16.msra.mxu0 %v786
        %797 = vmatprep.subr.bf16.mxu0 0
        %798 = vmatpush1.bf16.msra.mxu0 %v785
        %799 = vmatprep.subr.bf16.mxu0 0
        %800 = vmatpush1.bf16.msra.mxu0 %v784
        %801 = vmatprep.subr.bf16.mxu0 0
        %802 = vmatpush1.bf16.msra.mxu0 %v783
        %803 = vmatprep.subr.bf16.mxu0 0
        %804 = vmatpush1.bf16.msra.mxu0 %v782
        %805 = vmatprep.subr.bf16.mxu0 0
        %806 = vmatpush1.bf16.msra.mxu0 %v781
        %807 = vmatprep.subr.bf16.mxu0 0
        %808 = vmatpush1.bf16.msra.mxu0 %v780
        %809 = vmatprep.subr.bf16.mxu0 0
        %810 = vmatpush1.bf16.msra.mxu0 %v779
        %811 = vmatprep.subr.bf16.mxu0 0
        %812 = vmatpush2.bf16.msra.mxu0 0
        %813 = vmatprep.subr.bf16.mxu0 0
        %814 = vmatpush2.bf16.msra.mxu0 0
        %815 = vmatprep.subr.bf16.mxu0 0
        %816 = vmatpush2.bf16.msra.mxu0 0
        %817 = vmatprep.subr.bf16.mxu0 0
        %818 = vmatpush2.bf16.msra.mxu0 0
        %819 = vmatprep.subr.bf16.mxu0 0
        %820 = vmatpush2.bf16.msra.mxu0 0
        %821 = vmatprep.subr.bf16.mxu0 0
        %822 = vmatpush2.bf16.msra.mxu0 0
        %823 = vmatprep.subr.bf16.mxu0 0
        %824 = vmatpush2.bf16.msra.mxu0 0
        %825 = vmatprep.subr.bf16.mxu0 0
        %826 = vmatpush2.bf16.msra.mxu0 0
        %827 = vmatprep.mubr.bf16.mxu0 0
        %828 = vmatmul.mubr.bf16.gmra.mxu0 %v715
        %v829 = vpop.f32.mrf.mxu0
        %v830 = vadd.f32 0.0, %v829
        %v831 = vpop.f32.mrf.mxu0
        %v832 = vpop.f32.mrf.mxu0
        %v833 = vadd.f32 0.0, %v832
        %v834 = vpop.f32.mrf.mxu0
        %835 = vmatprep.mubr.bf16.mxu0 0
        %836 = vmatmul.mubr.bf16.gmra.mxu0 %v716
        %v837 = vpop.f32.mrf.mxu0
        %v838 = vadd.f32 0.0, %v837
        %v839 = vpop.f32.mrf.mxu0
        %v840 = vpop.f32.mrf.mxu0
        %v841 = vadd.f32 0.0, %v840
        %v842 = vpop.f32.mrf.mxu0
        %843 = vmatprep.mubr.bf16.mxu0 0
        %844 = vmatmul.mubr.bf16.gmra.mxu0 %v717
        %v845 = vpop.f32.mrf.mxu0
        %v846 = vadd.f32 0.0, %v845
        %v847 = vpop.f32.mrf.mxu0
        %v848 = vpop.f32.mrf.mxu0
        %v849 = vadd.f32 0.0, %v848
        %v850 = vpop.f32.mrf.mxu0
        %851 = vmatprep.mubr.bf16.mxu0 0
        %852 = vmatmul.mubr.bf16.gmra.mxu0 %v718
        %v853 = vpop.f32.mrf.mxu0
        %v854 = vadd.f32 0.0, %v853
        %v855 = vpop.f32.mrf.mxu0
        %v856 = vpop.f32.mrf.mxu0
        %v857 = vadd.f32 0.0, %v856
        %v858 = vpop.f32.mrf.mxu0
        %859 = vmatprep.mubr.bf16.mxu0 0
        %860 = vmatmul.mubr.bf16.gmra.mxu0 %v719
        %v861 = vpop.f32.mrf.mxu0
        %v862 = vadd.f32 0.0, %v861
        %v863 = vpop.f32.mrf.mxu0
        %v864 = vpop.f32.mrf.mxu0
        %v865 = vadd.f32 0.0, %v864
        %v866 = vpop.f32.mrf.mxu0
        %867 = vmatprep.mubr.bf16.mxu0 0
        %868 = vmatmul.mubr.bf16.gmra.mxu0 %v720
        %v869 = vpop.f32.mrf.mxu0
        %v870 = vadd.f32 0.0, %v869
        %v871 = vpop.f32.mrf.mxu0
        %v872 = vpop.f32.mrf.mxu0
        %v873 = vadd.f32 0.0, %v872
        %v874 = vpop.f32.mrf.mxu0
        %875 = vmatprep.mubr.bf16.mxu0 0
        %876 = vmatmul.mubr.bf16.gmra.mxu0 %v721
        %v877 = vpop.f32.mrf.mxu0
        %v878 = vadd.f32 0.0, %v877
        %v879 = vpop.f32.mrf.mxu0
        %v880 = vpop.f32.mrf.mxu0
        %v881 = vadd.f32 0.0, %v880
        %v882 = vpop.f32.mrf.mxu0
        %883 = vmatprep.mubr.bf16.mxu0 0
        %884 = vmatmul.mubr.bf16.gmra.mxu0 %v722
        %v885 = vpop.f32.mrf.mxu0
        %v886 = vadd.f32 0.0, %v885
        %v887 = vpop.f32.mrf.mxu0
        %v888 = vpop.f32.mrf.mxu0
        %v889 = vadd.f32 0.0, %v888
        %v890 = vpop.f32.mrf.mxu0
        %891 = vmatprep.mubr.bf16.mxu0 0
        %892 = vmatmul.mubr.bf16.gmra.mxu0 %v723
        %v893 = vpop.f32.mrf.mxu0
        %v894 = vadd.f32 0.0, %v893
        %v895 = vpop.f32.mrf.mxu0
        %v896 = vpop.f32.mrf.mxu0
        %v897 = vadd.f32 0.0, %v896
        %v898 = vpop.f32.mrf.mxu0
        %899 = vmatprep.mubr.bf16.mxu0 0
        %900 = vmatmul.mubr.bf16.gmra.mxu0 %v724
        %v901 = vpop.f32.mrf.mxu0
        %v902 = vadd.f32 0.0, %v901
        %v903 = vpop.f32.mrf.mxu0
        %v904 = vpop.f32.mrf.mxu0
        %v905 = vadd.f32 0.0, %v904
        %v906 = vpop.f32.mrf.mxu0
        %907 = vmatprep.mubr.bf16.mxu0 0
        %908 = vmatmul.mubr.bf16.gmra.mxu0 %v725
        %v909 = vpop.f32.mrf.mxu0
        %v910 = vadd.f32 0.0, %v909
        %v911 = vpop.f32.mrf.mxu0
        %v912 = vpop.f32.mrf.mxu0
        %v913 = vadd.f32 0.0, %v912
        %v914 = vpop.f32.mrf.mxu0
        %915 = vmatprep.mubr.bf16.mxu0 0
        %916 = vmatmul.mubr.bf16.gmra.mxu0 %v726
        %v917 = vpop.f32.mrf.mxu0
        %v918 = vadd.f32 0.0, %v917
        %v919 = vpop.f32.mrf.mxu0
        %v920 = vpop.f32.mrf.mxu0
        %v921 = vadd.f32 0.0, %v920
        %v922 = vpop.f32.mrf.mxu0
        %923 = vmatprep.mubr.bf16.mxu0 0
        %924 = vmatmul.mubr.bf16.gmra.mxu0 %v727
        %v925 = vpop.f32.mrf.mxu0
        %v926 = vadd.f32 0.0, %v925
        %v927 = vpop.f32.mrf.mxu0
        %v928 = vpop.f32.mrf.mxu0
        %v929 = vadd.f32 0.0, %v928
        %v930 = vpop.f32.mrf.mxu0
        %931 = vmatprep.mubr.bf16.mxu0 0
        %932 = vmatmul.mubr.bf16.gmra.mxu0 %v728
        %v933 = vpop.f32.mrf.mxu0
        %v934 = vadd.f32 0.0, %v933
        %v935 = vpop.f32.mrf.mxu0
        %v936 = vpop.f32.mrf.mxu0
        %v937 = vadd.f32 0.0, %v936
        %v938 = vpop.f32.mrf.mxu0
        %939 = vmatprep.mubr.bf16.mxu0 0
        %940 = vmatmul.mubr.bf16.gmra.mxu0 %v729
        %v941 = vpop.f32.mrf.mxu0
        %v942 = vadd.f32 0.0, %v941
        %v943 = vpop.f32.mrf.mxu0
        %v944 = vpop.f32.mrf.mxu0
        %v945 = vadd.f32 0.0, %v944
        %v946 = vpop.f32.mrf.mxu0
        %947 = vmatprep.mubr.bf16.mxu0 0
        %948 = vmatmul.mubr.bf16.gmra.mxu0 %v730
        %v949 = vpop.f32.mrf.mxu0
        %v950 = vadd.f32 0.0, %v949
        %v951 = vpop.f32.mrf.mxu0
        %v952 = vpop.f32.mrf.mxu0
        %v953 = vadd.f32 0.0, %v952
        %v954 = vpop.f32.mrf.mxu0
        %955 = vdwg.mxu0
        %v988 = vunpack.c.l.b16 %v215
        %v989 = vunpack.c.l.b16 %v216
        %v990 = vunpack.c.l.b16 %v217
        %v991 = vunpack.c.l.b16 %v218
        %v992 = vunpack.c.l.b16 %v219
        %v993 = vunpack.c.l.b16 %v220
        %v994 = vunpack.c.l.b16 %v221
        %v995 = vunpack.c.l.b16 %v222
        %v996 = vunpack.c.l.b16 %v223
        %v997 = vunpack.c.l.b16 %v224
        %v998 = vunpack.c.l.b16 %v225
        %v999 = vunpack.c.l.b16 %v226
        %v1000 = vunpack.c.l.b16 %v227
        %v1001 = vunpack.c.l.b16 %v228
        %v1002 = vunpack.c.l.b16 %v229
        %v1003 = vunpack.c.l.b16 %v230
        %v1004 = vunpack.c.l.b16 %v231
        %v1005 = vunpack.c.l.b16 %v232
        %v1006 = vunpack.c.l.b16 %v233
        %v1007 = vunpack.c.l.b16 %v234
        %v1008 = vunpack.c.l.b16 %v235
        %v1009 = vunpack.c.l.b16 %v236
        %v1010 = vunpack.c.l.b16 %v237
        %v1011 = vunpack.c.l.b16 %v238
        %v1012 = vunpack.c.l.b16 %v239
        %v1013 = vunpack.c.l.b16 %v240
        %v1014 = vunpack.c.l.b16 %v241
        %v1015 = vunpack.c.l.b16 %v242
        %v1016 = vunpack.c.l.b16 %v243
        %v1017 = vunpack.c.l.b16 %v244
        %v1018 = vunpack.c.l.b16 %v245
        %v1019 = vunpack.c.l.b16 %v246
        %v1020 = vpack.c.b16 %v989, %v988
        %v1021 = vpack.c.b16 %v991, %v990
        %v1022 = vpack.c.b16 %v993, %v992
        %v1023 = vpack.c.b16 %v995, %v994
        %v1024 = vpack.c.b16 %v997, %v996
        %v1025 = vpack.c.b16 %v999, %v998
        %v1026 = vpack.c.b16 %v1001, %v1000
        %v1027 = vpack.c.b16 %v1003, %v1002
        %v1028 = vpack.c.b16 %v1005, %v1004
        %v1029 = vpack.c.b16 %v1007, %v1006
        %v1030 = vpack.c.b16 %v1009, %v1008
        %v1031 = vpack.c.b16 %v1011, %v1010
        %v1032 = vpack.c.b16 %v1013, %v1012
        %v1033 = vpack.c.b16 %v1015, %v1014
        %v1034 = vpack.c.b16 %v1017, %v1016
        %v1035 = vpack.c.b16 %v1019, %v1018
        %v1068 = vunpack.c.l.b16 %v247
        %v1069 = vunpack.c.l.b16 %v248
        %v1070 = vunpack.c.l.b16 %v249
        %v1071 = vunpack.c.l.b16 %v250
        %v1072 = vunpack.c.l.b16 %v251
        %v1073 = vunpack.c.l.b16 %v252
        %v1074 = vunpack.c.l.b16 %v253
        %v1075 = vunpack.c.l.b16 %v254
        %v1076 = vunpack.c.l.b16 %v255
        %v1077 = vunpack.c.l.b16 %v256
        %v1078 = vunpack.c.l.b16 %v257
        %v1079 = vunpack.c.l.b16 %v258
        %v1080 = vunpack.c.l.b16 %v259
        %v1081 = vunpack.c.l.b16 %v260
        %v1082 = vunpack.c.l.b16 %v261
        %v1083 = vunpack.c.l.b16 %v262
        %v1084 = vpack.c.b16 %v1069, %v1068
        %v1085 = vpack.c.b16 %v1071, %v1070
        %v1086 = vpack.c.b16 %v1073, %v1072
        %v1087 = vpack.c.b16 %v1075, %v1074
        %v1088 = vpack.c.b16 %v1077, %v1076
        %v1089 = vpack.c.b16 %v1079, %v1078
        %v1090 = vpack.c.b16 %v1081, %v1080
        %v1091 = vpack.c.b16 %v1083, %v1082
        %1100 = vmatprep.subr.bf16.mxu0 0
        %1101 = vmatpush1.bf16.msra.mxu0 %v1091
        %1102 = vmatprep.subr.bf16.mxu0 0
        %1103 = vmatpush1.bf16.msra.mxu0 %v1090
        %1104 = vmatprep.subr.bf16.mxu0 0
        %1105 = vmatpush1.bf16.msra.mxu0 %v1089
        %1106 = vmatprep.subr.bf16.mxu0 0
        %1107 = vmatpush1.bf16.msra.mxu0 %v1088
        %1108 = vmatprep.subr.bf16.mxu0 0
        %1109 = vmatpush1.bf16.msra.mxu0 %v1087
        %1110 = vmatprep.subr.bf16.mxu0 0
        %1111 = vmatpush1.bf16.msra.mxu0 %v1086
        %1112 = vmatprep.subr.bf16.mxu0 0
        %1113 = vmatpush1.bf16.msra.mxu0 %v1085
        %1114 = vmatprep.subr.bf16.mxu0 0
        %1115 = vmatpush1.bf16.msra.mxu0 %v1084
        %1116 = vmatprep.subr.bf16.mxu0 0
        %1117 = vmatpush2.bf16.msra.mxu0 0
        %1118 = vmatprep.subr.bf16.mxu0 0
        %1119 = vmatpush2.bf16.msra.mxu0 0
        %1120 = vmatprep.subr.bf16.mxu0 0
        %1121 = vmatpush2.bf16.msra.mxu0 0
        %1122 = vmatprep.subr.bf16.mxu0 0
        %1123 = vmatpush2.bf16.msra.mxu0 0
        %1124 = vmatprep.subr.bf16.mxu0 0
        %1125 = vmatpush2.bf16.msra.mxu0 0
        %1126 = vmatprep.subr.bf16.mxu0 0
        %1127 = vmatpush2.bf16.msra.mxu0 0
        %1128 = vmatprep.subr.bf16.mxu0 0
        %1129 = vmatpush2.bf16.msra.mxu0 0
        %1130 = vmatprep.subr.bf16.mxu0 0
        %1131 = vmatpush2.bf16.msra.mxu0 0
        %1132 = vmatprep.mubr.bf16.mxu0 0
        %1133 = vmatmul.mubr.bf16.gmra.mxu0 %v1020
        %v1134 = vpop.f32.mrf.mxu0
        %v1135 = vadd.f32 %v830, %v1134
        %v1136 = vpop.f32.mrf.mxu0
        %v1137 = vpop.f32.mrf.mxu0
        %v1138 = vadd.f32 %v833, %v1137
        %v1139 = vpop.f32.mrf.mxu0
        %1140 = vmatprep.mubr.bf16.mxu0 0
        %1141 = vmatmul.mubr.bf16.gmra.mxu0 %v1021
        %v1142 = vpop.f32.mrf.mxu0
        %v1143 = vadd.f32 %v838, %v1142
        %v1144 = vpop.f32.mrf.mxu0
        %v1145 = vpop.f32.mrf.mxu0
        %v1146 = vadd.f32 %v841, %v1145
        %v1147 = vpop.f32.mrf.mxu0
        %1148 = vmatprep.mubr.bf16.mxu0 0
        %1149 = vmatmul.mubr.bf16.gmra.mxu0 %v1022
        %v1150 = vpop.f32.mrf.mxu0
        %v1151 = vadd.f32 %v846, %v1150
        %v1152 = vpop.f32.mrf.mxu0
        %v1153 = vpop.f32.mrf.mxu0
        %v1154 = vadd.f32 %v849, %v1153
        %v1155 = vpop.f32.mrf.mxu0
        %1156 = vmatprep.mubr.bf16.mxu0 0
        %1157 = vmatmul.mubr.bf16.gmra.mxu0 %v1023
        %v1158 = vpop.f32.mrf.mxu0
        %v1159 = vadd.f32 %v854, %v1158
        %v1160 = vpop.f32.mrf.mxu0
        %v1161 = vpop.f32.mrf.mxu0
        %v1162 = vadd.f32 %v857, %v1161
        %v1163 = vpop.f32.mrf.mxu0
        %1164 = vmatprep.mubr.bf16.mxu0 0
        %1165 = vmatmul.mubr.bf16.gmra.mxu0 %v1024
        %v1166 = vpop.f32.mrf.mxu0
        %v1167 = vadd.f32 %v862, %v1166
        %v1168 = vpop.f32.mrf.mxu0
        %v1169 = vpop.f32.mrf.mxu0
        %v1170 = vadd.f32 %v865, %v1169
        %v1171 = vpop.f32.mrf.mxu0
        %1172 = vmatprep.mubr.bf16.mxu0 0
        %1173 = vmatmul.mubr.bf16.gmra.mxu0 %v1025
        %v1174 = vpop.f32.mrf.mxu0
        %v1175 = vadd.f32 %v870, %v1174
        %v1176 = vpop.f32.mrf.mxu0
        %v1177 = vpop.f32.mrf.mxu0
        %v1178 = vadd.f32 %v873, %v1177
        %v1179 = vpop.f32.mrf.mxu0
        %1180 = vmatprep.mubr.bf16.mxu0 0
        %1181 = vmatmul.mubr.bf16.gmra.mxu0 %v1026
        %v1182 = vpop.f32.mrf.mxu0
        %v1183 = vadd.f32 %v878, %v1182
        %v1184 = vpop.f32.mrf.mxu0
        %v1185 = vpop.f32.mrf.mxu0
        %v1186 = vadd.f32 %v881, %v1185
        %v1187 = vpop.f32.mrf.mxu0
        %1188 = vmatprep.mubr.bf16.mxu0 0
        %1189 = vmatmul.mubr.bf16.gmra.mxu0 %v1027
        %v1190 = vpop.f32.mrf.mxu0
        %v1191 = vadd.f32 %v886, %v1190
        %v1192 = vpop.f32.mrf.mxu0
        %v1193 = vpop.f32.mrf.mxu0
        %v1194 = vadd.f32 %v889, %v1193
        %v1195 = vpop.f32.mrf.mxu0
        %1196 = vmatprep.mubr.bf16.mxu0 0
        %1197 = vmatmul.mubr.bf16.gmra.mxu0 %v1028
        %v1198 = vpop.f32.mrf.mxu0
        %v1199 = vadd.f32 %v894, %v1198
        %v1200 = vpop.f32.mrf.mxu0
        %v1201 = vpop.f32.mrf.mxu0
        %v1202 = vadd.f32 %v897, %v1201
        %v1203 = vpop.f32.mrf.mxu0
        %1204 = vmatprep.mubr.bf16.mxu0 0
        %1205 = vmatmul.mubr.bf16.gmra.mxu0 %v1029
        %v1206 = vpop.f32.mrf.mxu0
        %v1207 = vadd.f32 %v902, %v1206
        %v1208 = vpop.f32.mrf.mxu0
        %v1209 = vpop.f32.mrf.mxu0
        %v1210 = vadd.f32 %v905, %v1209
        %v1211 = vpop.f32.mrf.mxu0
        %1212 = vmatprep.mubr.bf16.mxu0 0
        %1213 = vmatmul.mubr.bf16.gmra.mxu0 %v1030
        %v1214 = vpop.f32.mrf.mxu0
        %v1215 = vadd.f32 %v910, %v1214
        %v1216 = vpop.f32.mrf.mxu0
        %v1217 = vpop.f32.mrf.mxu0
        %v1218 = vadd.f32 %v913, %v1217
        %v1219 = vpop.f32.mrf.mxu0
        %1220 = vmatprep.mubr.bf16.mxu0 0
        %1221 = vmatmul.mubr.bf16.gmra.mxu0 %v1031
        %v1222 = vpop.f32.mrf.mxu0
        %v1223 = vadd.f32 %v918, %v1222
        %v1224 = vpop.f32.mrf.mxu0
        %v1225 = vpop.f32.mrf.mxu0
        %v1226 = vadd.f32 %v921, %v1225
        %v1227 = vpop.f32.mrf.mxu0
        %1228 = vmatprep.mubr.bf16.mxu0 0
        %1229 = vmatmul.mubr.bf16.gmra.mxu0 %v1032
        %v1230 = vpop.f32.mrf.mxu0
        %v1231 = vadd.f32 %v926, %v1230
        %v1232 = vpop.f32.mrf.mxu0
        %v1233 = vpop.f32.mrf.mxu0
        %v1234 = vadd.f32 %v929, %v1233
        %v1235 = vpop.f32.mrf.mxu0
        %1236 = vmatprep.mubr.bf16.mxu0 0
        %1237 = vmatmul.mubr.bf16.gmra.mxu0 %v1033
        %v1238 = vpop.f32.mrf.mxu0
        %v1239 = vadd.f32 %v934, %v1238
        %v1240 = vpop.f32.mrf.mxu0
        %v1241 = vpop.f32.mrf.mxu0
        %v1242 = vadd.f32 %v937, %v1241
        %v1243 = vpop.f32.mrf.mxu0
        %1244 = vmatprep.mubr.bf16.mxu0 0
        %1245 = vmatmul.mubr.bf16.gmra.mxu0 %v1034
        %v1246 = vpop.f32.mrf.mxu0
        %v1247 = vadd.f32 %v942, %v1246
        %v1248 = vpop.f32.mrf.mxu0
        %v1249 = vpop.f32.mrf.mxu0
        %v1250 = vadd.f32 %v945, %v1249
        %v1251 = vpop.f32.mrf.mxu0
        %1252 = vmatprep.mubr.bf16.mxu0 0
        %1253 = vmatmul.mubr.bf16.gmra.mxu0 %v1035
        %v1254 = vpop.f32.mrf.mxu0
        %v1255 = vadd.f32 %v950, %v1254
        %v1256 = vpop.f32.mrf.mxu0
        %v1257 = vpop.f32.mrf.mxu0
        %v1258 = vadd.f32 %v953, %v1257
        %v1259 = vpop.f32.mrf.mxu0
        %1260 = vdwg.mxu0
        %v1261 = vld [vmem:[%s206] sm:$0xe]
        %v1262 = vld [vmem:[%s206 + $0xc] sm:$0xe]
        %v1263 = vld [vmem:[%s206 + $0x18] sm:$0xe]
        %v1264 = vld [vmem:[%s206 + $0x24] sm:$0xe]
        %v1265 = vld [vmem:[%s206 + $0x30] sm:$0xe]
        %v1266 = vld [vmem:[%s206 + $0x3c] sm:$0xe]
        %v1267 = vld [vmem:[%s206 + $0x48] sm:$0xe]
        %v1268 = vld [vmem:[%s206 + $0x54] sm:$0xe]
        %v1269 = vld [vmem:[%s206 + $0x60] sm:$0xe]
        %v1270 = vld [vmem:[%s206 + $0x6c] sm:$0xe]
        %v1271 = vld [vmem:[%s206 + $0x78] sm:$0xe]
        %v1272 = vld [vmem:[%s206 + $0x84] sm:$0xe]
        %v1273 = vld [vmem:[%s206 + $0x90] sm:$0xe]
        %v1274 = vld [vmem:[%s206 + $0x9c] sm:$0xe]
        %v1275 = vld [vmem:[%s206 + $0xa8] sm:$0xe]
        %v1276 = vld [vmem:[%s206 + $0xb4] sm:$0xe]
        %vm1309 = vcmask 1042432
        %vm1310 = vcmask 1046532
        %vm1311 = vmor %vm1309, %vm1310
        %v1312 = vrot.slane %v1261, 5
        %v1313 = vrot.slane %v1312, 4
        %v1314 = vrot.slane %v216, 5
        %v1315 = vsel %vm1311, %v1313, %v1314
        %v1316 = vrot.slane %v1314, 4
        %v1317 = vrot.slane %v263, 5
        %v1318 = vsel %vm1311, %v1316, %v1317
        %v1319 = vrot.slane %v1262, 5
        %v1320 = vrot.slane %v1319, 4
        %v1321 = vrot.slane %v218, 5
        %v1322 = vsel %vm1311, %v1320, %v1321
        %v1323 = vrot.slane %v1321, 4
        %v1324 = vrot.slane %v264, 5
        %v1325 = vsel %vm1311, %v1323, %v1324
        %v1326 = vrot.slane %v1263, 5
        %v1327 = vrot.slane %v1326, 4
        %v1328 = vrot.slane %v220, 5
        %v1329 = vsel %vm1311, %v1327, %v1328
        %v1330 = vrot.slane %v1328, 4
        %v1331 = vrot.slane %v265, 5
        %v1332 = vsel %vm1311, %v1330, %v1331
        %v1333 = vrot.slane %v1264, 5
        %v1334 = vrot.slane %v1333, 4
        %v1335 = vrot.slane %v222, 5
        %v1336 = vsel %vm1311, %v1334, %v1335
        %v1337 = vrot.slane %v1335, 4
        %v1338 = vrot.slane %v266, 5
        %v1339 = vsel %vm1311, %v1337, %v1338
        %v1340 = vrot.slane %v1265, 5
        %v1341 = vrot.slane %v1340, 4
        %v1342 = vrot.slane %v224, 5
        %v1343 = vsel %vm1311, %v1341, %v1342
        %v1344 = vrot.slane %v1342, 4
        %v1345 = vrot.slane %v267, 5
        %v1346 = vsel %vm1311, %v1344, %v1345
        %v1347 = vrot.slane %v1266, 5
        %v1348 = vrot.slane %v1347, 4
        %v1349 = vrot.slane %v226, 5
        %v1350 = vsel %vm1311, %v1348, %v1349
        %v1351 = vrot.slane %v1349, 4
        %v1352 = vrot.slane %v268, 5
        %v1353 = vsel %vm1311, %v1351, %v1352
        %v1354 = vrot.slane %v1267, 5
        %v1355 = vrot.slane %v1354, 4
        %v1356 = vrot.slane %v228, 5
        %v1357 = vsel %vm1311, %v1355, %v1356
        %v1358 = vrot.slane %v1356, 4
        %v1359 = vrot.slane %v269, 5
        %v1360 = vsel %vm1311, %v1358, %v1359
        %v1361 = vrot.slane %v1268, 5
        %v1362 = vrot.slane %v1361, 4
        %v1363 = vrot.slane %v230, 5
        %v1364 = vsel %vm1311, %v1362, %v1363
        %v1365 = vrot.slane %v1363, 4
        %v1366 = vrot.slane %v270, 5
        %v1367 = vsel %vm1311, %v1365, %v1366
        %v1368 = vrot.slane %v1269, 5
        %v1369 = vrot.slane %v1368, 4
        %v1370 = vrot.slane %v232, 5
        %v1371 = vsel %vm1311, %v1369, %v1370
        %v1372 = vrot.slane %v1370, 4
        %v1373 = vrot.slane %v271, 5
        %v1374 = vsel %vm1311, %v1372, %v1373
        %v1375 = vrot.slane %v1270, 5
        %v1376 = vrot.slane %v1375, 4
        %v1377 = vrot.slane %v234, 5
        %v1378 = vsel %vm1311, %v1376, %v1377
        %v1379 = vrot.slane %v1377, 4
        %v1380 = vrot.slane %v272, 5
        %v1381 = vsel %vm1311, %v1379, %v1380
        %v1382 = vrot.slane %v1271, 5
        %v1383 = vrot.slane %v1382, 4
        %v1384 = vrot.slane %v236, 5
        %v1385 = vsel %vm1311, %v1383, %v1384
        %v1386 = vrot.slane %v1384, 4
        %v1387 = vrot.slane %v273, 5
        %v1388 = vsel %vm1311, %v1386, %v1387
        %v1389 = vrot.slane %v1272, 5
        %v1390 = vrot.slane %v1389, 4
        %v1391 = vrot.slane %v238, 5
        %v1392 = vsel %vm1311, %v1390, %v1391
        %v1393 = vrot.slane %v1391, 4
        %v1394 = vrot.slane %v274, 5
        %v1395 = vsel %vm1311, %v1393, %v1394
        %v1396 = vrot.slane %v1273, 5
        %v1397 = vrot.slane %v1396, 4
        %v1398 = vrot.slane %v240, 5
        %v1399 = vsel %vm1311, %v1397, %v1398
        %v1400 = vrot.slane %v1398, 4
        %v1401 = vrot.slane %v275, 5
        %v1402 = vsel %vm1311, %v1400, %v1401
        %v1403 = vrot.slane %v1274, 5
        %v1404 = vrot.slane %v1403, 4
        %v1405 = vrot.slane %v242, 5
        %v1406 = vsel %vm1311, %v1404, %v1405
        %v1407 = vrot.slane %v1405, 4
        %v1408 = vrot.slane %v276, 5
        %v1409 = vsel %vm1311, %v1407, %v1408
        %v1410 = vrot.slane %v1275, 5
        %v1411 = vrot.slane %v1410, 4
        %v1412 = vrot.slane %v244, 5
        %v1413 = vsel %vm1311, %v1411, %v1412
        %v1414 = vrot.slane %v1412, 4
        %v1415 = vrot.slane %v277, 5
        %v1416 = vsel %vm1311, %v1414, %v1415
        %v1417 = vrot.slane %v1276, 5
        %v1418 = vrot.slane %v1417, 4
        %v1419 = vrot.slane %v246, 5
        %v1420 = vsel %vm1311, %v1418, %v1419
        %v1421 = vrot.slane %v1419, 4
        %v1422 = vrot.slane %v278, 5
        %v1423 = vsel %vm1311, %v1421, %v1422
        %s1424 = scalar_lea.vmem %s210, 128
        %v1425 = vld [vmem:[%s1424] sm:$0xf]
        %v1426 = vld [vmem:[%s1424 + $0x4] sm:$0xf]
        %v1427 = vld [vmem:[%s1424 + $0x8] sm:$0xf]
        %v1428 = vld [vmem:[%s1424 + $0xc] sm:$0xf]
        %v1429 = vld [vmem:[%s1424 + $0x10] sm:$0xf]
        %v1430 = vld [vmem:[%s1424 + $0x14] sm:$0xf]
        %v1431 = vld [vmem:[%s1424 + $0x18] sm:$0xf]
        %v1432 = vld [vmem:[%s1424 + $0x1c] sm:$0xf]
        %v1433 = vld [vmem:[%s1424 + $0x20] sm:$0xf]
        %v1434 = vld [vmem:[%s1424 + $0x24] sm:$0xf]
        %v1435 = vld [vmem:[%s1424 + $0x28] sm:$0xf]
        %v1436 = vld [vmem:[%s1424 + $0x2c] sm:$0xf]
        %v1437 = vld [vmem:[%s1424 + $0x30] sm:$0xf]
        %v1438 = vld [vmem:[%s1424 + $0x34] sm:$0xf]
        %v1439 = vld [vmem:[%s1424 + $0x38] sm:$0xf]
        %v1440 = vld [vmem:[%s1424 + $0x3c] sm:$0xf]
        %v1441 = vunpack.c.l.b16 %v1315
        %v1442 = vunpack.c.l.b16 %v1318
        %v1443 = vunpack.c.l.b16 %v1322
        %v1444 = vunpack.c.l.b16 %v1325
        %v1445 = vunpack.c.l.b16 %v1329
        %v1446 = vunpack.c.l.b16 %v1332
        %v1447 = vunpack.c.l.b16 %v1336
        %v1448 = vunpack.c.l.b16 %v1339
        %v1449 = vunpack.c.l.b16 %v1343
        %v1450 = vunpack.c.l.b16 %v1346
        %v1451 = vunpack.c.l.b16 %v1350
        %v1452 = vunpack.c.l.b16 %v1353
        %v1453 = vunpack.c.l.b16 %v1357
        %v1454 = vunpack.c.l.b16 %v1360
        %v1455 = vunpack.c.l.b16 %v1364
        %v1456 = vunpack.c.l.b16 %v1367
        %v1457 = vunpack.c.l.b16 %v1371
        %v1458 = vunpack.c.l.b16 %v1374
        %v1459 = vunpack.c.l.b16 %v1378
        %v1460 = vunpack.c.l.b16 %v1381
        %v1461 = vunpack.c.l.b16 %v1385
        %v1462 = vunpack.c.l.b16 %v1388
        %v1463 = vunpack.c.l.b16 %v1392
        %v1464 = vunpack.c.l.b16 %v1395
        %v1465 = vunpack.c.l.b16 %v1399
        %v1466 = vunpack.c.l.b16 %v1402
        %v1467 = vunpack.c.l.b16 %v1406
        %v1468 = vunpack.c.l.b16 %v1409
        %v1469 = vunpack.c.l.b16 %v1413
        %v1470 = vunpack.c.l.b16 %v1416
        %v1471 = vunpack.c.l.b16 %v1420
        %v1472 = vunpack.c.l.b16 %v1423
        %v1473 = vpack.c.b16 %v1442, %v1441
        %v1474 = vpack.c.b16 %v1444, %v1443
        %v1475 = vpack.c.b16 %v1446, %v1445
        %v1476 = vpack.c.b16 %v1448, %v1447
        %v1477 = vpack.c.b16 %v1450, %v1449
        %v1478 = vpack.c.b16 %v1452, %v1451
        %v1479 = vpack.c.b16 %v1454, %v1453
        %v1480 = vpack.c.b16 %v1456, %v1455
        %v1481 = vpack.c.b16 %v1458, %v1457
        %v1482 = vpack.c.b16 %v1460, %v1459
        %v1483 = vpack.c.b16 %v1462, %v1461
        %v1484 = vpack.c.b16 %v1464, %v1463
        %v1485 = vpack.c.b16 %v1466, %v1465
        %v1486 = vpack.c.b16 %v1468, %v1467
        %v1487 = vpack.c.b16 %v1470, %v1469
        %v1488 = vpack.c.b16 %v1472, %v1471
        %v1521 = vunpack.c.l.b16 %v1425
        %v1522 = vunpack.c.l.b16 %v1426
        %v1523 = vunpack.c.l.b16 %v1427
        %v1524 = vunpack.c.l.b16 %v1428
        %v1525 = vunpack.c.l.b16 %v1429
        %v1526 = vunpack.c.l.b16 %v1430
        %v1527 = vunpack.c.l.b16 %v1431
        %v1528 = vunpack.c.l.b16 %v1432
        %v1529 = vunpack.c.l.b16 %v1433
        %v1530 = vunpack.c.l.b16 %v1434
        %v1531 = vunpack.c.l.b16 %v1435
        %v1532 = vunpack.c.l.b16 %v1436
        %v1533 = vunpack.c.l.b16 %v1437
        %v1534 = vunpack.c.l.b16 %v1438
        %v1535 = vunpack.c.l.b16 %v1439
        %v1536 = vunpack.c.l.b16 %v1440
        %v1537 = vpack.c.b16 %v1522, %v1521
        %v1538 = vpack.c.b16 %v1524, %v1523
        %v1539 = vpack.c.b16 %v1526, %v1525
        %v1540 = vpack.c.b16 %v1528, %v1527
        %v1541 = vpack.c.b16 %v1530, %v1529
        %v1542 = vpack.c.b16 %v1532, %v1531
        %v1543 = vpack.c.b16 %v1534, %v1533
        %v1544 = vpack.c.b16 %v1536, %v1535
        %1553 = vmatprep.subr.bf16.mxu0 0
        %1554 = vmatpush1.bf16.msra.mxu0 %v1544
        %1555 = vmatprep.subr.bf16.mxu0 0
        %1556 = vmatpush1.bf16.msra.mxu0 %v1543
        %1557 = vmatprep.subr.bf16.mxu0 0
        %1558 = vmatpush1.bf16.msra.mxu0 %v1542
        %1559 = vmatprep.subr.bf16.mxu0 0
        %1560 = vmatpush1.bf16.msra.mxu0 %v1541
        %1561 = vmatprep.subr.bf16.mxu0 0
        %1562 = vmatpush1.bf16.msra.mxu0 %v1540
        %1563 = vmatprep.subr.bf16.mxu0 0
        %1564 = vmatpush1.bf16.msra.mxu0 %v1539
        %1565 = vmatprep.subr.bf16.mxu0 0
        %1566 = vmatpush1.bf16.msra.mxu0 %v1538
        %1567 = vmatprep.subr.bf16.mxu0 0
        %1568 = vmatpush1.bf16.msra.mxu0 %v1537
        %1569 = vmatprep.subr.bf16.mxu0 0
        %1570 = vmatpush2.bf16.msra.mxu0 0
        %1571 = vmatprep.subr.bf16.mxu0 0
        %1572 = vmatpush2.bf16.msra.mxu0 0
        %1573 = vmatprep.subr.bf16.mxu0 0
        %1574 = vmatpush2.bf16.msra.mxu0 0
        %1575 = vmatprep.subr.bf16.mxu0 0
        %1576 = vmatpush2.bf16.msra.mxu0 0
        %1577 = vmatprep.subr.bf16.mxu0 0
        %1578 = vmatpush2.bf16.msra.mxu0 0
        %1579 = vmatprep.subr.bf16.mxu0 0
        %1580 = vmatpush2.bf16.msra.mxu0 0
        %1581 = vmatprep.subr.bf16.mxu0 0
        %1582 = vmatpush2.bf16.msra.mxu0 0
        %1583 = vmatprep.subr.bf16.mxu0 0
        %1584 = vmatpush2.bf16.msra.mxu0 0
        %1585 = vmatprep.mubr.bf16.mxu0 0
        %1586 = vmatmul.mubr.bf16.gmra.mxu0 %v1473
        %v1587 = vpop.f32.mrf.mxu0
        %v1588 = vadd.f32 0.0, %v1587
        %v1589 = vpop.f32.mrf.mxu0
        %v1590 = vpop.f32.mrf.mxu0
        %v1591 = vadd.f32 0.0, %v1590
        %v1592 = vpop.f32.mrf.mxu0
        %1593 = vmatprep.mubr.bf16.mxu0 0
        %1594 = vmatmul.mubr.bf16.gmra.mxu0 %v1474
        %v1595 = vpop.f32.mrf.mxu0
        %v1596 = vadd.f32 0.0, %v1595
        %v1597 = vpop.f32.mrf.mxu0
        %v1598 = vpop.f32.mrf.mxu0
        %v1599 = vadd.f32 0.0, %v1598
        %v1600 = vpop.f32.mrf.mxu0
        %1601 = vmatprep.mubr.bf16.mxu0 0
        %1602 = vmatmul.mubr.bf16.gmra.mxu0 %v1475
        %v1603 = vpop.f32.mrf.mxu0
        %v1604 = vadd.f32 0.0, %v1603
        %v1605 = vpop.f32.mrf.mxu0
        %v1606 = vpop.f32.mrf.mxu0
        %v1607 = vadd.f32 0.0, %v1606
        %v1608 = vpop.f32.mrf.mxu0
        %1609 = vmatprep.mubr.bf16.mxu0 0
        %1610 = vmatmul.mubr.bf16.gmra.mxu0 %v1476
        %v1611 = vpop.f32.mrf.mxu0
        %v1612 = vadd.f32 0.0, %v1611
        %v1613 = vpop.f32.mrf.mxu0
        %v1614 = vpop.f32.mrf.mxu0
        %v1615 = vadd.f32 0.0, %v1614
        %v1616 = vpop.f32.mrf.mxu0
        %1617 = vmatprep.mubr.bf16.mxu0 0
        %1618 = vmatmul.mubr.bf16.gmra.mxu0 %v1477
        %v1619 = vpop.f32.mrf.mxu0
        %v1620 = vadd.f32 0.0, %v1619
        %v1621 = vpop.f32.mrf.mxu0
        %v1622 = vpop.f32.mrf.mxu0
        %v1623 = vadd.f32 0.0, %v1622
        %v1624 = vpop.f32.mrf.mxu0
        %1625 = vmatprep.mubr.bf16.mxu0 0
        %1626 = vmatmul.mubr.bf16.gmra.mxu0 %v1478
        %v1627 = vpop.f32.mrf.mxu0
        %v1628 = vadd.f32 0.0, %v1627
        %v1629 = vpop.f32.mrf.mxu0
        %v1630 = vpop.f32.mrf.mxu0
        %v1631 = vadd.f32 0.0, %v1630
        %v1632 = vpop.f32.mrf.mxu0
        %1633 = vmatprep.mubr.bf16.mxu0 0
        %1634 = vmatmul.mubr.bf16.gmra.mxu0 %v1479
        %v1635 = vpop.f32.mrf.mxu0
        %v1636 = vadd.f32 0.0, %v1635
        %v1637 = vpop.f32.mrf.mxu0
        %v1638 = vpop.f32.mrf.mxu0
        %v1639 = vadd.f32 0.0, %v1638
        %v1640 = vpop.f32.mrf.mxu0
        %1641 = vmatprep.mubr.bf16.mxu0 0
        %1642 = vmatmul.mubr.bf16.gmra.mxu0 %v1480
        %v1643 = vpop.f32.mrf.mxu0
        %v1644 = vadd.f32 0.0, %v1643
        %v1645 = vpop.f32.mrf.mxu0
        %v1646 = vpop.f32.mrf.mxu0
        %v1647 = vadd.f32 0.0, %v1646
        %v1648 = vpop.f32.mrf.mxu0
        %1649 = vmatprep.mubr.bf16.mxu0 0
        %1650 = vmatmul.mubr.bf16.gmra.mxu0 %v1481
        %v1651 = vpop.f32.mrf.mxu0
        %v1652 = vadd.f32 0.0, %v1651
        %v1653 = vpop.f32.mrf.mxu0
        %v1654 = vpop.f32.mrf.mxu0
        %v1655 = vadd.f32 0.0, %v1654
        %v1656 = vpop.f32.mrf.mxu0
        %1657 = vmatprep.mubr.bf16.mxu0 0
        %1658 = vmatmul.mubr.bf16.gmra.mxu0 %v1482
        %v1659 = vpop.f32.mrf.mxu0
        %v1660 = vadd.f32 0.0, %v1659
        %v1661 = vpop.f32.mrf.mxu0
        %v1662 = vpop.f32.mrf.mxu0
        %v1663 = vadd.f32 0.0, %v1662
        %v1664 = vpop.f32.mrf.mxu0
        %1665 = vmatprep.mubr.bf16.mxu0 0
        %1666 = vmatmul.mubr.bf16.gmra.mxu0 %v1483
        %v1667 = vpop.f32.mrf.mxu0
        %v1668 = vadd.f32 0.0, %v1667
        %v1669 = vpop.f32.mrf.mxu0
        %v1670 = vpop.f32.mrf.mxu0
        %v1671 = vadd.f32 0.0, %v1670
        %v1672 = vpop.f32.mrf.mxu0
        %1673 = vmatprep.mubr.bf16.mxu0 0
        %1674 = vmatmul.mubr.bf16.gmra.mxu0 %v1484
        %v1675 = vpop.f32.mrf.mxu0
        %v1676 = vadd.f32 0.0, %v1675
        %v1677 = vpop.f32.mrf.mxu0
        %v1678 = vpop.f32.mrf.mxu0
        %v1679 = vadd.f32 0.0, %v1678
        %v1680 = vpop.f32.mrf.mxu0
        %1681 = vmatprep.mubr.bf16.mxu0 0
        %1682 = vmatmul.mubr.bf16.gmra.mxu0 %v1485
        %v1683 = vpop.f32.mrf.mxu0
        %v1684 = vadd.f32 0.0, %v1683
        %v1685 = vpop.f32.mrf.mxu0
        %v1686 = vpop.f32.mrf.mxu0
        %v1687 = vadd.f32 0.0, %v1686
        %v1688 = vpop.f32.mrf.mxu0
        %1689 = vmatprep.mubr.bf16.mxu0 0
        %1690 = vmatmul.mubr.bf16.gmra.mxu0 %v1486
        %v1691 = vpop.f32.mrf.mxu0
        %v1692 = vadd.f32 0.0, %v1691
        %v1693 = vpop.f32.mrf.mxu0
        %v1694 = vpop.f32.mrf.mxu0
        %v1695 = vadd.f32 0.0, %v1694
        %v1696 = vpop.f32.mrf.mxu0
        %1697 = vmatprep.mubr.bf16.mxu0 0
        %1698 = vmatmul.mubr.bf16.gmra.mxu0 %v1487
        %v1699 = vpop.f32.mrf.mxu0
        %v1700 = vadd.f32 0.0, %v1699
        %v1701 = vpop.f32.mrf.mxu0
        %v1702 = vpop.f32.mrf.mxu0
        %v1703 = vadd.f32 0.0, %v1702
        %v1704 = vpop.f32.mrf.mxu0
        %1705 = vmatprep.mubr.bf16.mxu0 0
        %1706 = vmatmul.mubr.bf16.gmra.mxu0 %v1488
        %v1707 = vpop.f32.mrf.mxu0
        %v1708 = vadd.f32 0.0, %v1707
        %v1709 = vpop.f32.mrf.mxu0
        %v1710 = vpop.f32.mrf.mxu0
        %v1711 = vadd.f32 0.0, %v1710
        %v1712 = vpop.f32.mrf.mxu0
        %1713 = vdwg.mxu0
        %v1714 = vadd.f32 %v1135, %v1588
        %v1715 = vadd.f32 %v1138, %v1591
        %v1716 = vadd.f32 %v1143, %v1596
        %v1717 = vadd.f32 %v1146, %v1599
        %v1718 = vadd.f32 %v1151, %v1604
        %v1719 = vadd.f32 %v1154, %v1607
        %v1720 = vadd.f32 %v1159, %v1612
        %v1721 = vadd.f32 %v1162, %v1615
        %v1722 = vadd.f32 %v1167, %v1620
        %v1723 = vadd.f32 %v1170, %v1623
        %v1724 = vadd.f32 %v1175, %v1628
        %v1725 = vadd.f32 %v1178, %v1631
        %v1726 = vadd.f32 %v1183, %v1636
        %v1727 = vadd.f32 %v1186, %v1639
        %v1728 = vadd.f32 %v1191, %v1644
        %v1729 = vadd.f32 %v1194, %v1647
        %v1730 = vadd.f32 %v1199, %v1652
        %v1731 = vadd.f32 %v1202, %v1655
        %v1732 = vadd.f32 %v1207, %v1660
        %v1733 = vadd.f32 %v1210, %v1663
        %v1734 = vadd.f32 %v1215, %v1668
        %v1735 = vadd.f32 %v1218, %v1671
        %v1736 = vadd.f32 %v1223, %v1676
        %v1737 = vadd.f32 %v1226, %v1679
        %v1738 = vadd.f32 %v1231, %v1684
        %v1739 = vadd.f32 %v1234, %v1687
        %v1740 = vadd.f32 %v1239, %v1692
        %v1741 = vadd.f32 %v1242, %v1695
        %v1742 = vadd.f32 %v1247, %v1700
        %v1743 = vadd.f32 %v1250, %v1703
        %v1744 = vadd.f32 %v1255, %v1708
        %v1745 = vadd.f32 %v1258, %v1711
        %s1746 = scalar_lea.vmem %s206, 12
        %v1747 = vld [vmem:[%s1746] sm:$0xf]
        %v1748 = vld [vmem:[%s1746 + $0x4] sm:$0xf]
        %v1749 = vld [vmem:[%s1746 + $0xc] sm:$0xf]
        %v1750 = vld [vmem:[%s1746 + $0x10] sm:$0xf]
        %v1751 = vld [vmem:[%s1746 + $0x18] sm:$0xf]
        %v1752 = vld [vmem:[%s1746 + $0x1c] sm:$0xf]
        %v1753 = vld [vmem:[%s1746 + $0x24] sm:$0xf]
        %v1754 = vld [vmem:[%s1746 + $0x28] sm:$0xf]
        %v1755 = vld [vmem:[%s1746 + $0x30] sm:$0xf]
        %v1756 = vld [vmem:[%s1746 + $0x34] sm:$0xf]
        %v1757 = vld [vmem:[%s1746 + $0x3c] sm:$0xf]
        %v1758 = vld [vmem:[%s1746 + $0x40] sm:$0xf]
        %v1759 = vld [vmem:[%s1746 + $0x48] sm:$0xf]
        %v1760 = vld [vmem:[%s1746 + $0x4c] sm:$0xf]
        %v1761 = vld [vmem:[%s1746 + $0x54] sm:$0xf]
        %v1762 = vld [vmem:[%s1746 + $0x58] sm:$0xf]
        %v1763 = vld [vmem:[%s1746 + $0x60] sm:$0xf]
        %v1764 = vld [vmem:[%s1746 + $0x64] sm:$0xf]
        %v1765 = vld [vmem:[%s1746 + $0x6c] sm:$0xf]
        %v1766 = vld [vmem:[%s1746 + $0x70] sm:$0xf]
        %v1767 = vld [vmem:[%s1746 + $0x78] sm:$0xf]
        %v1768 = vld [vmem:[%s1746 + $0x7c] sm:$0xf]
        %v1769 = vld [vmem:[%s1746 + $0x84] sm:$0xf]
        %v1770 = vld [vmem:[%s1746 + $0x88] sm:$0xf]
        %v1771 = vld [vmem:[%s1746 + $0x90] sm:$0xf]
        %v1772 = vld [vmem:[%s1746 + $0x94] sm:$0xf]
        %v1773 = vld [vmem:[%s1746 + $0x9c] sm:$0xf]
        %v1774 = vld [vmem:[%s1746 + $0xa0] sm:$0xf]
        %v1775 = vld [vmem:[%s1746 + $0xa8] sm:$0xf]
        %v1776 = vld [vmem:[%s1746 + $0xac] sm:$0xf]
        %v1777 = vld [vmem:[%s1746 + $0xb4] sm:$0xf]
        %v1778 = vld [vmem:[%s1746 + $0xb8] sm:$0xf]
        %s1779 = scalar_lea.vmem %s210, 192
        %v1780 = vld [vmem:[%s1779] sm:$0xf]
        %v1781 = vld [vmem:[%s1779 + $0x4] sm:$0xf]
        %v1782 = vld [vmem:[%s1779 + $0x8] sm:$0xf]
        %v1783 = vld [vmem:[%s1779 + $0xc] sm:$0xf]
        %v1784 = vld [vmem:[%s1779 + $0x10] sm:$0xf]
        %v1785 = vld [vmem:[%s1779 + $0x14] sm:$0xf]
        %v1786 = vld [vmem:[%s1779 + $0x18] sm:$0xf]
        %v1787 = vld [vmem:[%s1779 + $0x1c] sm:$0xf]
        %v1788 = vld [vmem:[%s1779 + $0x20] sm:$0xf]
        %v1789 = vld [vmem:[%s1779 + $0x24] sm:$0xf]
        %v1790 = vld [vmem:[%s1779 + $0x28] sm:$0xf]
        %v1791 = vld [vmem:[%s1779 + $0x2c] sm:$0xf]
        %v1792 = vld [vmem:[%s1779 + $0x30] sm:$0xf]
        %v1793 = vld [vmem:[%s1779 + $0x34] sm:$0xf]
        %v1794 = vld [vmem:[%s1779 + $0x38] sm:$0xf]
        %v1795 = vld [vmem:[%s1779 + $0x3c] sm:$0xf]
        %v1828 = vunpack.c.l.b16 %v1747
        %v1829 = vunpack.c.l.b16 %v1748
        %v1830 = vunpack.c.l.b16 %v1749
        %v1831 = vunpack.c.l.b16 %v1750
        %v1832 = vunpack.c.l.b16 %v1751
        %v1833 = vunpack.c.l.b16 %v1752
        %v1834 = vunpack.c.l.b16 %v1753
        %v1835 = vunpack.c.l.b16 %v1754
        %v1836 = vunpack.c.l.b16 %v1755
        %v1837 = vunpack.c.l.b16 %v1756
        %v1838 = vunpack.c.l.b16 %v1757
        %v1839 = vunpack.c.l.b16 %v1758
        %v1840 = vunpack.c.l.b16 %v1759
        %v1841 = vunpack.c.l.b16 %v1760
        %v1842 = vunpack.c.l.b16 %v1761
        %v1843 = vunpack.c.l.b16 %v1762
        %v1844 = vunpack.c.l.b16 %v1763
        %v1845 = vunpack.c.l.b16 %v1764
        %v1846 = vunpack.c.l.b16 %v1765
        %v1847 = vunpack.c.l.b16 %v1766
        %v1848 = vunpack.c.l.b16 %v1767
        %v1849 = vunpack.c.l.b16 %v1768
        %v1850 = vunpack.c.l.b16 %v1769
        %v1851 = vunpack.c.l.b16 %v1770
        %v1852 = vunpack.c.l.b16 %v1771
        %v1853 = vunpack.c.l.b16 %v1772
        %v1854 = vunpack.c.l.b16 %v1773
        %v1855 = vunpack.c.l.b16 %v1774
        %v1856 = vunpack.c.l.b16 %v1775
        %v1857 = vunpack.c.l.b16 %v1776
        %v1858 = vunpack.c.l.b16 %v1777
        %v1859 = vunpack.c.l.b16 %v1778
        %v1860 = vpack.c.b16 %v1829, %v1828
        %v1861 = vpack.c.b16 %v1831, %v1830
        %v1862 = vpack.c.b16 %v1833, %v1832
        %v1863 = vpack.c.b16 %v1835, %v1834
        %v1864 = vpack.c.b16 %v1837, %v1836
        %v1865 = vpack.c.b16 %v1839, %v1838
        %v1866 = vpack.c.b16 %v1841, %v1840
        %v1867 = vpack.c.b16 %v1843, %v1842
        %v1868 = vpack.c.b16 %v1845, %v1844
        %v1869 = vpack.c.b16 %v1847, %v1846
        %v1870 = vpack.c.b16 %v1849, %v1848
        %v1871 = vpack.c.b16 %v1851, %v1850
        %v1872 = vpack.c.b16 %v1853, %v1852
        %v1873 = vpack.c.b16 %v1855, %v1854
        %v1874 = vpack.c.b16 %v1857, %v1856
        %v1875 = vpack.c.b16 %v1859, %v1858
        %v1908 = vunpack.c.l.b16 %v1780
        %v1909 = vunpack.c.l.b16 %v1781
        %v1910 = vunpack.c.l.b16 %v1782
        %v1911 = vunpack.c.l.b16 %v1783
        %v1912 = vunpack.c.l.b16 %v1784
        %v1913 = vunpack.c.l.b16 %v1785
        %v1914 = vunpack.c.l.b16 %v1786
        %v1915 = vunpack.c.l.b16 %v1787
        %v1916 = vunpack.c.l.b16 %v1788
        %v1917 = vunpack.c.l.b16 %v1789
        %v1918 = vunpack.c.l.b16 %v1790
        %v1919 = vunpack.c.l.b16 %v1791
        %v1920 = vunpack.c.l.b16 %v1792
        %v1921 = vunpack.c.l.b16 %v1793
        %v1922 = vunpack.c.l.b16 %v1794
        %v1923 = vunpack.c.l.b16 %v1795
        %v1924 = vpack.c.b16 %v1909, %v1908
        %v1925 = vpack.c.b16 %v1911, %v1910
        %v1926 = vpack.c.b16 %v1913, %v1912
        %v1927 = vpack.c.b16 %v1915, %v1914
        %v1928 = vpack.c.b16 %v1917, %v1916
        %v1929 = vpack.c.b16 %v1919, %v1918
        %v1930 = vpack.c.b16 %v1921, %v1920
        %v1931 = vpack.c.b16 %v1923, %v1922
        %1940 = vmatprep.subr.bf16.mxu0 0
        %1941 = vmatpush1.bf16.msra.mxu0 %v1931
        %1942 = vmatprep.subr.bf16.mxu0 0
        %1943 = vmatpush1.bf16.msra.mxu0 %v1930
        %1944 = vmatprep.subr.bf16.mxu0 0
        %1945 = vmatpush1.bf16.msra.mxu0 %v1929
        %1946 = vmatprep.subr.bf16.mxu0 0
        %1947 = vmatpush1.bf16.msra.mxu0 %v1928
        %1948 = vmatprep.subr.bf16.mxu0 0
        %1949 = vmatpush1.bf16.msra.mxu0 %v1927
        %1950 = vmatprep.subr.bf16.mxu0 0
        %1951 = vmatpush1.bf16.msra.mxu0 %v1926
        %1952 = vmatprep.subr.bf16.mxu0 0
        %1953 = vmatpush1.bf16.msra.mxu0 %v1925
        %1954 = vmatprep.subr.bf16.mxu0 0
        %1955 = vmatpush1.bf16.msra.mxu0 %v1924
        %1956 = vmatprep.subr.bf16.mxu0 0
        %1957 = vmatpush2.bf16.msra.mxu0 0
        %1958 = vmatprep.subr.bf16.mxu0 0
        %1959 = vmatpush2.bf16.msra.mxu0 0
        %1960 = vmatprep.subr.bf16.mxu0 0
        %1961 = vmatpush2.bf16.msra.mxu0 0
        %1962 = vmatprep.subr.bf16.mxu0 0
        %1963 = vmatpush2.bf16.msra.mxu0 0
        %1964 = vmatprep.subr.bf16.mxu0 0
        %1965 = vmatpush2.bf16.msra.mxu0 0
        %1966 = vmatprep.subr.bf16.mxu0 0
        %1967 = vmatpush2.bf16.msra.mxu0 0
        %1968 = vmatprep.subr.bf16.mxu0 0
        %1969 = vmatpush2.bf16.msra.mxu0 0
        %1970 = vmatprep.subr.bf16.mxu0 0
        %1971 = vmatpush2.bf16.msra.mxu0 0
        %1972 = vmatprep.mubr.bf16.mxu0 0
        %1973 = vmatmul.mubr.bf16.gmra.mxu0 %v1860
        %v1974 = vpop.f32.mrf.mxu0
        %v1975 = vadd.f32 0.0, %v1974
        %v1976 = vpop.f32.mrf.mxu0
        %v1977 = vpop.f32.mrf.mxu0
        %v1978 = vadd.f32 0.0, %v1977
        %v1979 = vpop.f32.mrf.mxu0
        %1980 = vmatprep.mubr.bf16.mxu0 0
        %1981 = vmatmul.mubr.bf16.gmra.mxu0 %v1861
        %v1982 = vpop.f32.mrf.mxu0
        %v1983 = vadd.f32 0.0, %v1982
        %v1984 = vpop.f32.mrf.mxu0
        %v1985 = vpop.f32.mrf.mxu0
        %v1986 = vadd.f32 0.0, %v1985
        %v1987 = vpop.f32.mrf.mxu0
        %1988 = vmatprep.mubr.bf16.mxu0 0
        %1989 = vmatmul.mubr.bf16.gmra.mxu0 %v1862
        %v1990 = vpop.f32.mrf.mxu0
        %v1991 = vadd.f32 0.0, %v1990
        %v1992 = vpop.f32.mrf.mxu0
        %v1993 = vpop.f32.mrf.mxu0
        %v1994 = vadd.f32 0.0, %v1993
        %v1995 = vpop.f32.mrf.mxu0
        %1996 = vmatprep.mubr.bf16.mxu0 0
        %1997 = vmatmul.mubr.bf16.gmra.mxu0 %v1863
        %v1998 = vpop.f32.mrf.mxu0
        %v1999 = vadd.f32 0.0, %v1998
        %v2000 = vpop.f32.mrf.mxu0
        %v2001 = vpop.f32.mrf.mxu0
        %v2002 = vadd.f32 0.0, %v2001
        %v2003 = vpop.f32.mrf.mxu0
        %2004 = vmatprep.mubr.bf16.mxu0 0
        %2005 = vmatmul.mubr.bf16.gmra.mxu0 %v1864
        %v2006 = vpop.f32.mrf.mxu0
        %v2007 = vadd.f32 0.0, %v2006
        %v2008 = vpop.f32.mrf.mxu0
        %v2009 = vpop.f32.mrf.mxu0
        %v2010 = vadd.f32 0.0, %v2009
        %v2011 = vpop.f32.mrf.mxu0
        %2012 = vmatprep.mubr.bf16.mxu0 0
        %2013 = vmatmul.mubr.bf16.gmra.mxu0 %v1865
        %v2014 = vpop.f32.mrf.mxu0
        %v2015 = vadd.f32 0.0, %v2014
        %v2016 = vpop.f32.mrf.mxu0
        %v2017 = vpop.f32.mrf.mxu0
        %v2018 = vadd.f32 0.0, %v2017
        %v2019 = vpop.f32.mrf.mxu0
        %2020 = vmatprep.mubr.bf16.mxu0 0
        %2021 = vmatmul.mubr.bf16.gmra.mxu0 %v1866
        %v2022 = vpop.f32.mrf.mxu0
        %v2023 = vadd.f32 0.0, %v2022
        %v2024 = vpop.f32.mrf.mxu0
        %v2025 = vpop.f32.mrf.mxu0
        %v2026 = vadd.f32 0.0, %v2025
        %v2027 = vpop.f32.mrf.mxu0
        %2028 = vmatprep.mubr.bf16.mxu0 0
        %2029 = vmatmul.mubr.bf16.gmra.mxu0 %v1867
        %v2030 = vpop.f32.mrf.mxu0
        %v2031 = vadd.f32 0.0, %v2030
        %v2032 = vpop.f32.mrf.mxu0
        %v2033 = vpop.f32.mrf.mxu0
        %v2034 = vadd.f32 0.0, %v2033
        %v2035 = vpop.f32.mrf.mxu0
        %2036 = vmatprep.mubr.bf16.mxu0 0
        %2037 = vmatmul.mubr.bf16.gmra.mxu0 %v1868
        %v2038 = vpop.f32.mrf.mxu0
        %v2039 = vadd.f32 0.0, %v2038
        %v2040 = vpop.f32.mrf.mxu0
        %v2041 = vpop.f32.mrf.mxu0
        %v2042 = vadd.f32 0.0, %v2041
        %v2043 = vpop.f32.mrf.mxu0
        %2044 = vmatprep.mubr.bf16.mxu0 0
        %2045 = vmatmul.mubr.bf16.gmra.mxu0 %v1869
        %v2046 = vpop.f32.mrf.mxu0
        %v2047 = vadd.f32 0.0, %v2046
        %v2048 = vpop.f32.mrf.mxu0
        %v2049 = vpop.f32.mrf.mxu0
        %v2050 = vadd.f32 0.0, %v2049
        %v2051 = vpop.f32.mrf.mxu0
        %2052 = vmatprep.mubr.bf16.mxu0 0
        %2053 = vmatmul.mubr.bf16.gmra.mxu0 %v1870
        %v2054 = vpop.f32.mrf.mxu0
        %v2055 = vadd.f32 0.0, %v2054
        %v2056 = vpop.f32.mrf.mxu0
        %v2057 = vpop.f32.mrf.mxu0
        %v2058 = vadd.f32 0.0, %v2057
        %v2059 = vpop.f32.mrf.mxu0
        %2060 = vmatprep.mubr.bf16.mxu0 0
        %2061 = vmatmul.mubr.bf16.gmra.mxu0 %v1871
        %v2062 = vpop.f32.mrf.mxu0
        %v2063 = vadd.f32 0.0, %v2062
        %v2064 = vpop.f32.mrf.mxu0
        %v2065 = vpop.f32.mrf.mxu0
        %v2066 = vadd.f32 0.0, %v2065
        %v2067 = vpop.f32.mrf.mxu0
        %2068 = vmatprep.mubr.bf16.mxu0 0
        %2069 = vmatmul.mubr.bf16.gmra.mxu0 %v1872
        %v2070 = vpop.f32.mrf.mxu0
        %v2071 = vadd.f32 0.0, %v2070
        %v2072 = vpop.f32.mrf.mxu0
        %v2073 = vpop.f32.mrf.mxu0
        %v2074 = vadd.f32 0.0, %v2073
        %v2075 = vpop.f32.mrf.mxu0
        %2076 = vmatprep.mubr.bf16.mxu0 0
        %2077 = vmatmul.mubr.bf16.gmra.mxu0 %v1873
        %v2078 = vpop.f32.mrf.mxu0
        %v2079 = vadd.f32 0.0, %v2078
        %v2080 = vpop.f32.mrf.mxu0
        %v2081 = vpop.f32.mrf.mxu0
        %v2082 = vadd.f32 0.0, %v2081
        %v2083 = vpop.f32.mrf.mxu0
        %2084 = vmatprep.mubr.bf16.mxu0 0
        %2085 = vmatmul.mubr.bf16.gmra.mxu0 %v1874
        %v2086 = vpop.f32.mrf.mxu0
        %v2087 = vadd.f32 0.0, %v2086
        %v2088 = vpop.f32.mrf.mxu0
        %v2089 = vpop.f32.mrf.mxu0
        %v2090 = vadd.f32 0.0, %v2089
        %v2091 = vpop.f32.mrf.mxu0
        %2092 = vmatprep.mubr.bf16.mxu0 0
        %2093 = vmatmul.mubr.bf16.gmra.mxu0 %v1875
        %v2094 = vpop.f32.mrf.mxu0
        %v2095 = vadd.f32 0.0, %v2094
        %v2096 = vpop.f32.mrf.mxu0
        %v2097 = vpop.f32.mrf.mxu0
        %v2098 = vadd.f32 0.0, %v2097
        %v2099 = vpop.f32.mrf.mxu0
        %2100 = vdwg.mxu0
        %v2101 = vadd.f32 %v1714, %v1975
        %v2102 = vadd.f32 %v1715, %v1978
        %v2103 = vadd.f32 %v1716, %v1983
        %v2104 = vadd.f32 %v1717, %v1986
        %v2105 = vadd.f32 %v1718, %v1991
        %v2106 = vadd.f32 %v1719, %v1994
        %v2107 = vadd.f32 %v1720, %v1999
        %v2108 = vadd.f32 %v1721, %v2002
        %v2109 = vadd.f32 %v1722, %v2007
        %v2110 = vadd.f32 %v1723, %v2010
        %v2111 = vadd.f32 %v1724, %v2015
        %v2112 = vadd.f32 %v1725, %v2018
        %v2113 = vadd.f32 %v1726, %v2023
        %v2114 = vadd.f32 %v1727, %v2026
        %v2115 = vadd.f32 %v1728, %v2031
        %v2116 = vadd.f32 %v1729, %v2034
        %v2117 = vadd.f32 %v1730, %v2039
        %v2118 = vadd.f32 %v1731, %v2042
        %v2119 = vadd.f32 %v1732, %v2047
        %v2120 = vadd.f32 %v1733, %v2050
        %v2121 = vadd.f32 %v1734, %v2055
        %v2122 = vadd.f32 %v1735, %v2058
        %v2123 = vadd.f32 %v1736, %v2063
        %v2124 = vadd.f32 %v1737, %v2066
        %v2125 = vadd.f32 %v1738, %v2071
        %v2126 = vadd.f32 %v1739, %v2074
        %v2127 = vadd.f32 %v1740, %v2079
        %v2128 = vadd.f32 %v1741, %v2082
        %v2129 = vadd.f32 %v1742, %v2087
        %v2130 = vadd.f32 %v1743, %v2090
        %v2131 = vadd.f32 %v1744, %v2095
        %v2132 = vadd.f32 %v1745, %v2098
        %v2133 = vld [vmem:[%s1746] sm:$0xf]
        %v2134 = vld [vmem:[%s1746 + $0x4] sm:$0xf]
        %v2135 = vld [vmem:[%s1746 + $0x8] sm:$0x1]
        %v2136 = vld [vmem:[%s1746 + $0xc] sm:$0xf]
        %v2137 = vld [vmem:[%s1746 + $0x10] sm:$0xf]
        %v2138 = vld [vmem:[%s1746 + $0x14] sm:$0x1]
        %v2139 = vld [vmem:[%s1746 + $0x18] sm:$0xf]
        %v2140 = vld [vmem:[%s1746 + $0x1c] sm:$0xf]
        %v2141 = vld [vmem:[%s1746 + $0x20] sm:$0x1]
        %v2142 = vld [vmem:[%s1746 + $0x24] sm:$0xf]
        %v2143 = vld [vmem:[%s1746 + $0x28] sm:$0xf]
        %v2144 = vld [vmem:[%s1746 + $0x2c] sm:$0x1]
        %v2145 = vld [vmem:[%s1746 + $0x30] sm:$0xf]
        %v2146 = vld [vmem:[%s1746 + $0x34] sm:$0xf]
        %v2147 = vld [vmem:[%s1746 + $0x38] sm:$0x1]
        %v2148 = vld [vmem:[%s1746 + $0x3c] sm:$0xf]
        %v2149 = vld [vmem:[%s1746 + $0x40] sm:$0xf]
        %v2150 = vld [vmem:[%s1746 + $0x44] sm:$0x1]
        %v2151 = vld [vmem:[%s1746 + $0x48] sm:$0xf]
        %v2152 = vld [vmem:[%s1746 + $0x4c] sm:$0xf]
        %v2153 = vld [vmem:[%s1746 + $0x50] sm:$0x1]
        %v2154 = vld [vmem:[%s1746 + $0x54] sm:$0xf]
        %v2155 = vld [vmem:[%s1746 + $0x58] sm:$0xf]
        %v2156 = vld [vmem:[%s1746 + $0x5c] sm:$0x1]
        %v2157 = vld [vmem:[%s1746 + $0x60] sm:$0xf]
        %v2158 = vld [vmem:[%s1746 + $0x64] sm:$0xf]
        %v2159 = vld [vmem:[%s1746 + $0x68] sm:$0x1]
        %v2160 = vld [vmem:[%s1746 + $0x6c] sm:$0xf]
        %v2161 = vld [vmem:[%s1746 + $0x70] sm:$0xf]
        %v2162 = vld [vmem:[%s1746 + $0x74] sm:$0x1]
        %v2163 = vld [vmem:[%s1746 + $0x78] sm:$0xf]
        %v2164 = vld [vmem:[%s1746 + $0x7c] sm:$0xf]
        %v2165 = vld [vmem:[%s1746 + $0x80] sm:$0x1]
        %v2166 = vld [vmem:[%s1746 + $0x84] sm:$0xf]
        %v2167 = vld [vmem:[%s1746 + $0x88] sm:$0xf]
        %v2168 = vld [vmem:[%s1746 + $0x8c] sm:$0x1]
        %v2169 = vld [vmem:[%s1746 + $0x90] sm:$0xf]
        %v2170 = vld [vmem:[%s1746 + $0x94] sm:$0xf]
        %v2171 = vld [vmem:[%s1746 + $0x98] sm:$0x1]
        %v2172 = vld [vmem:[%s1746 + $0x9c] sm:$0xf]
        %v2173 = vld [vmem:[%s1746 + $0xa0] sm:$0xf]
        %v2174 = vld [vmem:[%s1746 + $0xa4] sm:$0x1]
        %v2175 = vld [vmem:[%s1746 + $0xa8] sm:$0xf]
        %v2176 = vld [vmem:[%s1746 + $0xac] sm:$0xf]
        %v2177 = vld [vmem:[%s1746 + $0xb0] sm:$0x1]
        %v2178 = vld [vmem:[%s1746 + $0xb4] sm:$0xf]
        %v2179 = vld [vmem:[%s1746 + $0xb8] sm:$0xf]
        %v2180 = vld [vmem:[%s1746 + $0xbc] sm:$0x1]
        %v2182 = vshrl.u32 %v2133, 16
        %v2184 = vrot.slane %v2182, 4
        %v2185 = vshll.u32 %v2133, 16
        %v2187 = vrot.slane %v2185, 5
        %v2188 = vor.u32 %v2184, %v2187
        %v2189 = vrot.slane %v2188, 4
        %v2191 = vshll.u32 %v2134, 16
        %v2193 = vrot.slane %v2191, 5
        %v2194 = vsel %vm281, %v2189, %v2193
        %v2195 = vshrl.u32 %v2134, 16
        %v2197 = vrot.slane %v2195, 4
        %v2198 = vor.u32 %v2197, %v2193
        %v2199 = vrot.slane %v2198, 4
        %v2201 = vshll.u32 %v2135, 16
        %v2203 = vrot.slane %v2201, 5
        %v2204 = vsel %vm281, %v2199, %v2203
        %v2206 = vshrl.u32 %v2136, 16
        %v2208 = vrot.slane %v2206, 4
        %v2209 = vshll.u32 %v2136, 16
        %v2211 = vrot.slane %v2209, 5
        %v2212 = vor.u32 %v2208, %v2211
        %v2213 = vrot.slane %v2212, 4
        %v2215 = vshll.u32 %v2137, 16
        %v2217 = vrot.slane %v2215, 5
        %v2218 = vsel %vm281, %v2213, %v2217
        %v2219 = vshrl.u32 %v2137, 16
        %v2221 = vrot.slane %v2219, 4
        %v2222 = vor.u32 %v2221, %v2217
        %v2223 = vrot.slane %v2222, 4
        %v2225 = vshll.u32 %v2138, 16
        %v2227 = vrot.slane %v2225, 5
        %v2228 = vsel %vm281, %v2223, %v2227
        %v2230 = vshrl.u32 %v2139, 16
        %v2232 = vrot.slane %v2230, 4
        %v2233 = vshll.u32 %v2139, 16
        %v2235 = vrot.slane %v2233, 5
        %v2236 = vor.u32 %v2232, %v2235
        %v2237 = vrot.slane %v2236, 4
        %v2239 = vshll.u32 %v2140, 16
        %v2241 = vrot.slane %v2239, 5
        %v2242 = vsel %vm281, %v2237, %v2241
        %v2243 = vshrl.u32 %v2140, 16
        %v2245 = vrot.slane %v2243, 4
        %v2246 = vor.u32 %v2245, %v2241
        %v2247 = vrot.slane %v2246, 4
        %v2249 = vshll.u32 %v2141, 16
        %v2251 = vrot.slane %v2249, 5
        %v2252 = vsel %vm281, %v2247, %v2251
        %v2254 = vshrl.u32 %v2142, 16
        %v2256 = vrot.slane %v2254, 4
        %v2257 = vshll.u32 %v2142, 16
        %v2259 = vrot.slane %v2257, 5
        %v2260 = vor.u32 %v2256, %v2259
        %v2261 = vrot.slane %v2260, 4
        %v2263 = vshll.u32 %v2143, 16
        %v2265 = vrot.slane %v2263, 5
        %v2266 = vsel %vm281, %v2261, %v2265
        %v2267 = vshrl.u32 %v2143, 16
        %v2269 = vrot.slane %v2267, 4
        %v2270 = vor.u32 %v2269, %v2265
        %v2271 = vrot.slane %v2270, 4
        %v2273 = vshll.u32 %v2144, 16
        %v2275 = vrot.slane %v2273, 5
        %v2276 = vsel %vm281, %v2271, %v2275
        %v2278 = vshrl.u32 %v2145, 16
        %v2280 = vrot.slane %v2278, 4
        %v2281 = vshll.u32 %v2145, 16
        %v2283 = vrot.slane %v2281, 5
        %v2284 = vor.u32 %v2280, %v2283
        %v2285 = vrot.slane %v2284, 4
        %v2287 = vshll.u32 %v2146, 16
        %v2289 = vrot.slane %v2287, 5
        %v2290 = vsel %vm281, %v2285, %v2289
        %v2291 = vshrl.u32 %v2146, 16
        %v2293 = vrot.slane %v2291, 4
        %v2294 = vor.u32 %v2293, %v2289
        %v2295 = vrot.slane %v2294, 4
        %v2297 = vshll.u32 %v2147, 16
        %v2299 = vrot.slane %v2297, 5
        %v2300 = vsel %vm281, %v2295, %v2299
        %v2302 = vshrl.u32 %v2148, 16
        %v2304 = vrot.slane %v2302, 4
        %v2305 = vshll.u32 %v2148, 16
        %v2307 = vrot.slane %v2305, 5
        %v2308 = vor.u32 %v2304, %v2307
        %v2309 = vrot.slane %v2308, 4
        %v2311 = vshll.u32 %v2149, 16
        %v2313 = vrot.slane %v2311, 5
        %v2314 = vsel %vm281, %v2309, %v2313
        %v2315 = vshrl.u32 %v2149, 16
        %v2317 = vrot.slane %v2315, 4
        %v2318 = vor.u32 %v2317, %v2313
        %v2319 = vrot.slane %v2318, 4
        %v2321 = vshll.u32 %v2150, 16
        %v2323 = vrot.slane %v2321, 5
        %v2324 = vsel %vm281, %v2319, %v2323
        %v2326 = vshrl.u32 %v2151, 16
        %v2328 = vrot.slane %v2326, 4
        %v2329 = vshll.u32 %v2151, 16
        %v2331 = vrot.slane %v2329, 5
        %v2332 = vor.u32 %v2328, %v2331
        %v2333 = vrot.slane %v2332, 4
        %v2335 = vshll.u32 %v2152, 16
        %v2337 = vrot.slane %v2335, 5
        %v2338 = vsel %vm281, %v2333, %v2337
        %v2339 = vshrl.u32 %v2152, 16
        %v2341 = vrot.slane %v2339, 4
        %v2342 = vor.u32 %v2341, %v2337
        %v2343 = vrot.slane %v2342, 4
        %v2345 = vshll.u32 %v2153, 16
        %v2347 = vrot.slane %v2345, 5
        %v2348 = vsel %vm281, %v2343, %v2347
        %v2350 = vshrl.u32 %v2154, 16
        %v2352 = vrot.slane %v2350, 4
        %v2353 = vshll.u32 %v2154, 16
        %v2355 = vrot.slane %v2353, 5
        %v2356 = vor.u32 %v2352, %v2355
        %v2357 = vrot.slane %v2356, 4
        %v2359 = vshll.u32 %v2155, 16
        %v2361 = vrot.slane %v2359, 5
        %v2362 = vsel %vm281, %v2357, %v2361
        %v2363 = vshrl.u32 %v2155, 16
        %v2365 = vrot.slane %v2363, 4
        %v2366 = vor.u32 %v2365, %v2361
        %v2367 = vrot.slane %v2366, 4
        %v2369 = vshll.u32 %v2156, 16
        %v2371 = vrot.slane %v2369, 5
        %v2372 = vsel %vm281, %v2367, %v2371
        %v2374 = vshrl.u32 %v2157, 16
        %v2376 = vrot.slane %v2374, 4
        %v2377 = vshll.u32 %v2157, 16
        %v2379 = vrot.slane %v2377, 5
        %v2380 = vor.u32 %v2376, %v2379
        %v2381 = vrot.slane %v2380, 4
        %v2383 = vshll.u32 %v2158, 16
        %v2385 = vrot.slane %v2383, 5
        %v2386 = vsel %vm281, %v2381, %v2385
        %v2387 = vshrl.u32 %v2158, 16
        %v2389 = vrot.slane %v2387, 4
        %v2390 = vor.u32 %v2389, %v2385
        %v2391 = vrot.slane %v2390, 4
        %v2393 = vshll.u32 %v2159, 16
        %v2395 = vrot.slane %v2393, 5
        %v2396 = vsel %vm281, %v2391, %v2395
        %v2398 = vshrl.u32 %v2160, 16
        %v2400 = vrot.slane %v2398, 4
        %v2401 = vshll.u32 %v2160, 16
        %v2403 = vrot.slane %v2401, 5
        %v2404 = vor.u32 %v2400, %v2403
        %v2405 = vrot.slane %v2404, 4
        %v2407 = vshll.u32 %v2161, 16
        %v2409 = vrot.slane %v2407, 5
        %v2410 = vsel %vm281, %v2405, %v2409
        %v2411 = vshrl.u32 %v2161, 16
        %v2413 = vrot.slane %v2411, 4
        %v2414 = vor.u32 %v2413, %v2409
        %v2415 = vrot.slane %v2414, 4
        %v2417 = vshll.u32 %v2162, 16
        %v2419 = vrot.slane %v2417, 5
        %v2420 = vsel %vm281, %v2415, %v2419
        %v2422 = vshrl.u32 %v2163, 16
        %v2424 = vrot.slane %v2422, 4
        %v2425 = vshll.u32 %v2163, 16
        %v2427 = vrot.slane %v2425, 5
        %v2428 = vor.u32 %v2424, %v2427
        %v2429 = vrot.slane %v2428, 4
        %v2431 = vshll.u32 %v2164, 16
        %v2433 = vrot.slane %v2431, 5
        %v2434 = vsel %vm281, %v2429, %v2433
        %v2435 = vshrl.u32 %v2164, 16
        %v2437 = vrot.slane %v2435, 4
        %v2438 = vor.u32 %v2437, %v2433
        %v2439 = vrot.slane %v2438, 4
        %v2441 = vshll.u32 %v2165, 16
        %v2443 = vrot.slane %v2441, 5
        %v2444 = vsel %vm281, %v2439, %v2443
        %v2446 = vshrl.u32 %v2166, 16
        %v2448 = vrot.slane %v2446, 4
        %v2449 = vshll.u32 %v2166, 16
        %v2451 = vrot.slane %v2449, 5
        %v2452 = vor.u32 %v2448, %v2451
        %v2453 = vrot.slane %v2452, 4
        %v2455 = vshll.u32 %v2167, 16
        %v2457 = vrot.slane %v2455, 5
        %v2458 = vsel %vm281, %v2453, %v2457
        %v2459 = vshrl.u32 %v2167, 16
        %v2461 = vrot.slane %v2459, 4
        %v2462 = vor.u32 %v2461, %v2457
        %v2463 = vrot.slane %v2462, 4
        %v2465 = vshll.u32 %v2168, 16
        %v2467 = vrot.slane %v2465, 5
        %v2468 = vsel %vm281, %v2463, %v2467
        %v2470 = vshrl.u32 %v2169, 16
        %v2472 = vrot.slane %v2470, 4
        %v2473 = vshll.u32 %v2169, 16
        %v2475 = vrot.slane %v2473, 5
        %v2476 = vor.u32 %v2472, %v2475
        %v2477 = vrot.slane %v2476, 4
        %v2479 = vshll.u32 %v2170, 16
        %v2481 = vrot.slane %v2479, 5
        %v2482 = vsel %vm281, %v2477, %v2481
        %v2483 = vshrl.u32 %v2170, 16
        %v2485 = vrot.slane %v2483, 4
        %v2486 = vor.u32 %v2485, %v2481
        %v2487 = vrot.slane %v2486, 4
        %v2489 = vshll.u32 %v2171, 16
        %v2491 = vrot.slane %v2489, 5
        %v2492 = vsel %vm281, %v2487, %v2491
        %v2494 = vshrl.u32 %v2172, 16
        %v2496 = vrot.slane %v2494, 4
        %v2497 = vshll.u32 %v2172, 16
        %v2499 = vrot.slane %v2497, 5
        %v2500 = vor.u32 %v2496, %v2499
        %v2501 = vrot.slane %v2500, 4
        %v2503 = vshll.u32 %v2173, 16
        %v2505 = vrot.slane %v2503, 5
        %v2506 = vsel %vm281, %v2501, %v2505
        %v2507 = vshrl.u32 %v2173, 16
        %v2509 = vrot.slane %v2507, 4
        %v2510 = vor.u32 %v2509, %v2505
        %v2511 = vrot.slane %v2510, 4
        %v2513 = vshll.u32 %v2174, 16
        %v2515 = vrot.slane %v2513, 5
        %v2516 = vsel %vm281, %v2511, %v2515
        %v2518 = vshrl.u32 %v2175, 16
        %v2520 = vrot.slane %v2518, 4
        %v2521 = vshll.u32 %v2175, 16
        %v2523 = vrot.slane %v2521, 5
        %v2524 = vor.u32 %v2520, %v2523
        %v2525 = vrot.slane %v2524, 4
        %v2527 = vshll.u32 %v2176, 16
        %v2529 = vrot.slane %v2527, 5
        %v2530 = vsel %vm281, %v2525, %v2529
        %v2531 = vshrl.u32 %v2176, 16
        %v2533 = vrot.slane %v2531, 4
        %v2534 = vor.u32 %v2533, %v2529
        %v2535 = vrot.slane %v2534, 4
        %v2537 = vshll.u32 %v2177, 16
        %v2539 = vrot.slane %v2537, 5
        %v2540 = vsel %vm281, %v2535, %v2539
        %v2542 = vshrl.u32 %v2178, 16
        %v2544 = vrot.slane %v2542, 4
        %v2545 = vshll.u32 %v2178, 16
        %v2547 = vrot.slane %v2545, 5
        %v2548 = vor.u32 %v2544, %v2547
        %v2549 = vrot.slane %v2548, 4
        %v2551 = vshll.u32 %v2179, 16
        %v2553 = vrot.slane %v2551, 5
        %v2554 = vsel %vm281, %v2549, %v2553
        %v2555 = vshrl.u32 %v2179, 16
        %v2557 = vrot.slane %v2555, 4
        %v2558 = vor.u32 %v2557, %v2553
        %v2559 = vrot.slane %v2558, 4
        %v2561 = vshll.u32 %v2180, 16
        %v2563 = vrot.slane %v2561, 5
        %v2564 = vsel %vm281, %v2559, %v2563
        %s2565 = scalar_lea.vmem %s210, 256
        %v2566 = vld [vmem:[%s2565] sm:$0xf]
        %v2567 = vld [vmem:[%s2565 + $0x4] sm:$0xf]
        %v2568 = vld [vmem:[%s2565 + $0x8] sm:$0xf]
        %v2569 = vld [vmem:[%s2565 + $0xc] sm:$0xf]
        %v2570 = vld [vmem:[%s2565 + $0x10] sm:$0xf]
        %v2571 = vld [vmem:[%s2565 + $0x14] sm:$0xf]
        %v2572 = vld [vmem:[%s2565 + $0x18] sm:$0xf]
        %v2573 = vld [vmem:[%s2565 + $0x1c] sm:$0xf]
        %v2574 = vld [vmem:[%s2565 + $0x20] sm:$0xf]
        %v2575 = vld [vmem:[%s2565 + $0x24] sm:$0xf]
        %v2576 = vld [vmem:[%s2565 + $0x28] sm:$0xf]
        %v2577 = vld [vmem:[%s2565 + $0x2c] sm:$0xf]
        %v2578 = vld [vmem:[%s2565 + $0x30] sm:$0xf]
        %v2579 = vld [vmem:[%s2565 + $0x34] sm:$0xf]
        %v2580 = vld [vmem:[%s2565 + $0x38] sm:$0xf]
        %v2581 = vld [vmem:[%s2565 + $0x3c] sm:$0xf]
        %v2582 = vunpack.c.l.b16 %v2194
        %v2583 = vunpack.c.l.b16 %v2204
        %v2584 = vunpack.c.l.b16 %v2218
        %v2585 = vunpack.c.l.b16 %v2228
        %v2586 = vunpack.c.l.b16 %v2242
        %v2587 = vunpack.c.l.b16 %v2252
        %v2588 = vunpack.c.l.b16 %v2266
        %v2589 = vunpack.c.l.b16 %v2276
        %v2590 = vunpack.c.l.b16 %v2290
        %v2591 = vunpack.c.l.b16 %v2300
        %v2592 = vunpack.c.l.b16 %v2314
        %v2593 = vunpack.c.l.b16 %v2324
        %v2594 = vunpack.c.l.b16 %v2338
        %v2595 = vunpack.c.l.b16 %v2348
        %v2596 = vunpack.c.l.b16 %v2362
        %v2597 = vunpack.c.l.b16 %v2372
        %v2598 = vunpack.c.l.b16 %v2386
        %v2599 = vunpack.c.l.b16 %v2396
        %v2600 = vunpack.c.l.b16 %v2410
        %v2601 = vunpack.c.l.b16 %v2420
        %v2602 = vunpack.c.l.b16 %v2434
        %v2603 = vunpack.c.l.b16 %v2444
        %v2604 = vunpack.c.l.b16 %v2458
        %v2605 = vunpack.c.l.b16 %v2468
        %v2606 = vunpack.c.l.b16 %v2482
        %v2607 = vunpack.c.l.b16 %v2492
        %v2608 = vunpack.c.l.b16 %v2506
        %v2609 = vunpack.c.l.b16 %v2516
        %v2610 = vunpack.c.l.b16 %v2530
        %v2611 = vunpack.c.l.b16 %v2540
        %v2612 = vunpack.c.l.b16 %v2554
        %v2613 = vunpack.c.l.b16 %v2564
        %v2614 = vpack.c.b16 %v2583, %v2582
        %v2615 = vpack.c.b16 %v2585, %v2584
        %v2616 = vpack.c.b16 %v2587, %v2586
        %v2617 = vpack.c.b16 %v2589, %v2588
        %v2618 = vpack.c.b16 %v2591, %v2590
        %v2619 = vpack.c.b16 %v2593, %v2592
        %v2620 = vpack.c.b16 %v2595, %v2594
        %v2621 = vpack.c.b16 %v2597, %v2596
        %v2622 = vpack.c.b16 %v2599, %v2598
        %v2623 = vpack.c.b16 %v2601, %v2600
        %v2624 = vpack.c.b16 %v2603, %v2602
        %v2625 = vpack.c.b16 %v2605, %v2604
        %v2626 = vpack.c.b16 %v2607, %v2606
        %v2627 = vpack.c.b16 %v2609, %v2608
        %v2628 = vpack.c.b16 %v2611, %v2610
        %v2629 = vpack.c.b16 %v2613, %v2612
        %v2662 = vunpack.c.l.b16 %v2566
        %v2663 = vunpack.c.l.b16 %v2567
        %v2664 = vunpack.c.l.b16 %v2568
        %v2665 = vunpack.c.l.b16 %v2569
        %v2666 = vunpack.c.l.b16 %v2570
        %v2667 = vunpack.c.l.b16 %v2571
        %v2668 = vunpack.c.l.b16 %v2572
        %v2669 = vunpack.c.l.b16 %v2573
        %v2670 = vunpack.c.l.b16 %v2574
        %v2671 = vunpack.c.l.b16 %v2575
        %v2672 = vunpack.c.l.b16 %v2576
        %v2673 = vunpack.c.l.b16 %v2577
        %v2674 = vunpack.c.l.b16 %v2578
        %v2675 = vunpack.c.l.b16 %v2579
        %v2676 = vunpack.c.l.b16 %v2580
        %v2677 = vunpack.c.l.b16 %v2581
        %v2678 = vpack.c.b16 %v2663, %v2662
        %v2679 = vpack.c.b16 %v2665, %v2664
        %v2680 = vpack.c.b16 %v2667, %v2666
        %v2681 = vpack.c.b16 %v2669, %v2668
        %v2682 = vpack.c.b16 %v2671, %v2670
        %v2683 = vpack.c.b16 %v2673, %v2672
        %v2684 = vpack.c.b16 %v2675, %v2674
        %v2685 = vpack.c.b16 %v2677, %v2676
        %2694 = vmatprep.subr.bf16.mxu0 0
        %2695 = vmatpush1.bf16.msra.mxu0 %v2685
        %2696 = vmatprep.subr.bf16.mxu0 0
        %2697 = vmatpush1.bf16.msra.mxu0 %v2684
        %2698 = vmatprep.subr.bf16.mxu0 0
        %2699 = vmatpush1.bf16.msra.mxu0 %v2683
        %2700 = vmatprep.subr.bf16.mxu0 0
        %2701 = vmatpush1.bf16.msra.mxu0 %v2682
        %2702 = vmatprep.subr.bf16.mxu0 0
        %2703 = vmatpush1.bf16.msra.mxu0 %v2681
        %2704 = vmatprep.subr.bf16.mxu0 0
        %2705 = vmatpush1.bf16.msra.mxu0 %v2680
        %2706 = vmatprep.subr.bf16.mxu0 0
        %2707 = vmatpush1.bf16.msra.mxu0 %v2679
        %2708 = vmatprep.subr.bf16.mxu0 0
        %2709 = vmatpush1.bf16.msra.mxu0 %v2678
        %2710 = vmatprep.subr.bf16.mxu0 0
        %2711 = vmatpush2.bf16.msra.mxu0 0
        %2712 = vmatprep.subr.bf16.mxu0 0
        %2713 = vmatpush2.bf16.msra.mxu0 0
        %2714 = vmatprep.subr.bf16.mxu0 0
        %2715 = vmatpush2.bf16.msra.mxu0 0
        %2716 = vmatprep.subr.bf16.mxu0 0
        %2717 = vmatpush2.bf16.msra.mxu0 0
        %2718 = vmatprep.subr.bf16.mxu0 0
        %2719 = vmatpush2.bf16.msra.mxu0 0
        %2720 = vmatprep.subr.bf16.mxu0 0
        %2721 = vmatpush2.bf16.msra.mxu0 0
        %2722 = vmatprep.subr.bf16.mxu0 0
        %2723 = vmatpush2.bf16.msra.mxu0 0
        %2724 = vmatprep.subr.bf16.mxu0 0
        %2725 = vmatpush2.bf16.msra.mxu0 0
        %2726 = vmatprep.mubr.bf16.mxu0 0
        %2727 = vmatmul.mubr.bf16.gmra.mxu0 %v2614
        %v2728 = vpop.f32.mrf.mxu0
        %v2729 = vadd.f32 0.0, %v2728
        %v2730 = vpop.f32.mrf.mxu0
        %v2731 = vpop.f32.mrf.mxu0
        %v2732 = vadd.f32 0.0, %v2731
        %v2733 = vpop.f32.mrf.mxu0
        %2734 = vmatprep.mubr.bf16.mxu0 0
        %2735 = vmatmul.mubr.bf16.gmra.mxu0 %v2615
        %v2736 = vpop.f32.mrf.mxu0
        %v2737 = vadd.f32 0.0, %v2736
        %v2738 = vpop.f32.mrf.mxu0
        %v2739 = vpop.f32.mrf.mxu0
        %v2740 = vadd.f32 0.0, %v2739
        %v2741 = vpop.f32.mrf.mxu0
        %2742 = vmatprep.mubr.bf16.mxu0 0
        %2743 = vmatmul.mubr.bf16.gmra.mxu0 %v2616
        %v2744 = vpop.f32.mrf.mxu0
        %v2745 = vadd.f32 0.0, %v2744
        %v2746 = vpop.f32.mrf.mxu0
        %v2747 = vpop.f32.mrf.mxu0
        %v2748 = vadd.f32 0.0, %v2747
        %v2749 = vpop.f32.mrf.mxu0
        %2750 = vmatprep.mubr.bf16.mxu0 0
        %2751 = vmatmul.mubr.bf16.gmra.mxu0 %v2617
        %v2752 = vpop.f32.mrf.mxu0
        %v2753 = vadd.f32 0.0, %v2752
        %v2754 = vpop.f32.mrf.mxu0
        %v2755 = vpop.f32.mrf.mxu0
        %v2756 = vadd.f32 0.0, %v2755
        %v2757 = vpop.f32.mrf.mxu0
        %2758 = vmatprep.mubr.bf16.mxu0 0
        %2759 = vmatmul.mubr.bf16.gmra.mxu0 %v2618
        %v2760 = vpop.f32.mrf.mxu0
        %v2761 = vadd.f32 0.0, %v2760
        %v2762 = vpop.f32.mrf.mxu0
        %v2763 = vpop.f32.mrf.mxu0
        %v2764 = vadd.f32 0.0, %v2763
        %v2765 = vpop.f32.mrf.mxu0
        %2766 = vmatprep.mubr.bf16.mxu0 0
        %2767 = vmatmul.mubr.bf16.gmra.mxu0 %v2619
        %v2768 = vpop.f32.mrf.mxu0
        %v2769 = vadd.f32 0.0, %v2768
        %v2770 = vpop.f32.mrf.mxu0
        %v2771 = vpop.f32.mrf.mxu0
        %v2772 = vadd.f32 0.0, %v2771
        %v2773 = vpop.f32.mrf.mxu0
        %2774 = vmatprep.mubr.bf16.mxu0 0
        %2775 = vmatmul.mubr.bf16.gmra.mxu0 %v2620
        %v2776 = vpop.f32.mrf.mxu0
        %v2777 = vadd.f32 0.0, %v2776
        %v2778 = vpop.f32.mrf.mxu0
        %v2779 = vpop.f32.mrf.mxu0
        %v2780 = vadd.f32 0.0, %v2779
        %v2781 = vpop.f32.mrf.mxu0
        %2782 = vmatprep.mubr.bf16.mxu0 0
        %2783 = vmatmul.mubr.bf16.gmra.mxu0 %v2621
        %v2784 = vpop.f32.mrf.mxu0
        %v2785 = vadd.f32 0.0, %v2784
        %v2786 = vpop.f32.mrf.mxu0
        %v2787 = vpop.f32.mrf.mxu0
        %v2788 = vadd.f32 0.0, %v2787
        %v2789 = vpop.f32.mrf.mxu0
        %2790 = vmatprep.mubr.bf16.mxu0 0
        %2791 = vmatmul.mubr.bf16.gmra.mxu0 %v2622
        %v2792 = vpop.f32.mrf.mxu0
        %v2793 = vadd.f32 0.0, %v2792
        %v2794 = vpop.f32.mrf.mxu0
        %v2795 = vpop.f32.mrf.mxu0
        %v2796 = vadd.f32 0.0, %v2795
        %v2797 = vpop.f32.mrf.mxu0
        %2798 = vmatprep.mubr.bf16.mxu0 0
        %2799 = vmatmul.mubr.bf16.gmra.mxu0 %v2623
        %v2800 = vpop.f32.mrf.mxu0
        %v2801 = vadd.f32 0.0, %v2800
        %v2802 = vpop.f32.mrf.mxu0
        %v2803 = vpop.f32.mrf.mxu0
        %v2804 = vadd.f32 0.0, %v2803
        %v2805 = vpop.f32.mrf.mxu0
        %2806 = vmatprep.mubr.bf16.mxu0 0
        %2807 = vmatmul.mubr.bf16.gmra.mxu0 %v2624
        %v2808 = vpop.f32.mrf.mxu0
        %v2809 = vadd.f32 0.0, %v2808
        %v2810 = vpop.f32.mrf.mxu0
        %v2811 = vpop.f32.mrf.mxu0
        %v2812 = vadd.f32 0.0, %v2811
        %v2813 = vpop.f32.mrf.mxu0
        %2814 = vmatprep.mubr.bf16.mxu0 0
        %2815 = vmatmul.mubr.bf16.gmra.mxu0 %v2625
        %v2816 = vpop.f32.mrf.mxu0
        %v2817 = vadd.f32 0.0, %v2816
        %v2818 = vpop.f32.mrf.mxu0
        %v2819 = vpop.f32.mrf.mxu0
        %v2820 = vadd.f32 0.0, %v2819
        %v2821 = vpop.f32.mrf.mxu0
        %2822 = vmatprep.mubr.bf16.mxu0 0
        %2823 = vmatmul.mubr.bf16.gmra.mxu0 %v2626
        %v2824 = vpop.f32.mrf.mxu0
        %v2825 = vadd.f32 0.0, %v2824
        %v2826 = vpop.f32.mrf.mxu0
        %v2827 = vpop.f32.mrf.mxu0
        %v2828 = vadd.f32 0.0, %v2827
        %v2829 = vpop.f32.mrf.mxu0
        %2830 = vmatprep.mubr.bf16.mxu0 0
        %2831 = vmatmul.mubr.bf16.gmra.mxu0 %v2627
        %v2832 = vpop.f32.mrf.mxu0
        %v2833 = vadd.f32 0.0, %v2832
        %v2834 = vpop.f32.mrf.mxu0
        %v2835 = vpop.f32.mrf.mxu0
        %v2836 = vadd.f32 0.0, %v2835
        %v2837 = vpop.f32.mrf.mxu0
        %2838 = vmatprep.mubr.bf16.mxu0 0
        %2839 = vmatmul.mubr.bf16.gmra.mxu0 %v2628
        %v2840 = vpop.f32.mrf.mxu0
        %v2841 = vadd.f32 0.0, %v2840
        %v2842 = vpop.f32.mrf.mxu0
        %v2843 = vpop.f32.mrf.mxu0
        %v2844 = vadd.f32 0.0, %v2843
        %v2845 = vpop.f32.mrf.mxu0
        %2846 = vmatprep.mubr.bf16.mxu0 0
        %2847 = vmatmul.mubr.bf16.gmra.mxu0 %v2629
        %v2848 = vpop.f32.mrf.mxu0
        %v2849 = vadd.f32 0.0, %v2848
        %v2850 = vpop.f32.mrf.mxu0
        %v2851 = vpop.f32.mrf.mxu0
        %v2852 = vadd.f32 0.0, %v2851
        %v2853 = vpop.f32.mrf.mxu0
        %2854 = vdwg.mxu0
        %v2855 = vadd.f32 %v2101, %v2729
        %v2856 = vadd.f32 %v2102, %v2732
        %v2857 = vadd.f32 %v2103, %v2737
        %v2858 = vadd.f32 %v2104, %v2740
        %v2859 = vadd.f32 %v2105, %v2745
        %v2860 = vadd.f32 %v2106, %v2748
        %v2861 = vadd.f32 %v2107, %v2753
        %v2862 = vadd.f32 %v2108, %v2756
        %v2863 = vadd.f32 %v2109, %v2761
        %v2864 = vadd.f32 %v2110, %v2764
        %v2865 = vadd.f32 %v2111, %v2769
        %v2866 = vadd.f32 %v2112, %v2772
        %v2867 = vadd.f32 %v2113, %v2777
        %v2868 = vadd.f32 %v2114, %v2780
        %v2869 = vadd.f32 %v2115, %v2785
        %v2870 = vadd.f32 %v2116, %v2788
        %v2871 = vadd.f32 %v2117, %v2793
        %v2872 = vadd.f32 %v2118, %v2796
        %v2873 = vadd.f32 %v2119, %v2801
        %v2874 = vadd.f32 %v2120, %v2804
        %v2875 = vadd.f32 %v2121, %v2809
        %v2876 = vadd.f32 %v2122, %v2812
        %v2877 = vadd.f32 %v2123, %v2817
        %v2878 = vadd.f32 %v2124, %v2820
        %v2879 = vadd.f32 %v2125, %v2825
        %v2880 = vadd.f32 %v2126, %v2828
        %v2881 = vadd.f32 %v2127, %v2833
        %v2882 = vadd.f32 %v2128, %v2836
        %v2883 = vadd.f32 %v2129, %v2841
        %v2884 = vadd.f32 %v2130, %v2844
        %v2885 = vadd.f32 %v2131, %v2849
        %v2886 = vadd.f32 %v2132, %v2852
        %v2887 = vld [vmem:[%s1746] sm:$0xe]
        %v2888 = vld [vmem:[%s1746 + $0xc] sm:$0xe]
        %v2889 = vld [vmem:[%s1746 + $0x18] sm:$0xe]
        %v2890 = vld [vmem:[%s1746 + $0x24] sm:$0xe]
        %v2891 = vld [vmem:[%s1746 + $0x30] sm:$0xe]
        %v2892 = vld [vmem:[%s1746 + $0x3c] sm:$0xe]
        %v2893 = vld [vmem:[%s1746 + $0x48] sm:$0xe]
        %v2894 = vld [vmem:[%s1746 + $0x54] sm:$0xe]
        %v2895 = vld [vmem:[%s1746 + $0x60] sm:$0xe]
        %v2896 = vld [vmem:[%s1746 + $0x6c] sm:$0xe]
        %v2897 = vld [vmem:[%s1746 + $0x78] sm:$0xe]
        %v2898 = vld [vmem:[%s1746 + $0x84] sm:$0xe]
        %v2899 = vld [vmem:[%s1746 + $0x90] sm:$0xe]
        %v2900 = vld [vmem:[%s1746 + $0x9c] sm:$0xe]
        %v2901 = vld [vmem:[%s1746 + $0xa8] sm:$0xe]
        %v2902 = vld [vmem:[%s1746 + $0xb4] sm:$0xe]
        %v2951 = vrot.slane %v2887, 5
        %v2952 = vrot.slane %v2951, 4
        %v2953 = vrot.slane %v2134, 5
        %v2954 = vsel %vm1311, %v2952, %v2953
        %v2955 = vrot.slane %v2953, 4
        %v2956 = vrot.slane %v2135, 5
        %v2957 = vsel %vm1311, %v2955, %v2956
        %v2958 = vrot.slane %v2888, 5
        %v2959 = vrot.slane %v2958, 4
        %v2960 = vrot.slane %v2137, 5
        %v2961 = vsel %vm1311, %v2959, %v2960
        %v2962 = vrot.slane %v2960, 4
        %v2963 = vrot.slane %v2138, 5
        %v2964 = vsel %vm1311, %v2962, %v2963
        %v2965 = vrot.slane %v2889, 5
        %v2966 = vrot.slane %v2965, 4
        %v2967 = vrot.slane %v2140, 5
        %v2968 = vsel %vm1311, %v2966, %v2967
        %v2969 = vrot.slane %v2967, 4
        %v2970 = vrot.slane %v2141, 5
        %v2971 = vsel %vm1311, %v2969, %v2970
        %v2972 = vrot.slane %v2890, 5
        %v2973 = vrot.slane %v2972, 4
        %v2974 = vrot.slane %v2143, 5
        %v2975 = vsel %vm1311, %v2973, %v2974
        %v2976 = vrot.slane %v2974, 4
        %v2977 = vrot.slane %v2144, 5
        %v2978 = vsel %vm1311, %v2976, %v2977
        %v2979 = vrot.slane %v2891, 5
        %v2980 = vrot.slane %v2979, 4
        %v2981 = vrot.slane %v2146, 5
        %v2982 = vsel %vm1311, %v2980, %v2981
        %v2983 = vrot.slane %v2981, 4
        %v2984 = vrot.slane %v2147, 5
        %v2985 = vsel %vm1311, %v2983, %v2984
        %v2986 = vrot.slane %v2892, 5
        %v2987 = vrot.slane %v2986, 4
        %v2988 = vrot.slane %v2149, 5
        %v2989 = vsel %vm1311, %v2987, %v2988
        %v2990 = vrot.slane %v2988, 4
        %v2991 = vrot.slane %v2150, 5
        %v2992 = vsel %vm1311, %v2990, %v2991
        %v2993 = vrot.slane %v2893, 5
        %v2994 = vrot.slane %v2993, 4
        %v2995 = vrot.slane %v2152, 5
        %v2996 = vsel %vm1311, %v2994, %v2995
        %v2997 = vrot.slane %v2995, 4
        %v2998 = vrot.slane %v2153, 5
        %v2999 = vsel %vm1311, %v2997, %v2998
        %v3000 = vrot.slane %v2894, 5
        %v3001 = vrot.slane %v3000, 4
        %v3002 = vrot.slane %v2155, 5
        %v3003 = vsel %vm1311, %v3001, %v3002
        %v3004 = vrot.slane %v3002, 4
        %v3005 = vrot.slane %v2156, 5
        %v3006 = vsel %vm1311, %v3004, %v3005
        %v3007 = vrot.slane %v2895, 5
        %v3008 = vrot.slane %v3007, 4
        %v3009 = vrot.slane %v2158, 5
        %v3010 = vsel %vm1311, %v3008, %v3009
        %v3011 = vrot.slane %v3009, 4
        %v3012 = vrot.slane %v2159, 5
        %v3013 = vsel %vm1311, %v3011, %v3012
        %v3014 = vrot.slane %v2896, 5
        %v3015 = vrot.slane %v3014, 4
        %v3016 = vrot.slane %v2161, 5
        %v3017 = vsel %vm1311, %v3015, %v3016
        %v3018 = vrot.slane %v3016, 4
        %v3019 = vrot.slane %v2162, 5
        %v3020 = vsel %vm1311, %v3018, %v3019
        %v3021 = vrot.slane %v2897, 5
        %v3022 = vrot.slane %v3021, 4
        %v3023 = vrot.slane %v2164, 5
        %v3024 = vsel %vm1311, %v3022, %v3023
        %v3025 = vrot.slane %v3023, 4
        %v3026 = vrot.slane %v2165, 5
        %v3027 = vsel %vm1311, %v3025, %v3026
        %v3028 = vrot.slane %v2898, 5
        %v3029 = vrot.slane %v3028, 4
        %v3030 = vrot.slane %v2167, 5
        %v3031 = vsel %vm1311, %v3029, %v3030
        %v3032 = vrot.slane %v3030, 4
        %v3033 = vrot.slane %v2168, 5
        %v3034 = vsel %vm1311, %v3032, %v3033
        %v3035 = vrot.slane %v2899, 5
        %v3036 = vrot.slane %v3035, 4
        %v3037 = vrot.slane %v2170, 5
        %v3038 = vsel %vm1311, %v3036, %v3037
        %v3039 = vrot.slane %v3037, 4
        %v3040 = vrot.slane %v2171, 5
        %v3041 = vsel %vm1311, %v3039, %v3040
        %v3042 = vrot.slane %v2900, 5
        %v3043 = vrot.slane %v3042, 4
        %v3044 = vrot.slane %v2173, 5
        %v3045 = vsel %vm1311, %v3043, %v3044
        %v3046 = vrot.slane %v3044, 4
        %v3047 = vrot.slane %v2174, 5
        %v3048 = vsel %vm1311, %v3046, %v3047
        %v3049 = vrot.slane %v2901, 5
        %v3050 = vrot.slane %v3049, 4
        %v3051 = vrot.slane %v2176, 5
        %v3052 = vsel %vm1311, %v3050, %v3051
        %v3053 = vrot.slane %v3051, 4
        %v3054 = vrot.slane %v2177, 5
        %v3055 = vsel %vm1311, %v3053, %v3054
        %v3056 = vrot.slane %v2902, 5
        %v3057 = vrot.slane %v3056, 4
        %v3058 = vrot.slane %v2179, 5
        %v3059 = vsel %vm1311, %v3057, %v3058
        %v3060 = vrot.slane %v3058, 4
        %v3061 = vrot.slane %v2180, 5
        %v3062 = vsel %vm1311, %v3060, %v3061
        %s3063 = scalar_lea.vmem %s210, 320
        %v3064 = vld [vmem:[%s3063] sm:$0xf]
        %v3065 = vld [vmem:[%s3063 + $0x4] sm:$0xf]
        %v3066 = vld [vmem:[%s3063 + $0x8] sm:$0xf]
        %v3067 = vld [vmem:[%s3063 + $0xc] sm:$0xf]
        %v3068 = vld [vmem:[%s3063 + $0x10] sm:$0xf]
        %v3069 = vld [vmem:[%s3063 + $0x14] sm:$0xf]
        %v3070 = vld [vmem:[%s3063 + $0x18] sm:$0xf]
        %v3071 = vld [vmem:[%s3063 + $0x1c] sm:$0xf]
        %v3072 = vld [vmem:[%s3063 + $0x20] sm:$0xf]
        %v3073 = vld [vmem:[%s3063 + $0x24] sm:$0xf]
        %v3074 = vld [vmem:[%s3063 + $0x28] sm:$0xf]
        %v3075 = vld [vmem:[%s3063 + $0x2c] sm:$0xf]
        %v3076 = vld [vmem:[%s3063 + $0x30] sm:$0xf]
        %v3077 = vld [vmem:[%s3063 + $0x34] sm:$0xf]
        %v3078 = vld [vmem:[%s3063 + $0x38] sm:$0xf]
        %v3079 = vld [vmem:[%s3063 + $0x3c] sm:$0xf]
        %v3080 = vunpack.c.l.b16 %v2954
        %v3081 = vunpack.c.l.b16 %v2957
        %v3082 = vunpack.c.l.b16 %v2961
        %v3083 = vunpack.c.l.b16 %v2964
        %v3084 = vunpack.c.l.b16 %v2968
        %v3085 = vunpack.c.l.b16 %v2971
        %v3086 = vunpack.c.l.b16 %v2975
        %v3087 = vunpack.c.l.b16 %v2978
        %v3088 = vunpack.c.l.b16 %v2982
        %v3089 = vunpack.c.l.b16 %v2985
        %v3090 = vunpack.c.l.b16 %v2989
        %v3091 = vunpack.c.l.b16 %v2992
        %v3092 = vunpack.c.l.b16 %v2996
        %v3093 = vunpack.c.l.b16 %v2999
        %v3094 = vunpack.c.l.b16 %v3003
        %v3095 = vunpack.c.l.b16 %v3006
        %v3096 = vunpack.c.l.b16 %v3010
        %v3097 = vunpack.c.l.b16 %v3013
        %v3098 = vunpack.c.l.b16 %v3017
        %v3099 = vunpack.c.l.b16 %v3020
        %v3100 = vunpack.c.l.b16 %v3024
        %v3101 = vunpack.c.l.b16 %v3027
        %v3102 = vunpack.c.l.b16 %v3031
        %v3103 = vunpack.c.l.b16 %v3034
        %v3104 = vunpack.c.l.b16 %v3038
        %v3105 = vunpack.c.l.b16 %v3041
        %v3106 = vunpack.c.l.b16 %v3045
        %v3107 = vunpack.c.l.b16 %v3048
        %v3108 = vunpack.c.l.b16 %v3052
        %v3109 = vunpack.c.l.b16 %v3055
        %v3110 = vunpack.c.l.b16 %v3059
        %v3111 = vunpack.c.l.b16 %v3062
        %v3112 = vpack.c.b16 %v3081, %v3080
        %v3113 = vpack.c.b16 %v3083, %v3082
        %v3114 = vpack.c.b16 %v3085, %v3084
        %v3115 = vpack.c.b16 %v3087, %v3086
        %v3116 = vpack.c.b16 %v3089, %v3088
        %v3117 = vpack.c.b16 %v3091, %v3090
        %v3118 = vpack.c.b16 %v3093, %v3092
        %v3119 = vpack.c.b16 %v3095, %v3094
        %v3120 = vpack.c.b16 %v3097, %v3096
        %v3121 = vpack.c.b16 %v3099, %v3098
        %v3122 = vpack.c.b16 %v3101, %v3100
        %v3123 = vpack.c.b16 %v3103, %v3102
        %v3124 = vpack.c.b16 %v3105, %v3104
        %v3125 = vpack.c.b16 %v3107, %v3106
        %v3126 = vpack.c.b16 %v3109, %v3108
        %v3127 = vpack.c.b16 %v3111, %v3110
        %v3160 = vunpack.c.l.b16 %v3064
        %v3161 = vunpack.c.l.b16 %v3065
        %v3162 = vunpack.c.l.b16 %v3066
        %v3163 = vunpack.c.l.b16 %v3067
        %v3164 = vunpack.c.l.b16 %v3068
        %v3165 = vunpack.c.l.b16 %v3069
        %v3166 = vunpack.c.l.b16 %v3070
        %v3167 = vunpack.c.l.b16 %v3071
        %v3168 = vunpack.c.l.b16 %v3072
        %v3169 = vunpack.c.l.b16 %v3073
        %v3170 = vunpack.c.l.b16 %v3074
        %v3171 = vunpack.c.l.b16 %v3075
        %v3172 = vunpack.c.l.b16 %v3076
        %v3173 = vunpack.c.l.b16 %v3077
        %v3174 = vunpack.c.l.b16 %v3078
        %v3175 = vunpack.c.l.b16 %v3079
        %v3176 = vpack.c.b16 %v3161, %v3160
        %v3177 = vpack.c.b16 %v3163, %v3162
        %v3178 = vpack.c.b16 %v3165, %v3164
        %v3179 = vpack.c.b16 %v3167, %v3166
        %v3180 = vpack.c.b16 %v3169, %v3168
        %v3181 = vpack.c.b16 %v3171, %v3170
        %v3182 = vpack.c.b16 %v3173, %v3172
        %v3183 = vpack.c.b16 %v3175, %v3174
        %3192 = vmatprep.subr.bf16.mxu0 0
        %3193 = vmatpush1.bf16.msra.mxu0 %v3183
        %3194 = vmatprep.subr.bf16.mxu0 0
        %3195 = vmatpush1.bf16.msra.mxu0 %v3182
        %3196 = vmatprep.subr.bf16.mxu0 0
        %3197 = vmatpush1.bf16.msra.mxu0 %v3181
        %3198 = vmatprep.subr.bf16.mxu0 0
        %3199 = vmatpush1.bf16.msra.mxu0 %v3180
        %3200 = vmatprep.subr.bf16.mxu0 0
        %3201 = vmatpush1.bf16.msra.mxu0 %v3179
        %3202 = vmatprep.subr.bf16.mxu0 0
        %3203 = vmatpush1.bf16.msra.mxu0 %v3178
        %3204 = vmatprep.subr.bf16.mxu0 0
        %3205 = vmatpush1.bf16.msra.mxu0 %v3177
        %3206 = vmatprep.subr.bf16.mxu0 0
        %3207 = vmatpush1.bf16.msra.mxu0 %v3176
        %3208 = vmatprep.subr.bf16.mxu0 0
        %3209 = vmatpush2.bf16.msra.mxu0 0
        %3210 = vmatprep.subr.bf16.mxu0 0
        %3211 = vmatpush2.bf16.msra.mxu0 0
        %3212 = vmatprep.subr.bf16.mxu0 0
        %3213 = vmatpush2.bf16.msra.mxu0 0
        %3214 = vmatprep.subr.bf16.mxu0 0
        %3215 = vmatpush2.bf16.msra.mxu0 0
        %3216 = vmatprep.subr.bf16.mxu0 0
        %3217 = vmatpush2.bf16.msra.mxu0 0
        %3218 = vmatprep.subr.bf16.mxu0 0
        %3219 = vmatpush2.bf16.msra.mxu0 0
        %3220 = vmatprep.subr.bf16.mxu0 0
        %3221 = vmatpush2.bf16.msra.mxu0 0
        %3222 = vmatprep.subr.bf16.mxu0 0
        %3223 = vmatpush2.bf16.msra.mxu0 0
        %3224 = vmatprep.mubr.bf16.mxu0 0
        %3225 = vmatmul.mubr.bf16.gmra.mxu0 %v3112
        %v3226 = vpop.f32.mrf.mxu0
        %v3227 = vadd.f32 0.0, %v3226
        %v3228 = vpop.f32.mrf.mxu0
        %v3229 = vpop.f32.mrf.mxu0
        %v3230 = vadd.f32 0.0, %v3229
        %v3231 = vpop.f32.mrf.mxu0
        %3232 = vmatprep.mubr.bf16.mxu0 0
        %3233 = vmatmul.mubr.bf16.gmra.mxu0 %v3113
        %v3234 = vpop.f32.mrf.mxu0
        %v3235 = vadd.f32 0.0, %v3234
        %v3236 = vpop.f32.mrf.mxu0
        %v3237 = vpop.f32.mrf.mxu0
        %v3238 = vadd.f32 0.0, %v3237
        %v3239 = vpop.f32.mrf.mxu0
        %3240 = vmatprep.mubr.bf16.mxu0 0
        %3241 = vmatmul.mubr.bf16.gmra.mxu0 %v3114
        %v3242 = vpop.f32.mrf.mxu0
        %v3243 = vadd.f32 0.0, %v3242
        %v3244 = vpop.f32.mrf.mxu0
        %v3245 = vpop.f32.mrf.mxu0
        %v3246 = vadd.f32 0.0, %v3245
        %v3247 = vpop.f32.mrf.mxu0
        %3248 = vmatprep.mubr.bf16.mxu0 0
        %3249 = vmatmul.mubr.bf16.gmra.mxu0 %v3115
        %v3250 = vpop.f32.mrf.mxu0
        %v3251 = vadd.f32 0.0, %v3250
        %v3252 = vpop.f32.mrf.mxu0
        %v3253 = vpop.f32.mrf.mxu0
        %v3254 = vadd.f32 0.0, %v3253
        %v3255 = vpop.f32.mrf.mxu0
        %3256 = vmatprep.mubr.bf16.mxu0 0
        %3257 = vmatmul.mubr.bf16.gmra.mxu0 %v3116
        %v3258 = vpop.f32.mrf.mxu0
        %v3259 = vadd.f32 0.0, %v3258
        %v3260 = vpop.f32.mrf.mxu0
        %v3261 = vpop.f32.mrf.mxu0
        %v3262 = vadd.f32 0.0, %v3261
        %v3263 = vpop.f32.mrf.mxu0
        %3264 = vmatprep.mubr.bf16.mxu0 0
        %3265 = vmatmul.mubr.bf16.gmra.mxu0 %v3117
        %v3266 = vpop.f32.mrf.mxu0
        %v3267 = vadd.f32 0.0, %v3266
        %v3268 = vpop.f32.mrf.mxu0
        %v3269 = vpop.f32.mrf.mxu0
        %v3270 = vadd.f32 0.0, %v3269
        %v3271 = vpop.f32.mrf.mxu0
        %3272 = vmatprep.mubr.bf16.mxu0 0
        %3273 = vmatmul.mubr.bf16.gmra.mxu0 %v3118
        %v3274 = vpop.f32.mrf.mxu0
        %v3275 = vadd.f32 0.0, %v3274
        %v3276 = vpop.f32.mrf.mxu0
        %v3277 = vpop.f32.mrf.mxu0
        %v3278 = vadd.f32 0.0, %v3277
        %v3279 = vpop.f32.mrf.mxu0
        %3280 = vmatprep.mubr.bf16.mxu0 0
        %3281 = vmatmul.mubr.bf16.gmra.mxu0 %v3119
        %v3282 = vpop.f32.mrf.mxu0
        %v3283 = vadd.f32 0.0, %v3282
        %v3284 = vpop.f32.mrf.mxu0
        %v3285 = vpop.f32.mrf.mxu0
        %v3286 = vadd.f32 0.0, %v3285
        %v3287 = vpop.f32.mrf.mxu0
        %3288 = vmatprep.mubr.bf16.mxu0 0
        %3289 = vmatmul.mubr.bf16.gmra.mxu0 %v3120
        %v3290 = vpop.f32.mrf.mxu0
        %v3291 = vadd.f32 0.0, %v3290
        %v3292 = vpop.f32.mrf.mxu0
        %v3293 = vpop.f32.mrf.mxu0
        %v3294 = vadd.f32 0.0, %v3293
        %v3295 = vpop.f32.mrf.mxu0
        %3296 = vmatprep.mubr.bf16.mxu0 0
        %3297 = vmatmul.mubr.bf16.gmra.mxu0 %v3121
        %v3298 = vpop.f32.mrf.mxu0
        %v3299 = vadd.f32 0.0, %v3298
        %v3300 = vpop.f32.mrf.mxu0
        %v3301 = vpop.f32.mrf.mxu0
        %v3302 = vadd.f32 0.0, %v3301
        %v3303 = vpop.f32.mrf.mxu0
        %3304 = vmatprep.mubr.bf16.mxu0 0
        %3305 = vmatmul.mubr.bf16.gmra.mxu0 %v3122
        %v3306 = vpop.f32.mrf.mxu0
        %v3307 = vadd.f32 0.0, %v3306
        %v3308 = vpop.f32.mrf.mxu0
        %v3309 = vpop.f32.mrf.mxu0
        %v3310 = vadd.f32 0.0, %v3309
        %v3311 = vpop.f32.mrf.mxu0
        %3312 = vmatprep.mubr.bf16.mxu0 0
        %3313 = vmatmul.mubr.bf16.gmra.mxu0 %v3123
        %v3314 = vpop.f32.mrf.mxu0
        %v3315 = vadd.f32 0.0, %v3314
        %v3316 = vpop.f32.mrf.mxu0
        %v3317 = vpop.f32.mrf.mxu0
        %v3318 = vadd.f32 0.0, %v3317
        %v3319 = vpop.f32.mrf.mxu0
        %3320 = vmatprep.mubr.bf16.mxu0 0
        %3321 = vmatmul.mubr.bf16.gmra.mxu0 %v3124
        %v3322 = vpop.f32.mrf.mxu0
        %v3323 = vadd.f32 0.0, %v3322
        %v3324 = vpop.f32.mrf.mxu0
        %v3325 = vpop.f32.mrf.mxu0
        %v3326 = vadd.f32 0.0, %v3325
        %v3327 = vpop.f32.mrf.mxu0
        %3328 = vmatprep.mubr.bf16.mxu0 0
        %3329 = vmatmul.mubr.bf16.gmra.mxu0 %v3125
        %v3330 = vpop.f32.mrf.mxu0
        %v3331 = vadd.f32 0.0, %v3330
        %v3332 = vpop.f32.mrf.mxu0
        %v3333 = vpop.f32.mrf.mxu0
        %v3334 = vadd.f32 0.0, %v3333
        %v3335 = vpop.f32.mrf.mxu0
        %3336 = vmatprep.mubr.bf16.mxu0 0
        %3337 = vmatmul.mubr.bf16.gmra.mxu0 %v3126
        %v3338 = vpop.f32.mrf.mxu0
        %v3339 = vadd.f32 0.0, %v3338
        %v3340 = vpop.f32.mrf.mxu0
        %v3341 = vpop.f32.mrf.mxu0
        %v3342 = vadd.f32 0.0, %v3341
        %v3343 = vpop.f32.mrf.mxu0
        %3344 = vmatprep.mubr.bf16.mxu0 0
        %3345 = vmatmul.mubr.bf16.gmra.mxu0 %v3127
        %v3346 = vpop.f32.mrf.mxu0
        %v3347 = vadd.f32 0.0, %v3346
        %v3348 = vpop.f32.mrf.mxu0
        %v3349 = vpop.f32.mrf.mxu0
        %v3350 = vadd.f32 0.0, %v3349
        %v3351 = vpop.f32.mrf.mxu0
        %3352 = vdwg.mxu0
        %v3353 = vadd.f32 %v2855, %v3227
        %v3354 = vadd.f32 %v2856, %v3230
        %v3355 = vadd.f32 %v2857, %v3235
        %v3356 = vadd.f32 %v2858, %v3238
        %v3357 = vadd.f32 %v2859, %v3243
        %v3358 = vadd.f32 %v2860, %v3246
        %v3359 = vadd.f32 %v2861, %v3251
        %v3360 = vadd.f32 %v2862, %v3254
        %v3361 = vadd.f32 %v2863, %v3259
        %v3362 = vadd.f32 %v2864, %v3262
        %v3363 = vadd.f32 %v2865, %v3267
        %v3364 = vadd.f32 %v2866, %v3270
        %v3365 = vadd.f32 %v2867, %v3275
        %v3366 = vadd.f32 %v2868, %v3278
        %v3367 = vadd.f32 %v2869, %v3283
        %v3368 = vadd.f32 %v2870, %v3286
        %v3369 = vadd.f32 %v2871, %v3291
        %v3370 = vadd.f32 %v2872, %v3294
        %v3371 = vadd.f32 %v2873, %v3299
        %v3372 = vadd.f32 %v2874, %v3302
        %v3373 = vadd.f32 %v2875, %v3307
        %v3374 = vadd.f32 %v2876, %v3310
        %v3375 = vadd.f32 %v2877, %v3315
        %v3376 = vadd.f32 %v2878, %v3318
        %v3377 = vadd.f32 %v2879, %v3323
        %v3378 = vadd.f32 %v2880, %v3326
        %v3379 = vadd.f32 %v2881, %v3331
        %v3380 = vadd.f32 %v2882, %v3334
        %v3381 = vadd.f32 %v2883, %v3339
        %v3382 = vadd.f32 %v2884, %v3342
        %v3383 = vadd.f32 %v2885, %v3347
        %v3384 = vadd.f32 %v2886, %v3350
        %s3385 = scalar_lea.vmem %s206, 24
        %v3386 = vld [vmem:[%s3385] sm:$0xf]
        %v3387 = vld [vmem:[%s3385 + $0x4] sm:$0xf]
        %v3388 = vld [vmem:[%s3385 + $0xc] sm:$0xf]
        %v3389 = vld [vmem:[%s3385 + $0x10] sm:$0xf]
        %v3390 = vld [vmem:[%s3385 + $0x18] sm:$0xf]
        %v3391 = vld [vmem:[%s3385 + $0x1c] sm:$0xf]
        %v3392 = vld [vmem:[%s3385 + $0x24] sm:$0xf]
        %v3393 = vld [vmem:[%s3385 + $0x28] sm:$0xf]
        %v3394 = vld [vmem:[%s3385 + $0x30] sm:$0xf]
        %v3395 = vld [vmem:[%s3385 + $0x34] sm:$0xf]
        %v3396 = vld [vmem:[%s3385 + $0x3c] sm:$0xf]
        %v3397 = vld [vmem:[%s3385 + $0x40] sm:$0xf]
        %v3398 = vld [vmem:[%s3385 + $0x48] sm:$0xf]
        %v3399 = vld [vmem:[%s3385 + $0x4c] sm:$0xf]
        %v3400 = vld [vmem:[%s3385 + $0x54] sm:$0xf]
        %v3401 = vld [vmem:[%s3385 + $0x58] sm:$0xf]
        %v3402 = vld [vmem:[%s3385 + $0x60] sm:$0xf]
        %v3403 = vld [vmem:[%s3385 + $0x64] sm:$0xf]
        %v3404 = vld [vmem:[%s3385 + $0x6c] sm:$0xf]
        %v3405 = vld [vmem:[%s3385 + $0x70] sm:$0xf]
        %v3406 = vld [vmem:[%s3385 + $0x78] sm:$0xf]
        %v3407 = vld [vmem:[%s3385 + $0x7c] sm:$0xf]
        %v3408 = vld [vmem:[%s3385 + $0x84] sm:$0xf]
        %v3409 = vld [vmem:[%s3385 + $0x88] sm:$0xf]
        %v3410 = vld [vmem:[%s3385 + $0x90] sm:$0xf]
        %v3411 = vld [vmem:[%s3385 + $0x94] sm:$0xf]
        %v3412 = vld [vmem:[%s3385 + $0x9c] sm:$0xf]
        %v3413 = vld [vmem:[%s3385 + $0xa0] sm:$0xf]
        %v3414 = vld [vmem:[%s3385 + $0xa8] sm:$0xf]
        %v3415 = vld [vmem:[%s3385 + $0xac] sm:$0xf]
        %v3416 = vld [vmem:[%s3385 + $0xb4] sm:$0xf]
        %v3417 = vld [vmem:[%s3385 + $0xb8] sm:$0xf]
        %s3418 = scalar_lea.vmem %s210, 384
        %v3419 = vld [vmem:[%s3418] sm:$0xf]
        %v3420 = vld [vmem:[%s3418 + $0x4] sm:$0xf]
        %v3421 = vld [vmem:[%s3418 + $0x8] sm:$0xf]
        %v3422 = vld [vmem:[%s3418 + $0xc] sm:$0xf]
        %v3423 = vld [vmem:[%s3418 + $0x10] sm:$0xf]
        %v3424 = vld [vmem:[%s3418 + $0x14] sm:$0xf]
        %v3425 = vld [vmem:[%s3418 + $0x18] sm:$0xf]
        %v3426 = vld [vmem:[%s3418 + $0x1c] sm:$0xf]
        %v3427 = vld [vmem:[%s3418 + $0x20] sm:$0xf]
        %v3428 = vld [vmem:[%s3418 + $0x24] sm:$0xf]
        %v3429 = vld [vmem:[%s3418 + $0x28] sm:$0xf]
        %v3430 = vld [vmem:[%s3418 + $0x2c] sm:$0xf]
        %v3431 = vld [vmem:[%s3418 + $0x30] sm:$0xf]
        %v3432 = vld [vmem:[%s3418 + $0x34] sm:$0xf]
        %v3433 = vld [vmem:[%s3418 + $0x38] sm:$0xf]
        %v3434 = vld [vmem:[%s3418 + $0x3c] sm:$0xf]
        %v3467 = vunpack.c.l.b16 %v3386
        %v3468 = vunpack.c.l.b16 %v3387
        %v3469 = vunpack.c.l.b16 %v3388
        %v3470 = vunpack.c.l.b16 %v3389
        %v3471 = vunpack.c.l.b16 %v3390
        %v3472 = vunpack.c.l.b16 %v3391
        %v3473 = vunpack.c.l.b16 %v3392
        %v3474 = vunpack.c.l.b16 %v3393
        %v3475 = vunpack.c.l.b16 %v3394
        %v3476 = vunpack.c.l.b16 %v3395
        %v3477 = vunpack.c.l.b16 %v3396
        %v3478 = vunpack.c.l.b16 %v3397
        %v3479 = vunpack.c.l.b16 %v3398
        %v3480 = vunpack.c.l.b16 %v3399
        %v3481 = vunpack.c.l.b16 %v3400
        %v3482 = vunpack.c.l.b16 %v3401
        %v3483 = vunpack.c.l.b16 %v3402
        %v3484 = vunpack.c.l.b16 %v3403
        %v3485 = vunpack.c.l.b16 %v3404
        %v3486 = vunpack.c.l.b16 %v3405
        %v3487 = vunpack.c.l.b16 %v3406
        %v3488 = vunpack.c.l.b16 %v3407
        %v3489 = vunpack.c.l.b16 %v3408
        %v3490 = vunpack.c.l.b16 %v3409
        %v3491 = vunpack.c.l.b16 %v3410
        %v3492 = vunpack.c.l.b16 %v3411
        %v3493 = vunpack.c.l.b16 %v3412
        %v3494 = vunpack.c.l.b16 %v3413
        %v3495 = vunpack.c.l.b16 %v3414
        %v3496 = vunpack.c.l.b16 %v3415
        %v3497 = vunpack.c.l.b16 %v3416
        %v3498 = vunpack.c.l.b16 %v3417
        %v3499 = vpack.c.b16 %v3468, %v3467
        %v3500 = vpack.c.b16 %v3470, %v3469
        %v3501 = vpack.c.b16 %v3472, %v3471
        %v3502 = vpack.c.b16 %v3474, %v3473
        %v3503 = vpack.c.b16 %v3476, %v3475
        %v3504 = vpack.c.b16 %v3478, %v3477
        %v3505 = vpack.c.b16 %v3480, %v3479
        %v3506 = vpack.c.b16 %v3482, %v3481
        %v3507 = vpack.c.b16 %v3484, %v3483
        %v3508 = vpack.c.b16 %v3486, %v3485
        %v3509 = vpack.c.b16 %v3488, %v3487
        %v3510 = vpack.c.b16 %v3490, %v3489
        %v3511 = vpack.c.b16 %v3492, %v3491
        %v3512 = vpack.c.b16 %v3494, %v3493
        %v3513 = vpack.c.b16 %v3496, %v3495
        %v3514 = vpack.c.b16 %v3498, %v3497
        %v3547 = vunpack.c.l.b16 %v3419
        %v3548 = vunpack.c.l.b16 %v3420
        %v3549 = vunpack.c.l.b16 %v3421
        %v3550 = vunpack.c.l.b16 %v3422
        %v3551 = vunpack.c.l.b16 %v3423
        %v3552 = vunpack.c.l.b16 %v3424
        %v3553 = vunpack.c.l.b16 %v3425
        %v3554 = vunpack.c.l.b16 %v3426
        %v3555 = vunpack.c.l.b16 %v3427
        %v3556 = vunpack.c.l.b16 %v3428
        %v3557 = vunpack.c.l.b16 %v3429
        %v3558 = vunpack.c.l.b16 %v3430
        %v3559 = vunpack.c.l.b16 %v3431
        %v3560 = vunpack.c.l.b16 %v3432
        %v3561 = vunpack.c.l.b16 %v3433
        %v3562 = vunpack.c.l.b16 %v3434
        %v3563 = vpack.c.b16 %v3548, %v3547
        %v3564 = vpack.c.b16 %v3550, %v3549
        %v3565 = vpack.c.b16 %v3552, %v3551
        %v3566 = vpack.c.b16 %v3554, %v3553
        %v3567 = vpack.c.b16 %v3556, %v3555
        %v3568 = vpack.c.b16 %v3558, %v3557
        %v3569 = vpack.c.b16 %v3560, %v3559
        %v3570 = vpack.c.b16 %v3562, %v3561
        %3579 = vmatprep.subr.bf16.mxu0 0
        %3580 = vmatpush1.bf16.msra.mxu0 %v3570
        %3581 = vmatprep.subr.bf16.mxu0 0
        %3582 = vmatpush1.bf16.msra.mxu0 %v3569
        %3583 = vmatprep.subr.bf16.mxu0 0
        %3584 = vmatpush1.bf16.msra.mxu0 %v3568
        %3585 = vmatprep.subr.bf16.mxu0 0
        %3586 = vmatpush1.bf16.msra.mxu0 %v3567
        %3587 = vmatprep.subr.bf16.mxu0 0
        %3588 = vmatpush1.bf16.msra.mxu0 %v3566
        %3589 = vmatprep.subr.bf16.mxu0 0
        %3590 = vmatpush1.bf16.msra.mxu0 %v3565
        %3591 = vmatprep.subr.bf16.mxu0 0
        %3592 = vmatpush1.bf16.msra.mxu0 %v3564
        %3593 = vmatprep.subr.bf16.mxu0 0
        %3594 = vmatpush1.bf16.msra.mxu0 %v3563
        %3595 = vmatprep.subr.bf16.mxu0 0
        %3596 = vmatpush2.bf16.msra.mxu0 0
        %3597 = vmatprep.subr.bf16.mxu0 0
        %3598 = vmatpush2.bf16.msra.mxu0 0
        %3599 = vmatprep.subr.bf16.mxu0 0
        %3600 = vmatpush2.bf16.msra.mxu0 0
        %3601 = vmatprep.subr.bf16.mxu0 0
        %3602 = vmatpush2.bf16.msra.mxu0 0
        %3603 = vmatprep.subr.bf16.mxu0 0
        %3604 = vmatpush2.bf16.msra.mxu0 0
        %3605 = vmatprep.subr.bf16.mxu0 0
        %3606 = vmatpush2.bf16.msra.mxu0 0
        %3607 = vmatprep.subr.bf16.mxu0 0
        %3608 = vmatpush2.bf16.msra.mxu0 0
        %3609 = vmatprep.subr.bf16.mxu0 0
        %3610 = vmatpush2.bf16.msra.mxu0 0
        %3611 = vmatprep.mubr.bf16.mxu0 0
        %3612 = vmatmul.mubr.bf16.gmra.mxu0 %v3499
        %v3613 = vpop.f32.mrf.mxu0
        %v3614 = vadd.f32 0.0, %v3613
        %v3615 = vpop.f32.mrf.mxu0
        %v3616 = vpop.f32.mrf.mxu0
        %v3617 = vadd.f32 0.0, %v3616
        %v3618 = vpop.f32.mrf.mxu0
        %3619 = vmatprep.mubr.bf16.mxu0 0
        %3620 = vmatmul.mubr.bf16.gmra.mxu0 %v3500
        %v3621 = vpop.f32.mrf.mxu0
        %v3622 = vadd.f32 0.0, %v3621
        %v3623 = vpop.f32.mrf.mxu0
        %v3624 = vpop.f32.mrf.mxu0
        %v3625 = vadd.f32 0.0, %v3624
        %v3626 = vpop.f32.mrf.mxu0
        %3627 = vmatprep.mubr.bf16.mxu0 0
        %3628 = vmatmul.mubr.bf16.gmra.mxu0 %v3501
        %v3629 = vpop.f32.mrf.mxu0
        %v3630 = vadd.f32 0.0, %v3629
        %v3631 = vpop.f32.mrf.mxu0
        %v3632 = vpop.f32.mrf.mxu0
        %v3633 = vadd.f32 0.0, %v3632
        %v3634 = vpop.f32.mrf.mxu0
        %3635 = vmatprep.mubr.bf16.mxu0 0
        %3636 = vmatmul.mubr.bf16.gmra.mxu0 %v3502
        %v3637 = vpop.f32.mrf.mxu0
        %v3638 = vadd.f32 0.0, %v3637
        %v3639 = vpop.f32.mrf.mxu0
        %v3640 = vpop.f32.mrf.mxu0
        %v3641 = vadd.f32 0.0, %v3640
        %v3642 = vpop.f32.mrf.mxu0
        %3643 = vmatprep.mubr.bf16.mxu0 0
        %3644 = vmatmul.mubr.bf16.gmra.mxu0 %v3503
        %v3645 = vpop.f32.mrf.mxu0
        %v3646 = vadd.f32 0.0, %v3645
        %v3647 = vpop.f32.mrf.mxu0
        %v3648 = vpop.f32.mrf.mxu0
        %v3649 = vadd.f32 0.0, %v3648
        %v3650 = vpop.f32.mrf.mxu0
        %3651 = vmatprep.mubr.bf16.mxu0 0
        %3652 = vmatmul.mubr.bf16.gmra.mxu0 %v3504
        %v3653 = vpop.f32.mrf.mxu0
        %v3654 = vadd.f32 0.0, %v3653
        %v3655 = vpop.f32.mrf.mxu0
        %v3656 = vpop.f32.mrf.mxu0
        %v3657 = vadd.f32 0.0, %v3656
        %v3658 = vpop.f32.mrf.mxu0
        %3659 = vmatprep.mubr.bf16.mxu0 0
        %3660 = vmatmul.mubr.bf16.gmra.mxu0 %v3505
        %v3661 = vpop.f32.mrf.mxu0
        %v3662 = vadd.f32 0.0, %v3661
        %v3663 = vpop.f32.mrf.mxu0
        %v3664 = vpop.f32.mrf.mxu0
        %v3665 = vadd.f32 0.0, %v3664
        %v3666 = vpop.f32.mrf.mxu0
        %3667 = vmatprep.mubr.bf16.mxu0 0
        %3668 = vmatmul.mubr.bf16.gmra.mxu0 %v3506
        %v3669 = vpop.f32.mrf.mxu0
        %v3670 = vadd.f32 0.0, %v3669
        %v3671 = vpop.f32.mrf.mxu0
        %v3672 = vpop.f32.mrf.mxu0
        %v3673 = vadd.f32 0.0, %v3672
        %v3674 = vpop.f32.mrf.mxu0
        %3675 = vmatprep.mubr.bf16.mxu0 0
        %3676 = vmatmul.mubr.bf16.gmra.mxu0 %v3507
        %v3677 = vpop.f32.mrf.mxu0
        %v3678 = vadd.f32 0.0, %v3677
        %v3679 = vpop.f32.mrf.mxu0
        %v3680 = vpop.f32.mrf.mxu0
        %v3681 = vadd.f32 0.0, %v3680
        %v3682 = vpop.f32.mrf.mxu0
        %3683 = vmatprep.mubr.bf16.mxu0 0
        %3684 = vmatmul.mubr.bf16.gmra.mxu0 %v3508
        %v3685 = vpop.f32.mrf.mxu0
        %v3686 = vadd.f32 0.0, %v3685
        %v3687 = vpop.f32.mrf.mxu0
        %v3688 = vpop.f32.mrf.mxu0
        %v3689 = vadd.f32 0.0, %v3688
        %v3690 = vpop.f32.mrf.mxu0
        %3691 = vmatprep.mubr.bf16.mxu0 0
        %3692 = vmatmul.mubr.bf16.gmra.mxu0 %v3509
        %v3693 = vpop.f32.mrf.mxu0
        %v3694 = vadd.f32 0.0, %v3693
        %v3695 = vpop.f32.mrf.mxu0
        %v3696 = vpop.f32.mrf.mxu0
        %v3697 = vadd.f32 0.0, %v3696
        %v3698 = vpop.f32.mrf.mxu0
        %3699 = vmatprep.mubr.bf16.mxu0 0
        %3700 = vmatmul.mubr.bf16.gmra.mxu0 %v3510
        %v3701 = vpop.f32.mrf.mxu0
        %v3702 = vadd.f32 0.0, %v3701
        %v3703 = vpop.f32.mrf.mxu0
        %v3704 = vpop.f32.mrf.mxu0
        %v3705 = vadd.f32 0.0, %v3704
        %v3706 = vpop.f32.mrf.mxu0
        %3707 = vmatprep.mubr.bf16.mxu0 0
        %3708 = vmatmul.mubr.bf16.gmra.mxu0 %v3511
        %v3709 = vpop.f32.mrf.mxu0
        %v3710 = vadd.f32 0.0, %v3709
        %v3711 = vpop.f32.mrf.mxu0
        %v3712 = vpop.f32.mrf.mxu0
        %v3713 = vadd.f32 0.0, %v3712
        %v3714 = vpop.f32.mrf.mxu0
        %3715 = vmatprep.mubr.bf16.mxu0 0
        %3716 = vmatmul.mubr.bf16.gmra.mxu0 %v3512
        %v3717 = vpop.f32.mrf.mxu0
        %v3718 = vadd.f32 0.0, %v3717
        %v3719 = vpop.f32.mrf.mxu0
        %v3720 = vpop.f32.mrf.mxu0
        %v3721 = vadd.f32 0.0, %v3720
        %v3722 = vpop.f32.mrf.mxu0
        %3723 = vmatprep.mubr.bf16.mxu0 0
        %3724 = vmatmul.mubr.bf16.gmra.mxu0 %v3513
        %v3725 = vpop.f32.mrf.mxu0
        %v3726 = vadd.f32 0.0, %v3725
        %v3727 = vpop.f32.mrf.mxu0
        %v3728 = vpop.f32.mrf.mxu0
        %v3729 = vadd.f32 0.0, %v3728
        %v3730 = vpop.f32.mrf.mxu0
        %3731 = vmatprep.mubr.bf16.mxu0 0
        %3732 = vmatmul.mubr.bf16.gmra.mxu0 %v3514
        %v3733 = vpop.f32.mrf.mxu0
        %v3734 = vadd.f32 0.0, %v3733
        %v3735 = vpop.f32.mrf.mxu0
        %v3736 = vpop.f32.mrf.mxu0
        %v3737 = vadd.f32 0.0, %v3736
        %v3738 = vpop.f32.mrf.mxu0
        %3739 = vdwg.mxu0
        %v3740 = vadd.f32 %v3353, %v3614
        %v3741 = vadd.f32 %v3354, %v3617
        %v3742 = vadd.f32 %v3355, %v3622
        %v3743 = vadd.f32 %v3356, %v3625
        %v3744 = vadd.f32 %v3357, %v3630
        %v3745 = vadd.f32 %v3358, %v3633
        %v3746 = vadd.f32 %v3359, %v3638
        %v3747 = vadd.f32 %v3360, %v3641
        %v3748 = vadd.f32 %v3361, %v3646
        %v3749 = vadd.f32 %v3362, %v3649
        %v3750 = vadd.f32 %v3363, %v3654
        %v3751 = vadd.f32 %v3364, %v3657
        %v3752 = vadd.f32 %v3365, %v3662
        %v3753 = vadd.f32 %v3366, %v3665
        %v3754 = vadd.f32 %v3367, %v3670
        %v3755 = vadd.f32 %v3368, %v3673
        %v3756 = vadd.f32 %v3369, %v3678
        %v3757 = vadd.f32 %v3370, %v3681
        %v3758 = vadd.f32 %v3371, %v3686
        %v3759 = vadd.f32 %v3372, %v3689
        %v3760 = vadd.f32 %v3373, %v3694
        %v3761 = vadd.f32 %v3374, %v3697
        %v3762 = vadd.f32 %v3375, %v3702
        %v3763 = vadd.f32 %v3376, %v3705
        %v3764 = vadd.f32 %v3377, %v3710
        %v3765 = vadd.f32 %v3378, %v3713
        %v3766 = vadd.f32 %v3379, %v3718
        %v3767 = vadd.f32 %v3380, %v3721
        %v3768 = vadd.f32 %v3381, %v3726
        %v3769 = vadd.f32 %v3382, %v3729
        %v3770 = vadd.f32 %v3383, %v3734
        %v3771 = vadd.f32 %v3384, %v3737
        %v3772 = vld [vmem:[%s3385] sm:$0xf]
        %v3773 = vld [vmem:[%s3385 + $0x4] sm:$0xf]
        %v3774 = vld [vmem:[%s3385 + $0x8] sm:$0x1]
        %v3775 = vld [vmem:[%s3385 + $0xc] sm:$0xf]
        %v3776 = vld [vmem:[%s3385 + $0x10] sm:$0xf]
        %v3777 = vld [vmem:[%s3385 + $0x14] sm:$0x1]
        %v3778 = vld [vmem:[%s3385 + $0x18] sm:$0xf]
        %v3779 = vld [vmem:[%s3385 + $0x1c] sm:$0xf]
        %v3780 = vld [vmem:[%s3385 + $0x20] sm:$0x1]
        %v3781 = vld [vmem:[%s3385 + $0x24] sm:$0xf]
        %v3782 = vld [vmem:[%s3385 + $0x28] sm:$0xf]
        %v3783 = vld [vmem:[%s3385 + $0x2c] sm:$0x1]
        %v3784 = vld [vmem:[%s3385 + $0x30] sm:$0xf]
        %v3785 = vld [vmem:[%s3385 + $0x34] sm:$0xf]
        %v3786 = vld [vmem:[%s3385 + $0x38] sm:$0x1]
        %v3787 = vld [vmem:[%s3385 + $0x3c] sm:$0xf]
        %v3788 = vld [vmem:[%s3385 + $0x40] sm:$0xf]
        %v3789 = vld [vmem:[%s3385 + $0x44] sm:$0x1]
        %v3790 = vld [vmem:[%s3385 + $0x48] sm:$0xf]
        %v3791 = vld [vmem:[%s3385 + $0x4c] sm:$0xf]
        %v3792 = vld [vmem:[%s3385 + $0x50] sm:$0x1]
        %v3793 = vld [vmem:[%s3385 + $0x54] sm:$0xf]
        %v3794 = vld [vmem:[%s3385 + $0x58] sm:$0xf]
        %v3795 = vld [vmem:[%s3385 + $0x5c] sm:$0x1]
        %v3796 = vld [vmem:[%s3385 + $0x60] sm:$0xf]
        %v3797 = vld [vmem:[%s3385 + $0x64] sm:$0xf]
        %v3798 = vld [vmem:[%s3385 + $0x68] sm:$0x1]
        %v3799 = vld [vmem:[%s3385 + $0x6c] sm:$0xf]
        %v3800 = vld [vmem:[%s3385 + $0x70] sm:$0xf]
        %v3801 = vld [vmem:[%s3385 + $0x74] sm:$0x1]
        %v3802 = vld [vmem:[%s3385 + $0x78] sm:$0xf]
        %v3803 = vld [vmem:[%s3385 + $0x7c] sm:$0xf]
        %v3804 = vld [vmem:[%s3385 + $0x80] sm:$0x1]
        %v3805 = vld [vmem:[%s3385 + $0x84] sm:$0xf]
        %v3806 = vld [vmem:[%s3385 + $0x88] sm:$0xf]
        %v3807 = vld [vmem:[%s3385 + $0x8c] sm:$0x1]
        %v3808 = vld [vmem:[%s3385 + $0x90] sm:$0xf]
        %v3809 = vld [vmem:[%s3385 + $0x94] sm:$0xf]
        %v3810 = vld [vmem:[%s3385 + $0x98] sm:$0x1]
        %v3811 = vld [vmem:[%s3385 + $0x9c] sm:$0xf]
        %v3812 = vld [vmem:[%s3385 + $0xa0] sm:$0xf]
        %v3813 = vld [vmem:[%s3385 + $0xa4] sm:$0x1]
        %v3814 = vld [vmem:[%s3385 + $0xa8] sm:$0xf]
        %v3815 = vld [vmem:[%s3385 + $0xac] sm:$0xf]
        %v3816 = vld [vmem:[%s3385 + $0xb0] sm:$0x1]
        %v3817 = vld [vmem:[%s3385 + $0xb4] sm:$0xf]
        %v3818 = vld [vmem:[%s3385 + $0xb8] sm:$0xf]
        %v3819 = vld [vmem:[%s3385 + $0xbc] sm:$0x1]
        %v3821 = vshrl.u32 %v3772, 16
        %v3823 = vrot.slane %v3821, 4
        %v3824 = vshll.u32 %v3772, 16
        %v3826 = vrot.slane %v3824, 5
        %v3827 = vor.u32 %v3823, %v3826
        %v3828 = vrot.slane %v3827, 4
        %v3830 = vshll.u32 %v3773, 16
        %v3832 = vrot.slane %v3830, 5
        %v3833 = vsel %vm281, %v3828, %v3832
        %v3834 = vshrl.u32 %v3773, 16
        %v3836 = vrot.slane %v3834, 4
        %v3837 = vor.u32 %v3836, %v3832
        %v3838 = vrot.slane %v3837, 4
        %v3840 = vshll.u32 %v3774, 16
        %v3842 = vrot.slane %v3840, 5
        %v3843 = vsel %vm281, %v3838, %v3842
        %v3845 = vshrl.u32 %v3775, 16
        %v3847 = vrot.slane %v3845, 4
        %v3848 = vshll.u32 %v3775, 16
        %v3850 = vrot.slane %v3848, 5
        %v3851 = vor.u32 %v3847, %v3850
        %v3852 = vrot.slane %v3851, 4
        %v3854 = vshll.u32 %v3776, 16
        %v3856 = vrot.slane %v3854, 5
        %v3857 = vsel %vm281, %v3852, %v3856
        %v3858 = vshrl.u32 %v3776, 16
        %v3860 = vrot.slane %v3858, 4
        %v3861 = vor.u32 %v3860, %v3856
        %v3862 = vrot.slane %v3861, 4
        %v3864 = vshll.u32 %v3777, 16
        %v3866 = vrot.slane %v3864, 5
        %v3867 = vsel %vm281, %v3862, %v3866
        %v3869 = vshrl.u32 %v3778, 16
        %v3871 = vrot.slane %v3869, 4
        %v3872 = vshll.u32 %v3778, 16
        %v3874 = vrot.slane %v3872, 5
        %v3875 = vor.u32 %v3871, %v3874
        %v3876 = vrot.slane %v3875, 4
        %v3878 = vshll.u32 %v3779, 16
        %v3880 = vrot.slane %v3878, 5
        %v3881 = vsel %vm281, %v3876, %v3880
        %v3882 = vshrl.u32 %v3779, 16
        %v3884 = vrot.slane %v3882, 4
        %v3885 = vor.u32 %v3884, %v3880
        %v3886 = vrot.slane %v3885, 4
        %v3888 = vshll.u32 %v3780, 16
        %v3890 = vrot.slane %v3888, 5
        %v3891 = vsel %vm281, %v3886, %v3890
        %v3893 = vshrl.u32 %v3781, 16
        %v3895 = vrot.slane %v3893, 4
        %v3896 = vshll.u32 %v3781, 16
        %v3898 = vrot.slane %v3896, 5
        %v3899 = vor.u32 %v3895, %v3898
        %v3900 = vrot.slane %v3899, 4
        %v3902 = vshll.u32 %v3782, 16
        %v3904 = vrot.slane %v3902, 5
        %v3905 = vsel %vm281, %v3900, %v3904
        %v3906 = vshrl.u32 %v3782, 16
        %v3908 = vrot.slane %v3906, 4
        %v3909 = vor.u32 %v3908, %v3904
        %v3910 = vrot.slane %v3909, 4
        %v3912 = vshll.u32 %v3783, 16
        %v3914 = vrot.slane %v3912, 5
        %v3915 = vsel %vm281, %v3910, %v3914
        %v3917 = vshrl.u32 %v3784, 16
        %v3919 = vrot.slane %v3917, 4
        %v3920 = vshll.u32 %v3784, 16
        %v3922 = vrot.slane %v3920, 5
        %v3923 = vor.u32 %v3919, %v3922
        %v3924 = vrot.slane %v3923, 4
        %v3926 = vshll.u32 %v3785, 16
        %v3928 = vrot.slane %v3926, 5
        %v3929 = vsel %vm281, %v3924, %v3928
        %v3930 = vshrl.u32 %v3785, 16
        %v3932 = vrot.slane %v3930, 4
        %v3933 = vor.u32 %v3932, %v3928
        %v3934 = vrot.slane %v3933, 4
        %v3936 = vshll.u32 %v3786, 16
        %v3938 = vrot.slane %v3936, 5
        %v3939 = vsel %vm281, %v3934, %v3938
        %v3941 = vshrl.u32 %v3787, 16
        %v3943 = vrot.slane %v3941, 4
        %v3944 = vshll.u32 %v3787, 16
        %v3946 = vrot.slane %v3944, 5
        %v3947 = vor.u32 %v3943, %v3946
        %v3948 = vrot.slane %v3947, 4
        %v3950 = vshll.u32 %v3788, 16
        %v3952 = vrot.slane %v3950, 5
        %v3953 = vsel %vm281, %v3948, %v3952
        %v3954 = vshrl.u32 %v3788, 16
        %v3956 = vrot.slane %v3954, 4
        %v3957 = vor.u32 %v3956, %v3952
        %v3958 = vrot.slane %v3957, 4
        %v3960 = vshll.u32 %v3789, 16
        %v3962 = vrot.slane %v3960, 5
        %v3963 = vsel %vm281, %v3958, %v3962
        %v3965 = vshrl.u32 %v3790, 16
        %v3967 = vrot.slane %v3965, 4
        %v3968 = vshll.u32 %v3790, 16
        %v3970 = vrot.slane %v3968, 5
        %v3971 = vor.u32 %v3967, %v3970
        %v3972 = vrot.slane %v3971, 4
        %v3974 = vshll.u32 %v3791, 16
        %v3976 = vrot.slane %v3974, 5
        %v3977 = vsel %vm281, %v3972, %v3976
        %v3978 = vshrl.u32 %v3791, 16
        %v3980 = vrot.slane %v3978, 4
        %v3981 = vor.u32 %v3980, %v3976
        %v3982 = vrot.slane %v3981, 4
        %v3984 = vshll.u32 %v3792, 16
        %v3986 = vrot.slane %v3984, 5
        %v3987 = vsel %vm281, %v3982, %v3986
        %v3989 = vshrl.u32 %v3793, 16
        %v3991 = vrot.slane %v3989, 4
        %v3992 = vshll.u32 %v3793, 16
        %v3994 = vrot.slane %v3992, 5
        %v3995 = vor.u32 %v3991, %v3994
        %v3996 = vrot.slane %v3995, 4
        %v3998 = vshll.u32 %v3794, 16
        %v4000 = vrot.slane %v3998, 5
        %v4001 = vsel %vm281, %v3996, %v4000
        %v4002 = vshrl.u32 %v3794, 16
        %v4004 = vrot.slane %v4002, 4
        %v4005 = vor.u32 %v4004, %v4000
        %v4006 = vrot.slane %v4005, 4
        %v4008 = vshll.u32 %v3795, 16
        %v4010 = vrot.slane %v4008, 5
        %v4011 = vsel %vm281, %v4006, %v4010
        %v4013 = vshrl.u32 %v3796, 16
        %v4015 = vrot.slane %v4013, 4
        %v4016 = vshll.u32 %v3796, 16
        %v4018 = vrot.slane %v4016, 5
        %v4019 = vor.u32 %v4015, %v4018
        %v4020 = vrot.slane %v4019, 4
        %v4022 = vshll.u32 %v3797, 16
        %v4024 = vrot.slane %v4022, 5
        %v4025 = vsel %vm281, %v4020, %v4024
        %v4026 = vshrl.u32 %v3797, 16
        %v4028 = vrot.slane %v4026, 4
        %v4029 = vor.u32 %v4028, %v4024
        %v4030 = vrot.slane %v4029, 4
        %v4032 = vshll.u32 %v3798, 16
        %v4034 = vrot.slane %v4032, 5
        %v4035 = vsel %vm281, %v4030, %v4034
        %v4037 = vshrl.u32 %v3799, 16
        %v4039 = vrot.slane %v4037, 4
        %v4040 = vshll.u32 %v3799, 16
        %v4042 = vrot.slane %v4040, 5
        %v4043 = vor.u32 %v4039, %v4042
        %v4044 = vrot.slane %v4043, 4
        %v4046 = vshll.u32 %v3800, 16
        %v4048 = vrot.slane %v4046, 5
        %v4049 = vsel %vm281, %v4044, %v4048
        %v4050 = vshrl.u32 %v3800, 16
        %v4052 = vrot.slane %v4050, 4
        %v4053 = vor.u32 %v4052, %v4048
        %v4054 = vrot.slane %v4053, 4
        %v4056 = vshll.u32 %v3801, 16
        %v4058 = vrot.slane %v4056, 5
        %v4059 = vsel %vm281, %v4054, %v4058
        %v4061 = vshrl.u32 %v3802, 16
        %v4063 = vrot.slane %v4061, 4
        %v4064 = vshll.u32 %v3802, 16
        %v4066 = vrot.slane %v4064, 5
        %v4067 = vor.u32 %v4063, %v4066
        %v4068 = vrot.slane %v4067, 4
        %v4070 = vshll.u32 %v3803, 16
        %v4072 = vrot.slane %v4070, 5
        %v4073 = vsel %vm281, %v4068, %v4072
        %v4074 = vshrl.u32 %v3803, 16
        %v4076 = vrot.slane %v4074, 4
        %v4077 = vor.u32 %v4076, %v4072
        %v4078 = vrot.slane %v4077, 4
        %v4080 = vshll.u32 %v3804, 16
        %v4082 = vrot.slane %v4080, 5
        %v4083 = vsel %vm281, %v4078, %v4082
        %v4085 = vshrl.u32 %v3805, 16
        %v4087 = vrot.slane %v4085, 4
        %v4088 = vshll.u32 %v3805, 16
        %v4090 = vrot.slane %v4088, 5
        %v4091 = vor.u32 %v4087, %v4090
        %v4092 = vrot.slane %v4091, 4
        %v4094 = vshll.u32 %v3806, 16
        %v4096 = vrot.slane %v4094, 5
        %v4097 = vsel %vm281, %v4092, %v4096
        %v4098 = vshrl.u32 %v3806, 16
        %v4100 = vrot.slane %v4098, 4
        %v4101 = vor.u32 %v4100, %v4096
        %v4102 = vrot.slane %v4101, 4
        %v4104 = vshll.u32 %v3807, 16
        %v4106 = vrot.slane %v4104, 5
        %v4107 = vsel %vm281, %v4102, %v4106
        %v4109 = vshrl.u32 %v3808, 16
        %v4111 = vrot.slane %v4109, 4
        %v4112 = vshll.u32 %v3808, 16
        %v4114 = vrot.slane %v4112, 5
        %v4115 = vor.u32 %v4111, %v4114
        %v4116 = vrot.slane %v4115, 4
        %v4118 = vshll.u32 %v3809, 16
        %v4120 = vrot.slane %v4118, 5
        %v4121 = vsel %vm281, %v4116, %v4120
        %v4122 = vshrl.u32 %v3809, 16
        %v4124 = vrot.slane %v4122, 4
        %v4125 = vor.u32 %v4124, %v4120
        %v4126 = vrot.slane %v4125, 4
        %v4128 = vshll.u32 %v3810, 16
        %v4130 = vrot.slane %v4128, 5
        %v4131 = vsel %vm281, %v4126, %v4130
        %v4133 = vshrl.u32 %v3811, 16
        %v4135 = vrot.slane %v4133, 4
        %v4136 = vshll.u32 %v3811, 16
        %v4138 = vrot.slane %v4136, 5
        %v4139 = vor.u32 %v4135, %v4138
        %v4140 = vrot.slane %v4139, 4
        %v4142 = vshll.u32 %v3812, 16
        %v4144 = vrot.slane %v4142, 5
        %v4145 = vsel %vm281, %v4140, %v4144
        %v4146 = vshrl.u32 %v3812, 16
        %v4148 = vrot.slane %v4146, 4
        %v4149 = vor.u32 %v4148, %v4144
        %v4150 = vrot.slane %v4149, 4
        %v4152 = vshll.u32 %v3813, 16
        %v4154 = vrot.slane %v4152, 5
        %v4155 = vsel %vm281, %v4150, %v4154
        %v4157 = vshrl.u32 %v3814, 16
        %v4159 = vrot.slane %v4157, 4
        %v4160 = vshll.u32 %v3814, 16
        %v4162 = vrot.slane %v4160, 5
        %v4163 = vor.u32 %v4159, %v4162
        %v4164 = vrot.slane %v4163, 4
        %v4166 = vshll.u32 %v3815, 16
        %v4168 = vrot.slane %v4166, 5
        %v4169 = vsel %vm281, %v4164, %v4168
        %v4170 = vshrl.u32 %v3815, 16
        %v4172 = vrot.slane %v4170, 4
        %v4173 = vor.u32 %v4172, %v4168
        %v4174 = vrot.slane %v4173, 4
        %v4176 = vshll.u32 %v3816, 16
        %v4178 = vrot.slane %v4176, 5
        %v4179 = vsel %vm281, %v4174, %v4178
        %v4181 = vshrl.u32 %v3817, 16
        %v4183 = vrot.slane %v4181, 4
        %v4184 = vshll.u32 %v3817, 16
        %v4186 = vrot.slane %v4184, 5
        %v4187 = vor.u32 %v4183, %v4186
        %v4188 = vrot.slane %v4187, 4
        %v4190 = vshll.u32 %v3818, 16
        %v4192 = vrot.slane %v4190, 5
        %v4193 = vsel %vm281, %v4188, %v4192
        %v4194 = vshrl.u32 %v3818, 16
        %v4196 = vrot.slane %v4194, 4
        %v4197 = vor.u32 %v4196, %v4192
        %v4198 = vrot.slane %v4197, 4
        %v4200 = vshll.u32 %v3819, 16
        %v4202 = vrot.slane %v4200, 5
        %v4203 = vsel %vm281, %v4198, %v4202
        %s4204 = scalar_lea.vmem %s210, 448
        %v4205 = vld [vmem:[%s4204] sm:$0xf]
        %v4206 = vld [vmem:[%s4204 + $0x4] sm:$0xf]
        %v4207 = vld [vmem:[%s4204 + $0x8] sm:$0xf]
        %v4208 = vld [vmem:[%s4204 + $0xc] sm:$0xf]
        %v4209 = vld [vmem:[%s4204 + $0x10] sm:$0xf]
        %v4210 = vld [vmem:[%s4204 + $0x14] sm:$0xf]
        %v4211 = vld [vmem:[%s4204 + $0x18] sm:$0xf]
        %v4212 = vld [vmem:[%s4204 + $0x1c] sm:$0xf]
        %v4213 = vld [vmem:[%s4204 + $0x20] sm:$0xf]
        %v4214 = vld [vmem:[%s4204 + $0x24] sm:$0xf]
        %v4215 = vld [vmem:[%s4204 + $0x28] sm:$0xf]
        %v4216 = vld [vmem:[%s4204 + $0x2c] sm:$0xf]
        %v4217 = vld [vmem:[%s4204 + $0x30] sm:$0xf]
        %v4218 = vld [vmem:[%s4204 + $0x34] sm:$0xf]
        %v4219 = vld [vmem:[%s4204 + $0x38] sm:$0xf]
        %v4220 = vld [vmem:[%s4204 + $0x3c] sm:$0xf]
        %v4221 = vunpack.c.l.b16 %v3833
        %v4222 = vunpack.c.l.b16 %v3843
        %v4223 = vunpack.c.l.b16 %v3857
        %v4224 = vunpack.c.l.b16 %v3867
        %v4225 = vunpack.c.l.b16 %v3881
        %v4226 = vunpack.c.l.b16 %v3891
        %v4227 = vunpack.c.l.b16 %v3905
        %v4228 = vunpack.c.l.b16 %v3915
        %v4229 = vunpack.c.l.b16 %v3929
        %v4230 = vunpack.c.l.b16 %v3939
        %v4231 = vunpack.c.l.b16 %v3953
        %v4232 = vunpack.c.l.b16 %v3963
        %v4233 = vunpack.c.l.b16 %v3977
        %v4234 = vunpack.c.l.b16 %v3987
        %v4235 = vunpack.c.l.b16 %v4001
        %v4236 = vunpack.c.l.b16 %v4011
        %v4237 = vunpack.c.l.b16 %v4025
        %v4238 = vunpack.c.l.b16 %v4035
        %v4239 = vunpack.c.l.b16 %v4049
        %v4240 = vunpack.c.l.b16 %v4059
        %v4241 = vunpack.c.l.b16 %v4073
        %v4242 = vunpack.c.l.b16 %v4083
        %v4243 = vunpack.c.l.b16 %v4097
        %v4244 = vunpack.c.l.b16 %v4107
        %v4245 = vunpack.c.l.b16 %v4121
        %v4246 = vunpack.c.l.b16 %v4131
        %v4247 = vunpack.c.l.b16 %v4145
        %v4248 = vunpack.c.l.b16 %v4155
        %v4249 = vunpack.c.l.b16 %v4169
        %v4250 = vunpack.c.l.b16 %v4179
        %v4251 = vunpack.c.l.b16 %v4193
        %v4252 = vunpack.c.l.b16 %v4203
        %v4253 = vpack.c.b16 %v4222, %v4221
        %v4254 = vpack.c.b16 %v4224, %v4223
        %v4255 = vpack.c.b16 %v4226, %v4225
        %v4256 = vpack.c.b16 %v4228, %v4227
        %v4257 = vpack.c.b16 %v4230, %v4229
        %v4258 = vpack.c.b16 %v4232, %v4231
        %v4259 = vpack.c.b16 %v4234, %v4233
        %v4260 = vpack.c.b16 %v4236, %v4235
        %v4261 = vpack.c.b16 %v4238, %v4237
        %v4262 = vpack.c.b16 %v4240, %v4239
        %v4263 = vpack.c.b16 %v4242, %v4241
        %v4264 = vpack.c.b16 %v4244, %v4243
        %v4265 = vpack.c.b16 %v4246, %v4245
        %v4266 = vpack.c.b16 %v4248, %v4247
        %v4267 = vpack.c.b16 %v4250, %v4249
        %v4268 = vpack.c.b16 %v4252, %v4251
        %v4301 = vunpack.c.l.b16 %v4205
        %v4302 = vunpack.c.l.b16 %v4206
        %v4303 = vunpack.c.l.b16 %v4207
        %v4304 = vunpack.c.l.b16 %v4208
        %v4305 = vunpack.c.l.b16 %v4209
        %v4306 = vunpack.c.l.b16 %v4210
        %v4307 = vunpack.c.l.b16 %v4211
        %v4308 = vunpack.c.l.b16 %v4212
        %v4309 = vunpack.c.l.b16 %v4213
        %v4310 = vunpack.c.l.b16 %v4214
        %v4311 = vunpack.c.l.b16 %v4215
        %v4312 = vunpack.c.l.b16 %v4216
        %v4313 = vunpack.c.l.b16 %v4217
        %v4314 = vunpack.c.l.b16 %v4218
        %v4315 = vunpack.c.l.b16 %v4219
        %v4316 = vunpack.c.l.b16 %v4220
        %v4317 = vpack.c.b16 %v4302, %v4301
        %v4318 = vpack.c.b16 %v4304, %v4303
        %v4319 = vpack.c.b16 %v4306, %v4305
        %v4320 = vpack.c.b16 %v4308, %v4307
        %v4321 = vpack.c.b16 %v4310, %v4309
        %v4322 = vpack.c.b16 %v4312, %v4311
        %v4323 = vpack.c.b16 %v4314, %v4313
        %v4324 = vpack.c.b16 %v4316, %v4315
        %4333 = vmatprep.subr.bf16.mxu0 0
        %4334 = vmatpush1.bf16.msra.mxu0 %v4324
        %4335 = vmatprep.subr.bf16.mxu0 0
        %4336 = vmatpush1.bf16.msra.mxu0 %v4323
        %4337 = vmatprep.subr.bf16.mxu0 0
        %4338 = vmatpush1.bf16.msra.mxu0 %v4322
        %4339 = vmatprep.subr.bf16.mxu0 0
        %4340 = vmatpush1.bf16.msra.mxu0 %v4321
        %4341 = vmatprep.subr.bf16.mxu0 0
        %4342 = vmatpush1.bf16.msra.mxu0 %v4320
        %4343 = vmatprep.subr.bf16.mxu0 0
        %4344 = vmatpush1.bf16.msra.mxu0 %v4319
        %4345 = vmatprep.subr.bf16.mxu0 0
        %4346 = vmatpush1.bf16.msra.mxu0 %v4318
        %4347 = vmatprep.subr.bf16.mxu0 0
        %4348 = vmatpush1.bf16.msra.mxu0 %v4317
        %4349 = vmatprep.subr.bf16.mxu0 0
        %4350 = vmatpush2.bf16.msra.mxu0 0
        %4351 = vmatprep.subr.bf16.mxu0 0
        %4352 = vmatpush2.bf16.msra.mxu0 0
        %4353 = vmatprep.subr.bf16.mxu0 0
        %4354 = vmatpush2.bf16.msra.mxu0 0
        %4355 = vmatprep.subr.bf16.mxu0 0
        %4356 = vmatpush2.bf16.msra.mxu0 0
        %4357 = vmatprep.subr.bf16.mxu0 0
        %4358 = vmatpush2.bf16.msra.mxu0 0
        %4359 = vmatprep.subr.bf16.mxu0 0
        %4360 = vmatpush2.bf16.msra.mxu0 0
        %4361 = vmatprep.subr.bf16.mxu0 0
        %4362 = vmatpush2.bf16.msra.mxu0 0
        %4363 = vmatprep.subr.bf16.mxu0 0
        %4364 = vmatpush2.bf16.msra.mxu0 0
        %4365 = vmatprep.mubr.bf16.mxu0 0
        %4366 = vmatmul.mubr.bf16.gmra.mxu0 %v4253
        %v4367 = vpop.f32.mrf.mxu0
        %v4368 = vadd.f32 0.0, %v4367
        %v4369 = vpop.f32.mrf.mxu0
        %v4370 = vpop.f32.mrf.mxu0
        %v4371 = vadd.f32 0.0, %v4370
        %v4372 = vpop.f32.mrf.mxu0
        %4373 = vmatprep.mubr.bf16.mxu0 0
        %4374 = vmatmul.mubr.bf16.gmra.mxu0 %v4254
        %v4375 = vpop.f32.mrf.mxu0
        %v4376 = vadd.f32 0.0, %v4375
        %v4377 = vpop.f32.mrf.mxu0
        %v4378 = vpop.f32.mrf.mxu0
        %v4379 = vadd.f32 0.0, %v4378
        %v4380 = vpop.f32.mrf.mxu0
        %4381 = vmatprep.mubr.bf16.mxu0 0
        %4382 = vmatmul.mubr.bf16.gmra.mxu0 %v4255
        %v4383 = vpop.f32.mrf.mxu0
        %v4384 = vadd.f32 0.0, %v4383
        %v4385 = vpop.f32.mrf.mxu0
        %v4386 = vpop.f32.mrf.mxu0
        %v4387 = vadd.f32 0.0, %v4386
        %v4388 = vpop.f32.mrf.mxu0
        %4389 = vmatprep.mubr.bf16.mxu0 0
        %4390 = vmatmul.mubr.bf16.gmra.mxu0 %v4256
        %v4391 = vpop.f32.mrf.mxu0
        %v4392 = vadd.f32 0.0, %v4391
        %v4393 = vpop.f32.mrf.mxu0
        %v4394 = vpop.f32.mrf.mxu0
        %v4395 = vadd.f32 0.0, %v4394
        %v4396 = vpop.f32.mrf.mxu0
        %4397 = vmatprep.mubr.bf16.mxu0 0
        %4398 = vmatmul.mubr.bf16.gmra.mxu0 %v4257
        %v4399 = vpop.f32.mrf.mxu0
        %v4400 = vadd.f32 0.0, %v4399
        %v4401 = vpop.f32.mrf.mxu0
        %v4402 = vpop.f32.mrf.mxu0
        %v4403 = vadd.f32 0.0, %v4402
        %v4404 = vpop.f32.mrf.mxu0
        %4405 = vmatprep.mubr.bf16.mxu0 0
        %4406 = vmatmul.mubr.bf16.gmra.mxu0 %v4258
        %v4407 = vpop.f32.mrf.mxu0
        %v4408 = vadd.f32 0.0, %v4407
        %v4409 = vpop.f32.mrf.mxu0
        %v4410 = vpop.f32.mrf.mxu0
        %v4411 = vadd.f32 0.0, %v4410
        %v4412 = vpop.f32.mrf.mxu0
        %4413 = vmatprep.mubr.bf16.mxu0 0
        %4414 = vmatmul.mubr.bf16.gmra.mxu0 %v4259
        %v4415 = vpop.f32.mrf.mxu0
        %v4416 = vadd.f32 0.0, %v4415
        %v4417 = vpop.f32.mrf.mxu0
        %v4418 = vpop.f32.mrf.mxu0
        %v4419 = vadd.f32 0.0, %v4418
        %v4420 = vpop.f32.mrf.mxu0
        %4421 = vmatprep.mubr.bf16.mxu0 0
        %4422 = vmatmul.mubr.bf16.gmra.mxu0 %v4260
        %v4423 = vpop.f32.mrf.mxu0
        %v4424 = vadd.f32 0.0, %v4423
        %v4425 = vpop.f32.mrf.mxu0
        %v4426 = vpop.f32.mrf.mxu0
        %v4427 = vadd.f32 0.0, %v4426
        %v4428 = vpop.f32.mrf.mxu0
        %4429 = vmatprep.mubr.bf16.mxu0 0
        %4430 = vmatmul.mubr.bf16.gmra.mxu0 %v4261
        %v4431 = vpop.f32.mrf.mxu0
        %v4432 = vadd.f32 0.0, %v4431
        %v4433 = vpop.f32.mrf.mxu0
        %v4434 = vpop.f32.mrf.mxu0
        %v4435 = vadd.f32 0.0, %v4434
        %v4436 = vpop.f32.mrf.mxu0
        %4437 = vmatprep.mubr.bf16.mxu0 0
        %4438 = vmatmul.mubr.bf16.gmra.mxu0 %v4262
        %v4439 = vpop.f32.mrf.mxu0
        %v4440 = vadd.f32 0.0, %v4439
        %v4441 = vpop.f32.mrf.mxu0
        %v4442 = vpop.f32.mrf.mxu0
        %v4443 = vadd.f32 0.0, %v4442
        %v4444 = vpop.f32.mrf.mxu0
        %4445 = vmatprep.mubr.bf16.mxu0 0
        %4446 = vmatmul.mubr.bf16.gmra.mxu0 %v4263
        %v4447 = vpop.f32.mrf.mxu0
        %v4448 = vadd.f32 0.0, %v4447
        %v4449 = vpop.f32.mrf.mxu0
        %v4450 = vpop.f32.mrf.mxu0
        %v4451 = vadd.f32 0.0, %v4450
        %v4452 = vpop.f32.mrf.mxu0
        %4453 = vmatprep.mubr.bf16.mxu0 0
        %4454 = vmatmul.mubr.bf16.gmra.mxu0 %v4264
        %v4455 = vpop.f32.mrf.mxu0
        %v4456 = vadd.f32 0.0, %v4455
        %v4457 = vpop.f32.mrf.mxu0
        %v4458 = vpop.f32.mrf.mxu0
        %v4459 = vadd.f32 0.0, %v4458
        %v4460 = vpop.f32.mrf.mxu0
        %4461 = vmatprep.mubr.bf16.mxu0 0
        %4462 = vmatmul.mubr.bf16.gmra.mxu0 %v4265
        %v4463 = vpop.f32.mrf.mxu0
        %v4464 = vadd.f32 0.0, %v4463
        %v4465 = vpop.f32.mrf.mxu0
        %v4466 = vpop.f32.mrf.mxu0
        %v4467 = vadd.f32 0.0, %v4466
        %v4468 = vpop.f32.mrf.mxu0
        %4469 = vmatprep.mubr.bf16.mxu0 0
        %4470 = vmatmul.mubr.bf16.gmra.mxu0 %v4266
        %v4471 = vpop.f32.mrf.mxu0
        %v4472 = vadd.f32 0.0, %v4471
        %v4473 = vpop.f32.mrf.mxu0
        %v4474 = vpop.f32.mrf.mxu0
        %v4475 = vadd.f32 0.0, %v4474
        %v4476 = vpop.f32.mrf.mxu0
        %4477 = vmatprep.mubr.bf16.mxu0 0
        %4478 = vmatmul.mubr.bf16.gmra.mxu0 %v4267
        %v4479 = vpop.f32.mrf.mxu0
        %v4480 = vadd.f32 0.0, %v4479
        %v4481 = vpop.f32.mrf.mxu0
        %v4482 = vpop.f32.mrf.mxu0
        %v4483 = vadd.f32 0.0, %v4482
        %v4484 = vpop.f32.mrf.mxu0
        %4485 = vmatprep.mubr.bf16.mxu0 0
        %4486 = vmatmul.mubr.bf16.gmra.mxu0 %v4268
        %v4487 = vpop.f32.mrf.mxu0
        %v4488 = vadd.f32 0.0, %v4487
        %v4489 = vpop.f32.mrf.mxu0
        %v4490 = vpop.f32.mrf.mxu0
        %v4491 = vadd.f32 0.0, %v4490
        %v4492 = vpop.f32.mrf.mxu0
        %4493 = vdwg.mxu0
        %v4494 = vadd.f32 %v3740, %v4368
        %v4495 = vadd.f32 %v3741, %v4371
        %v4496 = vadd.f32 %v3742, %v4376
        %v4497 = vadd.f32 %v3743, %v4379
        %v4498 = vadd.f32 %v3744, %v4384
        %v4499 = vadd.f32 %v3745, %v4387
        %v4500 = vadd.f32 %v3746, %v4392
        %v4501 = vadd.f32 %v3747, %v4395
        %v4502 = vadd.f32 %v3748, %v4400
        %v4503 = vadd.f32 %v3749, %v4403
        %v4504 = vadd.f32 %v3750, %v4408
        %v4505 = vadd.f32 %v3751, %v4411
        %v4506 = vadd.f32 %v3752, %v4416
        %v4507 = vadd.f32 %v3753, %v4419
        %v4508 = vadd.f32 %v3754, %v4424
        %v4509 = vadd.f32 %v3755, %v4427
        %v4510 = vadd.f32 %v3756, %v4432
        %v4511 = vadd.f32 %v3757, %v4435
        %v4512 = vadd.f32 %v3758, %v4440
        %v4513 = vadd.f32 %v3759, %v4443
        %v4514 = vadd.f32 %v3760, %v4448
        %v4515 = vadd.f32 %v3761, %v4451
        %v4516 = vadd.f32 %v3762, %v4456
        %v4517 = vadd.f32 %v3763, %v4459
        %v4518 = vadd.f32 %v3764, %v4464
        %v4519 = vadd.f32 %v3765, %v4467
        %v4520 = vadd.f32 %v3766, %v4472
        %v4521 = vadd.f32 %v3767, %v4475
        %v4522 = vadd.f32 %v3768, %v4480
        %v4523 = vadd.f32 %v3769, %v4483
        %v4524 = vadd.f32 %v3770, %v4488
        %v4525 = vadd.f32 %v3771, %v4491
        %v4526 = vld [vmem:[%s3385] sm:$0xe]
        %v4527 = vld [vmem:[%s3385 + $0xc] sm:$0xe]
        %v4528 = vld [vmem:[%s3385 + $0x18] sm:$0xe]
        %v4529 = vld [vmem:[%s3385 + $0x24] sm:$0xe]
        %v4530 = vld [vmem:[%s3385 + $0x30] sm:$0xe]
        %v4531 = vld [vmem:[%s3385 + $0x3c] sm:$0xe]
        %v4532 = vld [vmem:[%s3385 + $0x48] sm:$0xe]
        %v4533 = vld [vmem:[%s3385 + $0x54] sm:$0xe]
        %v4534 = vld [vmem:[%s3385 + $0x60] sm:$0xe]
        %v4535 = vld [vmem:[%s3385 + $0x6c] sm:$0xe]
        %v4536 = vld [vmem:[%s3385 + $0x78] sm:$0xe]
        %v4537 = vld [vmem:[%s3385 + $0x84] sm:$0xe]
        %v4538 = vld [vmem:[%s3385 + $0x90] sm:$0xe]
        %v4539 = vld [vmem:[%s3385 + $0x9c] sm:$0xe]
        %v4540 = vld [vmem:[%s3385 + $0xa8] sm:$0xe]
        %v4541 = vld [vmem:[%s3385 + $0xb4] sm:$0xe]
        %v4590 = vrot.slane %v4526, 5
        %v4591 = vrot.slane %v4590, 4
        %v4592 = vrot.slane %v3773, 5
        %v4593 = vsel %vm1311, %v4591, %v4592
        %v4594 = vrot.slane %v4592, 4
        %v4595 = vrot.slane %v3774, 5
        %v4596 = vsel %vm1311, %v4594, %v4595
        %v4597 = vrot.slane %v4527, 5
        %v4598 = vrot.slane %v4597, 4
        %v4599 = vrot.slane %v3776, 5
        %v4600 = vsel %vm1311, %v4598, %v4599
        %v4601 = vrot.slane %v4599, 4
        %v4602 = vrot.slane %v3777, 5
        %v4603 = vsel %vm1311, %v4601, %v4602
        %v4604 = vrot.slane %v4528, 5
        %v4605 = vrot.slane %v4604, 4
        %v4606 = vrot.slane %v3779, 5
        %v4607 = vsel %vm1311, %v4605, %v4606
        %v4608 = vrot.slane %v4606, 4
        %v4609 = vrot.slane %v3780, 5
        %v4610 = vsel %vm1311, %v4608, %v4609
        %v4611 = vrot.slane %v4529, 5
        %v4612 = vrot.slane %v4611, 4
        %v4613 = vrot.slane %v3782, 5
        %v4614 = vsel %vm1311, %v4612, %v4613
        %v4615 = vrot.slane %v4613, 4
        %v4616 = vrot.slane %v3783, 5
        %v4617 = vsel %vm1311, %v4615, %v4616
        %v4618 = vrot.slane %v4530, 5
        %v4619 = vrot.slane %v4618, 4
        %v4620 = vrot.slane %v3785, 5
        %v4621 = vsel %vm1311, %v4619, %v4620
        %v4622 = vrot.slane %v4620, 4
        %v4623 = vrot.slane %v3786, 5
        %v4624 = vsel %vm1311, %v4622, %v4623
        %v4625 = vrot.slane %v4531, 5
        %v4626 = vrot.slane %v4625, 4
        %v4627 = vrot.slane %v3788, 5
        %v4628 = vsel %vm1311, %v4626, %v4627
        %v4629 = vrot.slane %v4627, 4
        %v4630 = vrot.slane %v3789, 5
        %v4631 = vsel %vm1311, %v4629, %v4630
        %v4632 = vrot.slane %v4532, 5
        %v4633 = vrot.slane %v4632, 4
        %v4634 = vrot.slane %v3791, 5
        %v4635 = vsel %vm1311, %v4633, %v4634
        %v4636 = vrot.slane %v4634, 4
        %v4637 = vrot.slane %v3792, 5
        %v4638 = vsel %vm1311, %v4636, %v4637
        %v4639 = vrot.slane %v4533, 5
        %v4640 = vrot.slane %v4639, 4
        %v4641 = vrot.slane %v3794, 5
        %v4642 = vsel %vm1311, %v4640, %v4641
        %v4643 = vrot.slane %v4641, 4
        %v4644 = vrot.slane %v3795, 5
        %v4645 = vsel %vm1311, %v4643, %v4644
        %v4646 = vrot.slane %v4534, 5
        %v4647 = vrot.slane %v4646, 4
        %v4648 = vrot.slane %v3797, 5
        %v4649 = vsel %vm1311, %v4647, %v4648
        %v4650 = vrot.slane %v4648, 4
        %v4651 = vrot.slane %v3798, 5
        %v4652 = vsel %vm1311, %v4650, %v4651
        %v4653 = vrot.slane %v4535, 5
        %v4654 = vrot.slane %v4653, 4
        %v4655 = vrot.slane %v3800, 5
        %v4656 = vsel %vm1311, %v4654, %v4655
        %v4657 = vrot.slane %v4655, 4
        %v4658 = vrot.slane %v3801, 5
        %v4659 = vsel %vm1311, %v4657, %v4658
        %v4660 = vrot.slane %v4536, 5
        %v4661 = vrot.slane %v4660, 4
        %v4662 = vrot.slane %v3803, 5
        %v4663 = vsel %vm1311, %v4661, %v4662
        %v4664 = vrot.slane %v4662, 4
        %v4665 = vrot.slane %v3804, 5
        %v4666 = vsel %vm1311, %v4664, %v4665
        %v4667 = vrot.slane %v4537, 5
        %v4668 = vrot.slane %v4667, 4
        %v4669 = vrot.slane %v3806, 5
        %v4670 = vsel %vm1311, %v4668, %v4669
        %v4671 = vrot.slane %v4669, 4
        %v4672 = vrot.slane %v3807, 5
        %v4673 = vsel %vm1311, %v4671, %v4672
        %v4674 = vrot.slane %v4538, 5
        %v4675 = vrot.slane %v4674, 4
        %v4676 = vrot.slane %v3809, 5
        %v4677 = vsel %vm1311, %v4675, %v4676
        %v4678 = vrot.slane %v4676, 4
        %v4679 = vrot.slane %v3810, 5
        %v4680 = vsel %vm1311, %v4678, %v4679
        %v4681 = vrot.slane %v4539, 5
        %v4682 = vrot.slane %v4681, 4
        %v4683 = vrot.slane %v3812, 5
        %v4684 = vsel %vm1311, %v4682, %v4683
        %v4685 = vrot.slane %v4683, 4
        %v4686 = vrot.slane %v3813, 5
        %v4687 = vsel %vm1311, %v4685, %v4686
        %v4688 = vrot.slane %v4540, 5
        %v4689 = vrot.slane %v4688, 4
        %v4690 = vrot.slane %v3815, 5
        %v4691 = vsel %vm1311, %v4689, %v4690
        %v4692 = vrot.slane %v4690, 4
        %v4693 = vrot.slane %v3816, 5
        %v4694 = vsel %vm1311, %v4692, %v4693
        %v4695 = vrot.slane %v4541, 5
        %v4696 = vrot.slane %v4695, 4
        %v4697 = vrot.slane %v3818, 5
        %v4698 = vsel %vm1311, %v4696, %v4697
        %v4699 = vrot.slane %v4697, 4
        %v4700 = vrot.slane %v3819, 5
        %v4701 = vsel %vm1311, %v4699, %v4700
        %s4702 = scalar_lea.vmem %s210, 512
        %v4703 = vld [vmem:[%s4702] sm:$0xf]
        %v4704 = vld [vmem:[%s4702 + $0x4] sm:$0xf]
        %v4705 = vld [vmem:[%s4702 + $0x8] sm:$0xf]
        %v4706 = vld [vmem:[%s4702 + $0xc] sm:$0xf]
        %v4707 = vld [vmem:[%s4702 + $0x10] sm:$0xf]
        %v4708 = vld [vmem:[%s4702 + $0x14] sm:$0xf]
        %v4709 = vld [vmem:[%s4702 + $0x18] sm:$0xf]
        %v4710 = vld [vmem:[%s4702 + $0x1c] sm:$0xf]
        %v4711 = vld [vmem:[%s4702 + $0x20] sm:$0xf]
        %v4712 = vld [vmem:[%s4702 + $0x24] sm:$0xf]
        %v4713 = vld [vmem:[%s4702 + $0x28] sm:$0xf]
        %v4714 = vld [vmem:[%s4702 + $0x2c] sm:$0xf]
        %v4715 = vld [vmem:[%s4702 + $0x30] sm:$0xf]
        %v4716 = vld [vmem:[%s4702 + $0x34] sm:$0xf]
        %v4717 = vld [vmem:[%s4702 + $0x38] sm:$0xf]
        %v4718 = vld [vmem:[%s4702 + $0x3c] sm:$0xf]
        %v4719 = vunpack.c.l.b16 %v4593
        %v4720 = vunpack.c.l.b16 %v4596
        %v4721 = vunpack.c.l.b16 %v4600
        %v4722 = vunpack.c.l.b16 %v4603
        %v4723 = vunpack.c.l.b16 %v4607
        %v4724 = vunpack.c.l.b16 %v4610
        %v4725 = vunpack.c.l.b16 %v4614
        %v4726 = vunpack.c.l.b16 %v4617
        %v4727 = vunpack.c.l.b16 %v4621
        %v4728 = vunpack.c.l.b16 %v4624
        %v4729 = vunpack.c.l.b16 %v4628
        %v4730 = vunpack.c.l.b16 %v4631
        %v4731 = vunpack.c.l.b16 %v4635
        %v4732 = vunpack.c.l.b16 %v4638
        %v4733 = vunpack.c.l.b16 %v4642
        %v4734 = vunpack.c.l.b16 %v4645
        %v4735 = vunpack.c.l.b16 %v4649
        %v4736 = vunpack.c.l.b16 %v4652
        %v4737 = vunpack.c.l.b16 %v4656
        %v4738 = vunpack.c.l.b16 %v4659
        %v4739 = vunpack.c.l.b16 %v4663
        %v4740 = vunpack.c.l.b16 %v4666
        %v4741 = vunpack.c.l.b16 %v4670
        %v4742 = vunpack.c.l.b16 %v4673
        %v4743 = vunpack.c.l.b16 %v4677
        %v4744 = vunpack.c.l.b16 %v4680
        %v4745 = vunpack.c.l.b16 %v4684
        %v4746 = vunpack.c.l.b16 %v4687
        %v4747 = vunpack.c.l.b16 %v4691
        %v4748 = vunpack.c.l.b16 %v4694
        %v4749 = vunpack.c.l.b16 %v4698
        %v4750 = vunpack.c.l.b16 %v4701
        %v4751 = vpack.c.b16 %v4720, %v4719
        %v4752 = vpack.c.b16 %v4722, %v4721
        %v4753 = vpack.c.b16 %v4724, %v4723
        %v4754 = vpack.c.b16 %v4726, %v4725
        %v4755 = vpack.c.b16 %v4728, %v4727
        %v4756 = vpack.c.b16 %v4730, %v4729
        %v4757 = vpack.c.b16 %v4732, %v4731
        %v4758 = vpack.c.b16 %v4734, %v4733
        %v4759 = vpack.c.b16 %v4736, %v4735
        %v4760 = vpack.c.b16 %v4738, %v4737
        %v4761 = vpack.c.b16 %v4740, %v4739
        %v4762 = vpack.c.b16 %v4742, %v4741
        %v4763 = vpack.c.b16 %v4744, %v4743
        %v4764 = vpack.c.b16 %v4746, %v4745
        %v4765 = vpack.c.b16 %v4748, %v4747
        %v4766 = vpack.c.b16 %v4750, %v4749
        %v4799 = vunpack.c.l.b16 %v4703
        %v4800 = vunpack.c.l.b16 %v4704
        %v4801 = vunpack.c.l.b16 %v4705
        %v4802 = vunpack.c.l.b16 %v4706
        %v4803 = vunpack.c.l.b16 %v4707
        %v4804 = vunpack.c.l.b16 %v4708
        %v4805 = vunpack.c.l.b16 %v4709
        %v4806 = vunpack.c.l.b16 %v4710
        %v4807 = vunpack.c.l.b16 %v4711
        %v4808 = vunpack.c.l.b16 %v4712
        %v4809 = vunpack.c.l.b16 %v4713
        %v4810 = vunpack.c.l.b16 %v4714
        %v4811 = vunpack.c.l.b16 %v4715
        %v4812 = vunpack.c.l.b16 %v4716
        %v4813 = vunpack.c.l.b16 %v4717
        %v4814 = vunpack.c.l.b16 %v4718
        %v4815 = vpack.c.b16 %v4800, %v4799
        %v4816 = vpack.c.b16 %v4802, %v4801
        %v4817 = vpack.c.b16 %v4804, %v4803
        %v4818 = vpack.c.b16 %v4806, %v4805
        %v4819 = vpack.c.b16 %v4808, %v4807
        %v4820 = vpack.c.b16 %v4810, %v4809
        %v4821 = vpack.c.b16 %v4812, %v4811
        %v4822 = vpack.c.b16 %v4814, %v4813
        %4831 = vmatprep.subr.bf16.mxu0 0
        %4832 = vmatpush1.bf16.msra.mxu0 %v4822
        %4833 = vmatprep.subr.bf16.mxu0 0
        %4834 = vmatpush1.bf16.msra.mxu0 %v4821
        %4835 = vmatprep.subr.bf16.mxu0 0
        %4836 = vmatpush1.bf16.msra.mxu0 %v4820
        %4837 = vmatprep.subr.bf16.mxu0 0
        %4838 = vmatpush1.bf16.msra.mxu0 %v4819
        %4839 = vmatprep.subr.bf16.mxu0 0
        %4840 = vmatpush1.bf16.msra.mxu0 %v4818
        %4841 = vmatprep.subr.bf16.mxu0 0
        %4842 = vmatpush1.bf16.msra.mxu0 %v4817
        %4843 = vmatprep.subr.bf16.mxu0 0
        %4844 = vmatpush1.bf16.msra.mxu0 %v4816
        %4845 = vmatprep.subr.bf16.mxu0 0
        %4846 = vmatpush1.bf16.msra.mxu0 %v4815
        %4847 = vmatprep.subr.bf16.mxu0 0
        %4848 = vmatpush2.bf16.msra.mxu0 0
        %4849 = vmatprep.subr.bf16.mxu0 0
        %4850 = vmatpush2.bf16.msra.mxu0 0
        %4851 = vmatprep.subr.bf16.mxu0 0
        %4852 = vmatpush2.bf16.msra.mxu0 0
        %4853 = vmatprep.subr.bf16.mxu0 0
        %4854 = vmatpush2.bf16.msra.mxu0 0
        %4855 = vmatprep.subr.bf16.mxu0 0
        %4856 = vmatpush2.bf16.msra.mxu0 0
        %4857 = vmatprep.subr.bf16.mxu0 0
        %4858 = vmatpush2.bf16.msra.mxu0 0
        %4859 = vmatprep.subr.bf16.mxu0 0
        %4860 = vmatpush2.bf16.msra.mxu0 0
        %4861 = vmatprep.subr.bf16.mxu0 0
        %4862 = vmatpush2.bf16.msra.mxu0 0
        %4863 = vmatprep.mubr.bf16.mxu0 0
        %4864 = vmatmul.mubr.bf16.gmra.mxu0 %v4751
        %v4865 = vpop.f32.mrf.mxu0
        %v4866 = vadd.f32 0.0, %v4865
        %v4867 = vpop.f32.mrf.mxu0
        %v4868 = vpop.f32.mrf.mxu0
        %v4869 = vadd.f32 0.0, %v4868
        %v4870 = vpop.f32.mrf.mxu0
        %4871 = vmatprep.mubr.bf16.mxu0 0
        %4872 = vmatmul.mubr.bf16.gmra.mxu0 %v4752
        %v4873 = vpop.f32.mrf.mxu0
        %v4874 = vadd.f32 0.0, %v4873
        %v4875 = vpop.f32.mrf.mxu0
        %v4876 = vpop.f32.mrf.mxu0
        %v4877 = vadd.f32 0.0, %v4876
        %v4878 = vpop.f32.mrf.mxu0
        %4879 = vmatprep.mubr.bf16.mxu0 0
        %4880 = vmatmul.mubr.bf16.gmra.mxu0 %v4753
        %v4881 = vpop.f32.mrf.mxu0
        %v4882 = vadd.f32 0.0, %v4881
        %v4883 = vpop.f32.mrf.mxu0
        %v4884 = vpop.f32.mrf.mxu0
        %v4885 = vadd.f32 0.0, %v4884
        %v4886 = vpop.f32.mrf.mxu0
        %4887 = vmatprep.mubr.bf16.mxu0 0
        %4888 = vmatmul.mubr.bf16.gmra.mxu0 %v4754
        %v4889 = vpop.f32.mrf.mxu0
        %v4890 = vadd.f32 0.0, %v4889
        %v4891 = vpop.f32.mrf.mxu0
        %v4892 = vpop.f32.mrf.mxu0
        %v4893 = vadd.f32 0.0, %v4892
        %v4894 = vpop.f32.mrf.mxu0
        %4895 = vmatprep.mubr.bf16.mxu0 0
        %4896 = vmatmul.mubr.bf16.gmra.mxu0 %v4755
        %v4897 = vpop.f32.mrf.mxu0
        %v4898 = vadd.f32 0.0, %v4897
        %v4899 = vpop.f32.mrf.mxu0
        %v4900 = vpop.f32.mrf.mxu0
        %v4901 = vadd.f32 0.0, %v4900
        %v4902 = vpop.f32.mrf.mxu0
        %4903 = vmatprep.mubr.bf16.mxu0 0
        %4904 = vmatmul.mubr.bf16.gmra.mxu0 %v4756
        %v4905 = vpop.f32.mrf.mxu0
        %v4906 = vadd.f32 0.0, %v4905
        %v4907 = vpop.f32.mrf.mxu0
        %v4908 = vpop.f32.mrf.mxu0
        %v4909 = vadd.f32 0.0, %v4908
        %v4910 = vpop.f32.mrf.mxu0
        %4911 = vmatprep.mubr.bf16.mxu0 0
        %4912 = vmatmul.mubr.bf16.gmra.mxu0 %v4757
        %v4913 = vpop.f32.mrf.mxu0
        %v4914 = vadd.f32 0.0, %v4913
        %v4915 = vpop.f32.mrf.mxu0
        %v4916 = vpop.f32.mrf.mxu0
        %v4917 = vadd.f32 0.0, %v4916
        %v4918 = vpop.f32.mrf.mxu0
        %4919 = vmatprep.mubr.bf16.mxu0 0
        %4920 = vmatmul.mubr.bf16.gmra.mxu0 %v4758
        %v4921 = vpop.f32.mrf.mxu0
        %v4922 = vadd.f32 0.0, %v4921
        %v4923 = vpop.f32.mrf.mxu0
        %v4924 = vpop.f32.mrf.mxu0
        %v4925 = vadd.f32 0.0, %v4924
        %v4926 = vpop.f32.mrf.mxu0
        %4927 = vmatprep.mubr.bf16.mxu0 0
        %4928 = vmatmul.mubr.bf16.gmra.mxu0 %v4759
        %v4929 = vpop.f32.mrf.mxu0
        %v4930 = vadd.f32 0.0, %v4929
        %v4931 = vpop.f32.mrf.mxu0
        %v4932 = vpop.f32.mrf.mxu0
        %v4933 = vadd.f32 0.0, %v4932
        %v4934 = vpop.f32.mrf.mxu0
        %4935 = vmatprep.mubr.bf16.mxu0 0
        %4936 = vmatmul.mubr.bf16.gmra.mxu0 %v4760
        %v4937 = vpop.f32.mrf.mxu0
        %v4938 = vadd.f32 0.0, %v4937
        %v4939 = vpop.f32.mrf.mxu0
        %v4940 = vpop.f32.mrf.mxu0
        %v4941 = vadd.f32 0.0, %v4940
        %v4942 = vpop.f32.mrf.mxu0
        %4943 = vmatprep.mubr.bf16.mxu0 0
        %4944 = vmatmul.mubr.bf16.gmra.mxu0 %v4761
        %v4945 = vpop.f32.mrf.mxu0
        %v4946 = vadd.f32 0.0, %v4945
        %v4947 = vpop.f32.mrf.mxu0
        %v4948 = vpop.f32.mrf.mxu0
        %v4949 = vadd.f32 0.0, %v4948
        %v4950 = vpop.f32.mrf.mxu0
        %4951 = vmatprep.mubr.bf16.mxu0 0
        %4952 = vmatmul.mubr.bf16.gmra.mxu0 %v4762
        %v4953 = vpop.f32.mrf.mxu0
        %v4954 = vadd.f32 0.0, %v4953
        %v4955 = vpop.f32.mrf.mxu0
        %v4956 = vpop.f32.mrf.mxu0
        %v4957 = vadd.f32 0.0, %v4956
        %v4958 = vpop.f32.mrf.mxu0
        %4959 = vmatprep.mubr.bf16.mxu0 0
        %4960 = vmatmul.mubr.bf16.gmra.mxu0 %v4763
        %v4961 = vpop.f32.mrf.mxu0
        %v4962 = vadd.f32 0.0, %v4961
        %v4963 = vpop.f32.mrf.mxu0
        %v4964 = vpop.f32.mrf.mxu0
        %v4965 = vadd.f32 0.0, %v4964
        %v4966 = vpop.f32.mrf.mxu0
        %4967 = vmatprep.mubr.bf16.mxu0 0
        %4968 = vmatmul.mubr.bf16.gmra.mxu0 %v4764
        %v4969 = vpop.f32.mrf.mxu0
        %v4970 = vadd.f32 0.0, %v4969
        %v4971 = vpop.f32.mrf.mxu0
        %v4972 = vpop.f32.mrf.mxu0
        %v4973 = vadd.f32 0.0, %v4972
        %v4974 = vpop.f32.mrf.mxu0
        %4975 = vmatprep.mubr.bf16.mxu0 0
        %4976 = vmatmul.mubr.bf16.gmra.mxu0 %v4765
        %v4977 = vpop.f32.mrf.mxu0
        %v4978 = vadd.f32 0.0, %v4977
        %v4979 = vpop.f32.mrf.mxu0
        %v4980 = vpop.f32.mrf.mxu0
        %v4981 = vadd.f32 0.0, %v4980
        %v4982 = vpop.f32.mrf.mxu0
        %4983 = vmatprep.mubr.bf16.mxu0 0
        %4984 = vmatmul.mubr.bf16.gmra.mxu0 %v4766
        %v4985 = vpop.f32.mrf.mxu0
        %v4986 = vadd.f32 0.0, %v4985
        %v4987 = vpop.f32.mrf.mxu0
        %v4988 = vpop.f32.mrf.mxu0
        %v4989 = vadd.f32 0.0, %v4988
        %v4990 = vpop.f32.mrf.mxu0
        %4991 = vdwg.mxu0
        %v4992 = vadd.f32 %v4494, %v4866
        %v4993 = vadd.f32 %v4495, %v4869
        %v4994 = vadd.f32 %v4496, %v4874
        %v4995 = vadd.f32 %v4497, %v4877
        %v4996 = vadd.f32 %v4498, %v4882
        %v4997 = vadd.f32 %v4499, %v4885
        %v4998 = vadd.f32 %v4500, %v4890
        %v4999 = vadd.f32 %v4501, %v4893
        %v5000 = vadd.f32 %v4502, %v4898
        %v5001 = vadd.f32 %v4503, %v4901
        %v5002 = vadd.f32 %v4504, %v4906
        %v5003 = vadd.f32 %v4505, %v4909
        %v5004 = vadd.f32 %v4506, %v4914
        %v5005 = vadd.f32 %v4507, %v4917
        %v5006 = vadd.f32 %v4508, %v4922
        %v5007 = vadd.f32 %v4509, %v4925
        %v5008 = vadd.f32 %v4510, %v4930
        %v5009 = vadd.f32 %v4511, %v4933
        %v5010 = vadd.f32 %v4512, %v4938
        %v5011 = vadd.f32 %v4513, %v4941
        %v5012 = vadd.f32 %v4514, %v4946
        %v5013 = vadd.f32 %v4515, %v4949
        %v5014 = vadd.f32 %v4516, %v4954
        %v5015 = vadd.f32 %v4517, %v4957
        %v5016 = vadd.f32 %v4518, %v4962
        %v5017 = vadd.f32 %v4519, %v4965
        %v5018 = vadd.f32 %v4520, %v4970
        %v5019 = vadd.f32 %v4521, %v4973
        %v5020 = vadd.f32 %v4522, %v4978
        %v5021 = vadd.f32 %v4523, %v4981
        %v5022 = vadd.f32 %v4524, %v4986
        %v5023 = vadd.f32 %v4525, %v4989
        %v5024 = vld [vmem:[%s213] sm:$0x1]
        %v5026 = vlaneseq
        %v5027 = vshrl.u32 %v5026, 7
        %v5028 = vsub.s32 0, %v5027
        %v5029 = vrot.slane %v5024, %v5028
        %v5031 = vadd.f32 %v4992, %v5029
        %v5032 = vadd.f32 %v4993, %v5029
        %v5033 = vadd.f32 %v4994, %v5029
        %v5034 = vadd.f32 %v4995, %v5029
        %v5035 = vadd.f32 %v4996, %v5029
        %v5036 = vadd.f32 %v4997, %v5029
        %v5037 = vadd.f32 %v4998, %v5029
        %v5038 = vadd.f32 %v4999, %v5029
        %v5039 = vadd.f32 %v5000, %v5029
        %v5040 = vadd.f32 %v5001, %v5029
        %v5041 = vadd.f32 %v5002, %v5029
        %v5042 = vadd.f32 %v5003, %v5029
        %v5043 = vadd.f32 %v5004, %v5029
        %v5044 = vadd.f32 %v5005, %v5029
        %v5045 = vadd.f32 %v5006, %v5029
        %v5046 = vadd.f32 %v5007, %v5029
        %v5047 = vadd.f32 %v5008, %v5029
        %v5048 = vadd.f32 %v5009, %v5029
        %v5049 = vadd.f32 %v5010, %v5029
        %v5050 = vadd.f32 %v5011, %v5029
        %v5051 = vadd.f32 %v5012, %v5029
        %v5052 = vadd.f32 %v5013, %v5029
        %v5053 = vadd.f32 %v5014, %v5029
        %v5054 = vadd.f32 %v5015, %v5029
        %v5055 = vadd.f32 %v5016, %v5029
        %v5056 = vadd.f32 %v5017, %v5029
        %v5057 = vadd.f32 %v5018, %v5029
        %v5058 = vadd.f32 %v5019, %v5029
        %v5059 = vadd.f32 %v5020, %v5029
        %v5060 = vadd.f32 %v5021, %v5029
        %v5061 = vadd.f32 %v5022, %v5029
        %v5062 = vadd.f32 %v5023, %v5029
        %v5063 = vmul.f32 %v5031, 0.1
        %v5064 = vmul.f32 %v5032, 0.1
        %v5065 = vmul.f32 %v5033, 0.1
        %v5066 = vmul.f32 %v5034, 0.1
        %v5067 = vmul.f32 %v5035, 0.1
        %v5068 = vmul.f32 %v5036, 0.1
        %v5069 = vmul.f32 %v5037, 0.1
        %v5070 = vmul.f32 %v5038, 0.1
        %v5071 = vmul.f32 %v5039, 0.1
        %v5072 = vmul.f32 %v5040, 0.1
        %v5073 = vmul.f32 %v5041, 0.1
        %v5074 = vmul.f32 %v5042, 0.1
        %v5075 = vmul.f32 %v5043, 0.1
        %v5076 = vmul.f32 %v5044, 0.1
        %v5077 = vmul.f32 %v5045, 0.1
        %v5078 = vmul.f32 %v5046, 0.1
        %v5079 = vmul.f32 %v5047, 0.1
        %v5080 = vmul.f32 %v5048, 0.1
        %v5081 = vmul.f32 %v5049, 0.1
        %v5082 = vmul.f32 %v5050, 0.1
        %v5083 = vmul.f32 %v5051, 0.1
        %v5084 = vmul.f32 %v5052, 0.1
        %v5085 = vmul.f32 %v5053, 0.1
        %v5086 = vmul.f32 %v5054, 0.1
        %v5087 = vmul.f32 %v5055, 0.1
        %v5088 = vmul.f32 %v5056, 0.1
        %v5089 = vmul.f32 %v5057, 0.1
        %v5090 = vmul.f32 %v5058, 0.1
        %v5091 = vmul.f32 %v5059, 0.1
        %v5092 = vmul.f32 %v5060, 0.1
        %v5093 = vmul.f32 %v5061, 0.1
        %v5094 = vmul.f32 %v5062, 0.1
        %v5095 = vmax.f32 %v5031, %v5063
        %v5096 = vmax.f32 %v5032, %v5064
        %v5097 = vmax.f32 %v5033, %v5065
        %v5098 = vmax.f32 %v5034, %v5066
        %v5099 = vmax.f32 %v5035, %v5067
        %v5100 = vmax.f32 %v5036, %v5068
        %v5101 = vmax.f32 %v5037, %v5069
        %v5102 = vmax.f32 %v5038, %v5070
        %v5103 = vmax.f32 %v5039, %v5071
        %v5104 = vmax.f32 %v5040, %v5072
        %v5105 = vmax.f32 %v5041, %v5073
        %v5106 = vmax.f32 %v5042, %v5074
        %v5107 = vmax.f32 %v5043, %v5075
        %v5108 = vmax.f32 %v5044, %v5076
        %v5109 = vmax.f32 %v5045, %v5077
        %v5110 = vmax.f32 %v5046, %v5078
        %v5111 = vmax.f32 %v5047, %v5079
        %v5112 = vmax.f32 %v5048, %v5080
        %v5113 = vmax.f32 %v5049, %v5081
        %v5114 = vmax.f32 %v5050, %v5082
        %v5115 = vmax.f32 %v5051, %v5083
        %v5116 = vmax.f32 %v5052, %v5084
        %v5117 = vmax.f32 %v5053, %v5085
        %v5118 = vmax.f32 %v5054, %v5086
        %v5119 = vmax.f32 %v5055, %v5087
        %v5120 = vmax.f32 %v5056, %v5088
        %v5121 = vmax.f32 %v5057, %v5089
        %v5122 = vmax.f32 %v5058, %v5090
        %v5123 = vmax.f32 %v5059, %v5091
        %v5124 = vmax.f32 %v5060, %v5092
        %v5125 = vmax.f32 %v5061, %v5093
        %v5126 = vmax.f32 %v5062, %v5094
        %v5127 = vpack.c.bf16 %v5096, %v5095
        %v5128 = vpack.c.bf16 %v5098, %v5097
        %v5129 = vpack.c.bf16 %v5100, %v5099
        %v5130 = vpack.c.bf16 %v5102, %v5101
        %v5131 = vpack.c.bf16 %v5104, %v5103
        %v5132 = vpack.c.bf16 %v5106, %v5105
        %v5133 = vpack.c.bf16 %v5108, %v5107
        %v5134 = vpack.c.bf16 %v5110, %v5109
        %v5135 = vpack.c.bf16 %v5112, %v5111
        %v5136 = vpack.c.bf16 %v5114, %v5113
        %v5137 = vpack.c.bf16 %v5116, %v5115
        %v5138 = vpack.c.bf16 %v5118, %v5117
        %v5139 = vpack.c.bf16 %v5120, %v5119
        %v5140 = vpack.c.bf16 %v5122, %v5121
        %v5141 = vpack.c.bf16 %v5124, %v5123
        %v5142 = vpack.c.bf16 %v5126, %v5125
        %v5159 = vunpack.c.l.b16 %v5127
        %v5160 = vunpack.c.h.b16 %v5127
        %v5161 = vunpack.c.l.b16 %v5128
        %v5162 = vunpack.c.h.b16 %v5128
        %v5163 = vunpack.c.l.b16 %v5129
        %v5164 = vunpack.c.h.b16 %v5129
        %v5165 = vunpack.c.l.b16 %v5130
        %v5166 = vunpack.c.h.b16 %v5130
        %v5167 = vunpack.c.l.b16 %v5131
        %v5168 = vunpack.c.h.b16 %v5131
        %v5169 = vunpack.c.l.b16 %v5132
        %v5170 = vunpack.c.h.b16 %v5132
        %v5171 = vunpack.c.l.b16 %v5133
        %v5172 = vunpack.c.h.b16 %v5133
        %v5173 = vunpack.c.l.b16 %v5134
        %v5174 = vunpack.c.h.b16 %v5134
        %v5175 = vunpack.c.l.b16 %v5135
        %v5176 = vunpack.c.h.b16 %v5135
        %v5177 = vunpack.c.l.b16 %v5136
        %v5178 = vunpack.c.h.b16 %v5136
        %v5179 = vunpack.c.l.b16 %v5137
        %v5180 = vunpack.c.h.b16 %v5137
        %v5181 = vunpack.c.l.b16 %v5138
        %v5182 = vunpack.c.h.b16 %v5138
        %v5183 = vunpack.c.l.b16 %v5139
        %v5184 = vunpack.c.h.b16 %v5139
        %v5185 = vunpack.c.l.b16 %v5140
        %v5186 = vunpack.c.h.b16 %v5140
        %v5187 = vunpack.c.l.b16 %v5141
        %v5188 = vunpack.c.h.b16 %v5141
        %v5189 = vunpack.c.l.b16 %v5142
        %v5190 = vunpack.c.h.b16 %v5142
        %v5191 = vpack.c.b16 %v5159, %v5159
        %v5192 = vpack.c.b16 %v5160, %v5160
        %v5193 = vpack.c.b16 %v5161, %v5161
        %v5194 = vpack.c.b16 %v5162, %v5162
        %v5195 = vpack.c.b16 %v5163, %v5163
        %v5196 = vpack.c.b16 %v5164, %v5164
        %v5197 = vpack.c.b16 %v5165, %v5165
        %v5198 = vpack.c.b16 %v5166, %v5166
        %v5199 = vpack.c.b16 %v5167, %v5167
        %v5200 = vpack.c.b16 %v5168, %v5168
        %v5201 = vpack.c.b16 %v5169, %v5169
        %v5202 = vpack.c.b16 %v5170, %v5170
        %v5203 = vpack.c.b16 %v5171, %v5171
        %v5204 = vpack.c.b16 %v5172, %v5172
        %v5205 = vpack.c.b16 %v5173, %v5173
        %v5206 = vpack.c.b16 %v5174, %v5174
        %v5207 = vpack.c.b16 %v5175, %v5175
        %v5208 = vpack.c.b16 %v5176, %v5176
        %v5209 = vpack.c.b16 %v5177, %v5177
        %v5210 = vpack.c.b16 %v5178, %v5178
        %v5211 = vpack.c.b16 %v5179, %v5179
        %v5212 = vpack.c.b16 %v5180, %v5180
        %v5213 = vpack.c.b16 %v5181, %v5181
        %v5214 = vpack.c.b16 %v5182, %v5182
        %v5215 = vpack.c.b16 %v5183, %v5183
        %v5216 = vpack.c.b16 %v5184, %v5184
        %v5217 = vpack.c.b16 %v5185, %v5185
        %v5218 = vpack.c.b16 %v5186, %v5186
        %v5219 = vpack.c.b16 %v5187, %v5187
        %v5220 = vpack.c.b16 %v5188, %v5188
        %v5221 = vpack.c.b16 %v5189, %v5189
        %v5222 = vpack.c.b16 %v5190, %v5190
        %5255 = vst [vmem:[%s201] sm:$0xf] %v5191
        %5256 = vst [vmem:[%s201 + $0x4] sm:$0xf] %v5192
        %5257 = vst [vmem:[%s201 + $0x8] sm:$0xf] %v5193
        %5258 = vst [vmem:[%s201 + $0xc] sm:$0xf] %v5194
        %5259 = vst [vmem:[%s201 + $0x10] sm:$0xf] %v5195
        %5260 = vst [vmem:[%s201 + $0x14] sm:$0xf] %v5196
        %5261 = vst [vmem:[%s201 + $0x18] sm:$0xf] %v5197
        %5262 = vst [vmem:[%s201 + $0x1c] sm:$0xf] %v5198
        %5263 = vst [vmem:[%s201 + $0x20] sm:$0xf] %v5199
        %5264 = vst [vmem:[%s201 + $0x24] sm:$0xf] %v5200
        %5265 = vst [vmem:[%s201 + $0x28] sm:$0xf] %v5201
        %5266 = vst [vmem:[%s201 + $0x2c] sm:$0xf] %v5202
        %5267 = vst [vmem:[%s201 + $0x30] sm:$0xf] %v5203
        %5268 = vst [vmem:[%s201 + $0x34] sm:$0xf] %v5204
        %5269 = vst [vmem:[%s201 + $0x38] sm:$0xf] %v5205
        %5270 = vst [vmem:[%s201 + $0x3c] sm:$0xf] %v5206
        %5271 = vst [vmem:[%s201 + $0x40] sm:$0xf] %v5207
        %5272 = vst [vmem:[%s201 + $0x44] sm:$0xf] %v5208
        %5273 = vst [vmem:[%s201 + $0x48] sm:$0xf] %v5209
        %5274 = vst [vmem:[%s201 + $0x4c] sm:$0xf] %v5210
        %5275 = vst [vmem:[%s201 + $0x50] sm:$0xf] %v5211
        %5276 = vst [vmem:[%s201 + $0x54] sm:$0xf] %v5212
        %5277 = vst [vmem:[%s201 + $0x58] sm:$0xf] %v5213
        %5278 = vst [vmem:[%s201 + $0x5c] sm:$0xf] %v5214
        %5279 = vst [vmem:[%s201 + $0x60] sm:$0xf] %v5215
        %5280 = vst [vmem:[%s201 + $0x64] sm:$0xf] %v5216
        %5281 = vst [vmem:[%s201 + $0x68] sm:$0xf] %v5217
        %5282 = vst [vmem:[%s201 + $0x6c] sm:$0xf] %v5218
        %5283 = vst [vmem:[%s201 + $0x70] sm:$0xf] %v5219
        %5284 = vst [vmem:[%s201 + $0x74] sm:$0xf] %v5220
        %5285 = vst [vmem:[%s201 + $0x78] sm:$0xf] %v5221
        %5286 = vst [vmem:[%s201 + $0x7c] sm:$0xf] %v5222
        %s5287 = sand.u32 %s117, 1
        %s5288 = scalar_lea.sflag [#allocation3], %s5287
        %s5289 = sand.u32 %s117, 1
        %s5290 = smul.addr %s5289, 128
        %s5291 = scalar_lea.vmem [#allocation2], %s5290
        // Predicated region
        $region33: #{tpu_custom_call.1} parent=31 // pred_check
          %p5292 = pneg %p127
        $region34: #{tpu_custom_call.1} parent=31 // pred_check_branch
          %5294 = sbr.rel (%p5292) target = $region36
        $region35: #{tpu_custom_call.1} parent=31 // pred_region
          %s5296 = ssub.s32 2048, 2048
          %5297 = vsyncadd %s5288, %s5296
          %s5298 = smul.addr %s21, 32
          %s5299 = sadd.s32 %s22, %s5298
          %s5300 = smul.addr %s5299, 64
          %s5301 = scalar_lea.hbm %s3, %s5300
          %s5302 = sshll.u32 %s5291, 4
          %s5303 = int_to_ptr.vmem [resolvable:$true] %s5302
          %5308 = dma.vmem_to_hbm [thread:$0]  %s5303, 2048, %s5301, %s5288, 64, 64, 4
        $region36: #{tpu_custom_call.1} parent=31 // pred_fallthru
          _
      $region32: #{tpu_custom_call.1} parent=5 // pred_fallthru
        _
      %p5309 = scmp.le.s32.totalorder 2, %s12
      // Predicated region
      $region37: #{tpu_custom_call.1} parent=5 // pred_check
        %p5310 = pneg %p5309
      $region38: #{tpu_custom_call.1} parent=5 // pred_check_branch
        %5312 = sbr.rel (%p5310) target = $region40
      $region39: #{tpu_custom_call.1} parent=5 // pred_region
        %s5313 = ssub.s32 %s12, 2
        // Predicated region
        $region41: #{tpu_custom_call.1} parent=39 // pred_check
          %p5314 = pneg %p133
        $region42: #{tpu_custom_call.1} parent=39 // pred_check_branch
          %5316 = sbr.rel (%p5314) target = $region44
        $region43: #{tpu_custom_call.1} parent=39 // pred_region
          %s5317 = sand.u32 %s118, 1
          %s5318 = scalar_lea.sflag [#allocation3], %s5317
          %s5319 = sand.u32 %s118, 1
          %s5320 = smul.addr %s5319, 128
          %s5321 = scalar_lea.vmem [#allocation2], %s5320
          %5322 = dma.done %s5318, 2048
        $region44: #{tpu_custom_call.1} parent=39 // pred_fallthru
          _
      $region40: #{tpu_custom_call.1} parent=5 // pred_fallthru
        _
    $region6: #{tpu_custom_call.1} parent=1 // loop_footer
      %s16 = sadd.s32 1, %s12
    $region7: #{tpu_custom_call.1} parent=1 // loop_footer_branch
      %11 = sbr.rel target = $region3
    $region8: #{tpu_custom_call.1} parent=1 // loop_exit
      _
    %5323 = vsyncpa [#allocation3], 1
    %s5324 = scalar_lea.sflag [#allocation3], 1
    %5325 = vsyncpa %s5324, 1

</llo_original>
